<compile_context>
chip_gen: v7x
topology: tpu7x:2x2x1
jax: 0.10.0
libtpu: 0.0.40
codegen_flags: <defaults>
</compile_context>

<pallas_src>
import functools

import jax
import jax.numpy as jnp
from jax import lax
from jax.experimental import pallas as pl
from jax.experimental.pallas import tpu as pltpu

LANE = 128


def _round_up(x, m):
    return (x + m - 1) // m * m


def _gcn_kernel(a_ref, x_ref, w1_ref, b1_ref, w2_ref, b2_ref, o_ref,
                s_ref, hs_ref, g_ref, gs_ref, *, tm, n_real, n_classes):
    p = pl.program_id(0)          # phase: 0 = degrees, 1 = layer 1, 2 = layer 2
    i = pl.program_id(1)          # row-tile index
    row0 = pl.multiple_of(i * tm, tm)
    rows = pl.ds(row0, tm)

    # ---- phase 0: s = rsqrt(rowsum(I + A)) for this row tile ----------------
    @pl.when(p == 0)
    def _degrees():
        deg = jnp.sum(a_ref[...].astype(jnp.float32), axis=1, keepdims=True)
        s_ref[rows, :] = lax.rsqrt(deg + 1.0)

    # ---- phase 1 (once): hs = diag(s) @ (normalize(x) @ W1 + b1) ------------
    @pl.when((p == 1) & (i == 0))
    def _layer1_dense():
        x = x_ref[...]
        f = x.shape[-1]
        mean = jnp.mean(x, axis=-1, keepdims=True)
        var = jnp.sum((x - mean) ** 2, axis=-1, keepdims=True) / (f - 1)
        xn = (x - mean) * lax.rsqrt(var)            # torch.std is unbiased (ddof=1)
        row_ids = lax.broadcasted_iota(jnp.int32, (x.shape[0], 1), 0)
        xn = jnp.where(row_ids < n_real, xn, 0.0)   # zero-padded rows would be NaN
        h = jnp.dot(xn, w1_ref[...], preferred_element_type=jnp.float32) + b1_ref[...]
        hs_ref[...] = s_ref[...] * h                # fold a_hat's column scaling into h

    # ---- phase 1: g = relu(diag(s) (I + A) hs) for this row tile ------------
    @pl.when(p == 1)
    def _layer1_prop():
        hs16 = hs_ref[...].astype(jnp.bfloat16)
        prop = jnp.dot(a_ref[...], hs16, preferred_element_type=jnp.float32)
        g = s_ref[rows, :] * (prop + hs_ref[rows, :])   # "+ hs[rows]" is the fused I
        g_ref[rows, :] = jnp.maximum(g, 0.0)
        # TODO(synk): dropout(p=0.5) is identity in eval mode; no training-mode RNG mask.

    # ---- phase 2 (once): gs = diag(s) @ (g @ W2 + b2) ------------------------
    @pl.when((p == 2) & (i == 0))
    def _layer2_dense():
        y = jnp.dot(g_ref[...], w2_ref[...], preferred_element_type=jnp.float32)
        gs_ref[...] = s_ref[...] * (y + b2_ref[...])

    # ---- phase 2: propagate + log_softmax for this row tile -----------------
    @pl.when(p == 2)
    def _layer2_prop():
        gs16 = gs_ref[...].astype(jnp.bfloat16)
        prop = jnp.dot(a_ref[...], gs16, preferred_element_type=jnp.float32)
        y = s_ref[rows, :] * (prop + gs_ref[rows, :])
        col_ids = lax.broadcasted_iota(jnp.int32, y.shape, 1)
        y = jnp.where(col_ids < n_classes, y, -jnp.inf)  # mask padded class lanes
        m = jnp.max(y, axis=-1, keepdims=True)
        z = y - m
        lse = jnp.log(jnp.sum(jnp.exp(z), axis=-1, keepdims=True))
        o_ref[...] = z - lse


def gcn_forward(A, feature, w1, b1, w2, b2, *, tile_rows=None):
    """A: [N, N] adjacency, feature: [N, F], weights stored as [in, out].
    Returns log-probs [N, C]."""
    A = jnp.asarray(A, jnp.float32)
    feature = jnp.asarray(feature, jnp.float32)
    w1 = jnp.asarray(w1, jnp.float32)
    w2 = jnp.asarray(w2, jnp.float32)
    b1 = jnp.asarray(b1, jnp.float32).reshape(1, -1)
    b2 = jnp.asarray(b2, jnp.float32).reshape(1, -1)

    N = A.shape[0]
    F = feature.shape[1]
    H = w1.shape[1]
    C = w2.shape[1]
    HP = _round_up(H, LANE)
    CP = _round_up(C, LANE)

    if tile_rows is None:
        # Big-ish tiles amortize the ~0.35us/step grid overhead; re-derive for
        # your N / chip VMEM (2 * tm * NP * 2B for the double-buffered A stream).
        tile_rows = 256 if N >= 512 else N
    tm = _round_up(tile_rows, 8)
    NP = _round_up(N, tm)
    n_tiles = NP // tm

    # Zero-pad; store A as bf16 (exact for 0/1 adjacency, review-sanctioned drift
    # otherwise) to halve the dominant HBM stream.  Hidden / class dims padded to
    # 128 lanes for MXU utilization + lane-dense output stores.
    a_p = jnp.zeros((NP, NP), jnp.float32).at[:N, :N].set(A).astype(jnp.bfloat16)
    x_p = jnp.zeros((NP, F), jnp.float32).at[:N, :].set(feature)
    w1_p = jnp.zeros((F, HP), jnp.float32).at[:, :H].set(w1)
    b1_p = jnp.zeros((1, HP), jnp.float32).at[:, :H].set(b1)
    w2_p = jnp.zeros((HP, CP), jnp.float32).at[:H, :C].set(w2)
    b2_p = jnp.zeros((1, CP), jnp.float32).at[:, :C].set(b2)

    kernel = functools.partial(_gcn_kernel, tm=tm, n_real=N, n_classes=C)

    grid_spec = pltpu.PrefetchScalarGridSpec(
        num_scalar_prefetch=0,
        grid=(3, n_tiles),                                   # (phase, row tile)
        in_specs=[
            pl.BlockSpec((tm, NP), lambda p, i: (i, 0)),     # A row tile (streamed)
            pl.BlockSpec((NP, F), lambda p, i: (0, 0)),      # feature (resident)
            pl.BlockSpec((F, HP), lambda p, i: (0, 0)),      # W1
            pl.BlockSpec((1, HP), lambda p, i: (0, 0)),      # b1
            pl.BlockSpec((HP, CP), lambda p, i: (0, 0)),     # W2
            pl.BlockSpec((1, CP), lambda p, i: (0, 0)),      # b2
        ],
        out_specs=pl.BlockSpec((tm, CP), lambda p, i: (i, 0)),
        scratch_shapes=[
            pltpu.VMEM((NP, 1), jnp.float32),    # s  = rsqrt(1 + deg)
            pltpu.VMEM((NP, HP), jnp.float32),   # hs = s * (xn @ W1 + b1)
            pltpu.VMEM((NP, HP), jnp.float32),   # g  = relu(layer-1 output)
            pltpu.VMEM((NP, CP), jnp.float32),   # gs = s * (g @ W2 + b2)
        ],
    )

    out = pl.pallas_call(
        kernel,
        out_shape=jax.ShapeDtypeStruct((NP, CP), jnp.float32),
        grid_spec=grid_spec,
        compiler_params=pltpu.CompilerParams(
            # Phases communicate through per-core VMEM scratch, so both axes
            # must stay sequential (no megacore split across the scratch).
            dimension_semantics=("arbitrary", "arbitrary"),
            vmem_limit_bytes=32 * 1024 * 1024,
        ),
    )(a_p, x_p, w1_p, b1_p, w2_p, b2_p)

    return out[:N, :C]


def init_params(key, n_input, n_output, hidden=16):
    """Xavier-uniform weights (as in the module), default nn.Linear bias init."""
    k1, k2, k3, k4 = jax.random.split(key, 4)

    def xavier(k, fan_in, fan_out):
        bound = jnp.sqrt(6.0 / (fan_in + fan_out))
        # stored as [in, out] (transpose of torch's [out, in])
        return jax.random.uniform(k, (fan_in, fan_out), jnp.float32, -bound, bound)

    def bias(k, fan_in, fan_out):
        bound = 1.0 / jnp.sqrt(fan_in)
        return jax.random.uniform(k, (1, fan_out), jnp.float32, -bound, bound)

    w1 = xavier(k1, n_input, hidden)
    b1 = bias(k2, n_input, hidden)
    w2 = xavier(k3, hidden, n_output)
    b2 = bias(k4, hidden, n_output)
    return w1, b1, w2, b2


if __name__ == "__main__":
    N, n_input, n_output = 320, 32, 8
    key = jax.random.PRNGKey(0)
    ka, kf, kp = jax.random.split(key, 3)

    # symmetric 0/1 adjacency with no self loops
    raw = jax.random.bernoulli(ka, 0.05, (N, N)).astype(jnp.float32)
    A = jnp.triu(raw, 1)
    A = A + A.T

    feature = jax.random.normal(kf, (N, n_input), jnp.float32)
    w1, b1, w2, b2 = init_params(kp, n_input, n_output)

    # tile_rows=128 exercises the multi-tile row grid + padding path (N=320 -> 384).
    out = gcn_forward(A, feature, w1, b1, w2, b2, tile_rows=128)
    out = jax.block_until_ready(out)

    assert out.shape == (N, n_output)
    assert bool(jnp.all(jnp.isfinite(out)))
    # log-probs: exp(rows) must sum to 1
    assert bool(jnp.allclose(jnp.exp(out).sum(-1), 1.0, atol=1e-3))
    print("KERNEL_OK")
</pallas_src>

<mosaic_0001>
module attributes {stable_mosaic.version = 11 : i64} {
  func.func @_gcn_kernel(%arg0: i32, %arg1: i32, %arg2: memref<128x384xbf16, #tpu.memory_space<vmem>>, %arg3: memref<384x32xf32, #tpu.memory_space<vmem>>, %arg4: memref<32x128xf32, #tpu.memory_space<vmem>>, %arg5: memref<1x128xf32, #tpu.memory_space<vmem>>, %arg6: memref<128x128xf32, #tpu.memory_space<vmem>>, %arg7: memref<1x128xf32, #tpu.memory_space<vmem>>, %arg8: memref<128x128xf32, #tpu.memory_space<vmem>>, %arg9: memref<384x1xf32, #tpu.memory_space<vmem>>, %arg10: memref<384x128xf32, #tpu.memory_space<vmem>>, %arg11: memref<384x128xf32, #tpu.memory_space<vmem>>, %arg12: memref<384x128xf32, #tpu.memory_space<vmem>>) attributes {dimension_semantics = [#tpu.dimension_semantics<arbitrary>, #tpu.dimension_semantics<arbitrary>], iteration_bounds = array<i64: 3, 3>, scalar_prefetch = 0 : i64, scratch_operands = 4 : i64, tpu.core_type = #tpu.core_type<tc>, window_params = [{transform_indices = @transform_0, window_bounds = array<i64: 128, 384>}, {pipeline_mode = #tpu.pipeline_mode<synchronous>, transform_indices = @transform_1, window_bounds = array<i64: 384, 32>}, {pipeline_mode = #tpu.pipeline_mode<synchronous>, transform_indices = @transform_2, window_bounds = array<i64: 32, 128>}, {pipeline_mode = #tpu.pipeline_mode<synchronous>, transform_indices = @transform_3, window_bounds = array<i64: 1, 128>}, {pipeline_mode = #tpu.pipeline_mode<synchronous>, transform_indices = @transform_4, window_bounds = array<i64: 128, 128>}, {pipeline_mode = #tpu.pipeline_mode<synchronous>, transform_indices = @transform_5, window_bounds = array<i64: 1, 128>}, {transform_indices = @transform_6, window_bounds = array<i64: 128, 128>}]} {
    %c128_i32 = arith.constant 128 : i32
    %0 = arith.muli %arg1, %c128_i32 : i32
    %1 = tpu.assume_multiple %0, 128 : i32
    %c0_i32 = arith.constant 0 : i32
    %2 = arith.cmpi eq, %arg0, %c0_i32 : i32
    %3 = arith.extui %2 : i1 to i32
    %c0_i32_0 = arith.constant 0 : i32
    %4 = arith.cmpi ne, %3, %c0_i32_0 : i32
    scf.if %4 {
      %c0 = arith.constant 0 : index
      %c0_9 = arith.constant 0 : index
      %21 = vector.load %arg2[%c0, %c0_9] : memref<128x384xbf16, #tpu.memory_space<vmem>>, vector<128x384xbf16>
      %22 = arith.extf %21 : vector<128x384xbf16> to vector<128x384xf32>
      %cst = arith.constant dense<0.000000e+00> : vector<128xf32>
      %23 = vector.multi_reduction <add>, %22, %cst [1] : vector<128x384xf32> to vector<128xf32>
      %24 = vector.shape_cast %23 : vector<128xf32> to vector<128x1xf32>
      %cst_10 = arith.constant 1.000000e+00 : f32
      %25 = vector.broadcast %cst_10 : f32 to vector<128x1xf32>
      %26 = arith.addf %24, %25 : vector<128x1xf32>
      %27 = math.rsqrt %26 : vector<128x1xf32>
      %28 = arith.index_cast %1 : i32 to index
      %c0_11 = arith.constant 0 : index
      %29 = vector.load %arg9[%28, %c0_11] : memref<384x1xf32, #tpu.memory_space<vmem>>, vector<128x1xf32>
      tpu.vector_store %arg9[%28, %c0_11], %27 {strides = array<i32>} : memref<384x1xf32, #tpu.memory_space<vmem>>, vector<128x1xf32>,
    } else {
    }
    %c1_i32 = arith.constant 1 : i32
    %5 = arith.cmpi eq, %arg0, %c1_i32 : i32
    %c0_i32_1 = arith.constant 0 : i32
    %6 = arith.cmpi eq, %arg1, %c0_i32_1 : i32
    %7 = arith.andi %5, %6 : i1
    %8 = arith.extui %7 : i1 to i32
    %c0_i32_2 = arith.constant 0 : i32
    %9 = arith.cmpi ne, %8, %c0_i32_2 : i32
    scf.if %9 {
      %c0 = arith.constant 0 : index
      %c0_9 = arith.constant 0 : index
      %21 = vector.load %arg3[%c0, %c0_9] : memref<384x32xf32, #tpu.memory_space<vmem>>, vector<384x32xf32>
      %cst = arith.constant dense<0.000000e+00> : vector<384xf32>
      %22 = vector.multi_reduction <add>, %21, %cst [1] : vector<384x32xf32> to vector<384xf32>
      %23 = vector.shape_cast %22 : vector<384xf32> to vector<384x1xf32>
      %cst_10 = arith.constant 3.200000e+01 : f32
      %24 = vector.broadcast %cst_10 : f32 to vector<384x1xf32>
      %25 = arith.divf %23, %24 : vector<384x1xf32>
      %26 = vector.broadcast %25 : vector<384x1xf32> to vector<384x32xf32>
      %27 = arith.subf %21, %26 : vector<384x32xf32>
      %28 = arith.mulf %27, %27 : vector<384x32xf32>
      %cst_11 = arith.constant dense<0.000000e+00> : vector<384xf32>
      %29 = vector.multi_reduction <add>, %28, %cst_11 [1] : vector<384x32xf32> to vector<384xf32>
      %30 = vector.shape_cast %29 : vector<384xf32> to vector<384x1xf32>
      %cst_12 = arith.constant 3.100000e+01 : f32
      %31 = vector.broadcast %cst_12 : f32 to vector<384x1xf32>
      %32 = arith.divf %30, %31 : vector<384x1xf32>
      %33 = vector.broadcast %25 : vector<384x1xf32> to vector<384x32xf32>
      %34 = arith.subf %21, %33 : vector<384x32xf32>
      %35 = math.rsqrt %32 : vector<384x1xf32>
      %36 = vector.broadcast %35 : vector<384x1xf32> to vector<384x32xf32>
      %37 = arith.mulf %34, %36 : vector<384x32xf32>
      %38 = tpu.iota {dimensions = array<i32: 0>} : vector<384x1xi32>
      %c320_i32 = arith.constant 320 : i32
      %39 = vector.broadcast %c320_i32 : i32 to vector<384x1xi32>
      %40 = arith.cmpi slt, %38, %39 : vector<384x1xi32>
      %cst_13 = arith.constant 0.000000e+00 : f32
      %41 = vector.shape_cast %40 : vector<384x1xi1> to vector<384x1xi1>
      %42 = vector.broadcast %41 : vector<384x1xi1> to vector<384x32xi1>
      %43 = vector.broadcast %cst_13 : f32 to vector<384x32xf32>
      %44 = arith.select %42, %37, %43 : vector<384x32xi1>, vector<384x32xf32>
      %c0_14 = arith.constant 0 : index
      %c0_15 = arith.constant 0 : index
      %45 = vector.load %arg4[%c0_14, %c0_15] : memref<32x128xf32, #tpu.memory_space<vmem>>, vector<32x128xf32>
      %cst_16 = arith.constant dense<0.000000e+00> : vector<384x128xf32>
      %46 = tpu.matmul %44, %45, %cst_16 {dimension_numbers = #tpu.dot_dimension_numbers<[1], [0], [0], [1], [0, 0, 1, 1], [], []>} : vector<384x32xf32>, vector<32x128xf32>, vector<384x128xf32> -> vector<384x128xf32>
      %c0_17 = arith.constant 0 : index
      %c0_18 = arith.constant 0 : index
      %47 = vector.load %arg5[%c0_17, %c0_18] : memref<1x128xf32, #tpu.memory_space<vmem>>, vector<1x128xf32>
      %48 = vector.broadcast %47 : vector<1x128xf32> to vector<384x128xf32>
      %49 = arith.addf %46, %48 : vector<384x128xf32>
      %c0_19 = arith.constant 0 : index
      %c0_20 = arith.constant 0 : index
      %50 = vector.load %arg9[%c0_19, %c0_20] : memref<384x1xf32, #tpu.memory_space<vmem>>, vector<384x1xf32>
      %51 = vector.broadcast %50 : vector<384x1xf32> to vector<384x128xf32>
      %52 = arith.mulf %51, %49 : vector<384x128xf32>
      %c0_21 = arith.constant 0 : index
      %c0_22 = arith.constant 0 : index
      %53 = vector.load %arg10[%c0_21, %c0_22] : memref<384x128xf32, #tpu.memory_space<vmem>>, vector<384x128xf32>
      tpu.vector_store %arg10[%c0_21, %c0_22], %52 {strides = array<i32>} : memref<384x128xf32, #tpu.memory_space<vmem>>, vector<384x128xf32>,
    } else {
    }
    %c1_i32_3 = arith.constant 1 : i32
    %10 = arith.cmpi eq, %arg0, %c1_i32_3 : i32
    %11 = arith.extui %10 : i1 to i32
    %c0_i32_4 = arith.constant 0 : i32
    %12 = arith.cmpi ne, %11, %c0_i32_4 : i32
    scf.if %12 {
      %c0 = arith.constant 0 : index
      %c0_9 = arith.constant 0 : index
      %21 = vector.load %arg10[%c0, %c0_9] : memref<384x128xf32, #tpu.memory_space<vmem>>, vector<384x128xf32>
      %22 = arith.truncf %21 : vector<384x128xf32> to vector<384x128xbf16>
      %c0_10 = arith.constant 0 : index
      %c0_11 = arith.constant 0 : index
      %23 = vector.load %arg2[%c0_10, %c0_11] : memref<128x384xbf16, #tpu.memory_space<vmem>>, vector<128x384xbf16>
      %cst = arith.constant dense<0.000000e+00> : vector<128x128xf32>
      %24 = tpu.matmul %23, %22, %cst {dimension_numbers = #tpu.dot_dimension_numbers<[1], [0], [0], [1], [0, 0, 1, 1], [], []>} : vector<128x384xbf16>, vector<384x128xbf16>, vector<128x128xf32> -> vector<128x128xf32>
      %25 = arith.index_cast %1 : i32 to index
      %c0_12 = arith.constant 0 : index
      %26 = vector.load %arg9[%25, %c0_12] : memref<384x1xf32, #tpu.memory_space<vmem>>, vector<128x1xf32>
      %27 = arith.index_cast %1 : i32 to index
      %c0_13 = arith.constant 0 : index
      %28 = vector.load %arg10[%27, %c0_13] : memref<384x128xf32, #tpu.memory_space<vmem>>, vector<128x128xf32>
      %29 = arith.addf %24, %28 : vector<128x128xf32>
      %30 = vector.broadcast %26 : vector<128x1xf32> to vector<128x128xf32>
      %31 = arith.mulf %30, %29 : vector<128x128xf32>
      %cst_14 = arith.constant 0.000000e+00 : f32
      %32 = vector.broadcast %cst_14 : f32 to vector<128x128xf32>
      %33 = arith.maximumf %31, %32 : vector<128x128xf32>
      %34 = arith.index_cast %1 : i32 to index
      %c0_15 = arith.constant 0 : index
      %35 = vector.load %arg11[%34, %c0_15] : memref<384x128xf32, #tpu.memory_space<vmem>>, vector<128x128xf32>
      tpu.vector_store %arg11[%34, %c0_15], %33 {strides = array<i32>} : memref<384x128xf32, #tpu.memory_space<vmem>>, vector<128x128xf32>,
    } else {
    }
    %c2_i32 = arith.constant 2 : i32
    %13 = arith.cmpi eq, %arg0, %c2_i32 : i32
    %c0_i32_5 = arith.constant 0 : i32
    %14 = arith.cmpi eq, %arg1, %c0_i32_5 : i32
    %15 = arith.andi %13, %14 : i1
    %16 = arith.extui %15 : i1 to i32
    %c0_i32_6 = arith.constant 0 : i32
    %17 = arith.cmpi ne, %16, %c0_i32_6 : i32
    scf.if %17 {
      %c0 = arith.constant 0 : index
      %c0_9 = arith.constant 0 : index
      %21 = vector.load %arg11[%c0, %c0_9] : memref<384x128xf32, #tpu.memory_space<vmem>>, vector<384x128xf32>
      %c0_10 = arith.constant 0 : index
      %c0_11 = arith.constant 0 : index
      %22 = vector.load %arg6[%c0_10, %c0_11] : memref<128x128xf32, #tpu.memory_space<vmem>>, vector<128x128xf32>
      %cst = arith.constant dense<0.000000e+00> : vector<384x128xf32>
      %23 = tpu.matmul %21, %22, %cst {dimension_numbers = #tpu.dot_dimension_numbers<[1], [0], [0], [1], [0, 0, 1, 1], [], []>} : vector<384x128xf32>, vector<128x128xf32>, vector<384x128xf32> -> vector<384x128xf32>
      %c0_12 = arith.constant 0 : index
      %c0_13 = arith.constant 0 : index
      %24 = vector.load %arg9[%c0_12, %c0_13] : memref<384x1xf32, #tpu.memory_space<vmem>>, vector<384x1xf32>
      %c0_14 = arith.constant 0 : index
      %c0_15 = arith.constant 0 : index
      %25 = vector.load %arg7[%c0_14, %c0_15] : memref<1x128xf32, #tpu.memory_space<vmem>>, vector<1x128xf32>
      %26 = vector.broadcast %25 : vector<1x128xf32> to vector<384x128xf32>
      %27 = arith.addf %23, %26 : vector<384x128xf32>
      %28 = vector.broadcast %24 : vector<384x1xf32> to vector<384x128xf32>
      %29 = arith.mulf %28, %27 : vector<384x128xf32>
      %c0_16 = arith.constant 0 : index
      %c0_17 = arith.constant 0 : index
      %30 = vector.load %arg12[%c0_16, %c0_17] : memref<384x128xf32, #tpu.memory_space<vmem>>, vector<384x128xf32>
      tpu.vector_store %arg12[%c0_16, %c0_17], %29 {strides = array<i32>} : memref<384x128xf32, #tpu.memory_space<vmem>>, vector<384x128xf32>,
    } else {
    }
    %c2_i32_7 = arith.constant 2 : i32
    %18 = arith.cmpi eq, %arg0, %c2_i32_7 : i32
    %19 = arith.extui %18 : i1 to i32
    %c0_i32_8 = arith.constant 0 : i32
    %20 = arith.cmpi ne, %19, %c0_i32_8 : i32
    scf.if %20 {
      %c0 = arith.constant 0 : index
      %c0_9 = arith.constant 0 : index
      %21 = vector.load %arg12[%c0, %c0_9] : memref<384x128xf32, #tpu.memory_space<vmem>>, vector<384x128xf32>
      %22 = arith.truncf %21 : vector<384x128xf32> to vector<384x128xbf16>
      %c0_10 = arith.constant 0 : index
      %c0_11 = arith.constant 0 : index
      %23 = vector.load %arg2[%c0_10, %c0_11] : memref<128x384xbf16, #tpu.memory_space<vmem>>, vector<128x384xbf16>
      %cst = arith.constant dense<0.000000e+00> : vector<128x128xf32>
      %24 = tpu.matmul %23, %22, %cst {dimension_numbers = #tpu.dot_dimension_numbers<[1], [0], [0], [1], [0, 0, 1, 1], [], []>} : vector<128x384xbf16>, vector<384x128xbf16>, vector<128x128xf32> -> vector<128x128xf32>
      %25 = arith.index_cast %1 : i32 to index
      %c0_12 = arith.constant 0 : index
      %26 = vector.load %arg9[%25, %c0_12] : memref<384x1xf32, #tpu.memory_space<vmem>>, vector<128x1xf32>
      %27 = arith.index_cast %1 : i32 to index
      %c0_13 = arith.constant 0 : index
      %28 = vector.load %arg12[%27, %c0_13] : memref<384x128xf32, #tpu.memory_space<vmem>>, vector<128x128xf32>
      %29 = arith.addf %24, %28 : vector<128x128xf32>
      %30 = vector.broadcast %26 : vector<128x1xf32> to vector<128x128xf32>
      %31 = arith.mulf %30, %29 : vector<128x128xf32>
      %32 = tpu.iota {dimensions = array<i32: 1>} : vector<128x128xi32>
      %c8_i32 = arith.constant 8 : i32
      %33 = vector.broadcast %c8_i32 : i32 to vector<128x128xi32>
      %34 = arith.cmpi slt, %32, %33 : vector<128x128xi32>
      %cst_14 = arith.constant 0xFF800000 : f32
      %35 = vector.broadcast %cst_14 : f32 to vector<128x128xf32>
      %36 = arith.select %34, %31, %35 : vector<128x128xi1>, vector<128x128xf32>
      %cst_15 = arith.constant dense<0xFF800000> : vector<128xf32>
      %37 = vector.multi_reduction <maximumf>, %36, %cst_15 [1] : vector<128x128xf32> to vector<128xf32>
      %38 = vector.shape_cast %37 : vector<128xf32> to vector<128x1xf32>
      %39 = vector.broadcast %38 : vector<128x1xf32> to vector<128x128xf32>
      %40 = arith.subf %36, %39 : vector<128x128xf32>
      %41 = math.exp %40 : vector<128x128xf32>
      %cst_16 = arith.constant dense<0.000000e+00> : vector<128xf32>
      %42 = vector.multi_reduction <add>, %41, %cst_16 [1] : vector<128x128xf32> to vector<128xf32>
      %43 = vector.shape_cast %42 : vector<128xf32> to vector<128x1xf32>
      %44 = math.log %43 : vector<128x1xf32>
      %45 = vector.broadcast %44 : vector<128x1xf32> to vector<128x128xf32>
      %46 = arith.subf %40, %45 : vector<128x128xf32>
      %c0_17 = arith.constant 0 : index
      %c0_18 = arith.constant 0 : index
      %47 = vector.load %arg8[%c0_17, %c0_18] : memref<128x128xf32, #tpu.memory_space<vmem>>, vector<128x128xf32>
      tpu.vector_store %arg8[%c0_17, %c0_18], %46 {strides = array<i32>} : memref<128x128xf32, #tpu.memory_space<vmem>>, vector<128x128xf32>,
    } else {
    }
    return
  }
  func.func @transform_0(%arg0: i32, %arg1: i32) -> (i32, i32) {
    %c0_i32 = arith.constant 0 : i32
    %c0_i32_0 = arith.constant 0 : i32
    return %arg1, %c0_i32 : i32, i32
  }
  func.func @transform_1(%arg0: i32, %arg1: i32) -> (i32, i32) {
    %c0_i32 = arith.constant 0 : i32
    %c0_i32_0 = arith.constant 0 : i32
    %c0_i32_1 = arith.constant 0 : i32
    return %c0_i32, %c0_i32_0 : i32, i32
  }
  func.func @transform_2(%arg0: i32, %arg1: i32) -> (i32, i32) {
    %c0_i32 = arith.constant 0 : i32
    %c0_i32_0 = arith.constant 0 : i32
    %c0_i32_1 = arith.constant 0 : i32
    return %c0_i32, %c0_i32_0 : i32, i32
  }
  func.func @transform_3(%arg0: i32, %arg1: i32) -> (i32, i32) {
    %c0_i32 = arith.constant 0 : i32
    %c0_i32_0 = arith.constant 0 : i32
    %c0_i32_1 = arith.constant 0 : i32
    return %c0_i32, %c0_i32_0 : i32, i32
  }
  func.func @transform_4(%arg0: i32, %arg1: i32) -> (i32, i32) {
    %c0_i32 = arith.constant 0 : i32
    %c0_i32_0 = arith.constant 0 : i32
    %c0_i32_1 = arith.constant 0 : i32
    return %c0_i32, %c0_i32_0 : i32, i32
  }
  func.func @transform_5(%arg0: i32, %arg1: i32) -> (i32, i32) {
    %c0_i32 = arith.constant 0 : i32
    %c0_i32_0 = arith.constant 0 : i32
    %c0_i32_1 = arith.constant 0 : i32
    return %c0_i32, %c0_i32_0 : i32, i32
  }
  func.func @transform_6(%arg0: i32, %arg1: i32) -> (i32, i32) {
    %c0_i32 = arith.constant 0 : i32
    %c0_i32_0 = arith.constant 0 : i32
    return %arg1, %c0_i32 : i32, i32
  }
}

</mosaic_0001>

<llo_original>
// kernel: tpu_custom_call.1
$region0: #{tpu_custom_call.1}
  #allocation0 [shape = 'u32[]', space=smem, size = 0x4, offset = 0x4, fixed_abs, tag = 'smem constant byte address 0x4 - core index']
  #allocation1 [shape = 'u32[144,128]{1,0:T(1,128)}', space=vmem, size = 0x12000, scoped, tag = 'internal scratch']
  #allocation2 [shape = 'f32[384,1]{1,0:T(8,128)}', space=vmem, size = 0x30000, scoped, tag = 'scratch operand']
  #allocation3 [shape = 'f32[384,128]{1,0:T(8,128)}', space=vmem, size = 0x30000, scoped, tag = 'scratch operand']
  #allocation4 [shape = 'f32[384,128]{1,0:T(8,128)}', space=vmem, size = 0x30000, scoped, tag = 'scratch operand']
  #allocation5 [shape = 'f32[384,128]{1,0:T(8,128)}', space=vmem, size = 0x30000, scoped, tag = 'scratch operand']
  %s0 = inlined_call_operand.hbm [shape: bf16[384,384], index: 0, kind: input, shape index: {}]
  %s1 = inlined_call_operand.vmem [shape: f32[384,32], index: 1, kind: input, shape index: {}]
  %s2 = inlined_call_operand.vmem [shape: f32[32,128], index: 2, kind: input, shape index: {}]
  %s3 = inlined_call_operand.vmem [shape: f32[1,128], index: 3, kind: input, shape index: {}]
  %s4 = inlined_call_operand.vmem [shape: f32[128,128], index: 4, kind: input, shape index: {}]
  %s5 = inlined_call_operand.vmem [shape: f32[1,128], index: 5, kind: input, shape index: {}]
  %s6 = inlined_call_operand.hbm [shape: f32[384,128], index: 6, kind: output, shape index: {}]
  %s7 = sld [smem:[#allocation0]]
  $region81: #{tpu_custom_call.1} parent=0
    _
  %s9 = ssub.s32 1, %s7
  %s10 = scalar_select 0, %s9, %s7
  $region1: #{tpu_custom_call.1} parent=0
    #allocation6 [shape = 'u8[196608]{0}', space=vmem, size = 0x30000, scoped, tag = 'input window, operand 0']
    #allocation7 [shape = 's32[2]{0}', space=sflag, size = 0x8, scoped, tag = 'scoped memory for tpu_custom_call.1']
    #allocation8 [shape = 's32[2]{0}', space=sflag, size = 0x8, scoped, tag = 'scoped memory for tpu_custom_call.1']
    #allocation9 [shape = 'u8[131072]{0}', space=vmem, size = 0x20000, scoped, tag = 'output window, operand 0']
    %11 = vsyncpa [#allocation7], 0
    %s12 = scalar_lea.sflag [#allocation7], 1
    %13 = vsyncpa %s12, 0
    %14 = vsyncpa [#allocation8], 0
    %s15 = scalar_lea.sflag [#allocation8], 1
    %16 = vsyncpa %s15, 0
    loop: start=0, step=1, limit=11
    $region2: #{tpu_custom_call.1} parent=1 // loop_pre_header
      _
    $region3: #{tpu_custom_call.1} parent=1 // loop_header
      %s18 = sphi 0, %s22
      %p19 = scmp.ge.s32.totalorder %s18, 11
      %s25 = sphi 0, %s37
      %s26 = sphi 0, %s33
      %s27 = sphi 0, %s25
      %s28 = sphi 0, %s26
      %s29 = sphi 0, %s27
      %s30 = sphi 0, %s28
      %s40 = sphi 0, %s42
      %s43 = sphi 0, %s40
      %s44 = sphi 0, %s43
      %s60 = sphi 0, %s44
      %s64 = sphi 0, %s64
      %s66 = sphi 0, %s64
      %s67 = sphi 0, %s66
      %s81 = sphi 0, %s67
      %s85 = sphi 0, %s85
      %s87 = sphi 0, %s85
      %s88 = sphi 0, %s87
      %s102 = sphi 0, %s88
      %s106 = sphi 0, %s106
      %s108 = sphi 0, %s106
      %s109 = sphi 0, %s108
      %s123 = sphi 0, %s109
      %s127 = sphi 0, %s127
      %s129 = sphi 0, %s127
      %s130 = sphi 0, %s129
      %s144 = sphi 0, %s130
      %s148 = sphi 0, %s148
      %s150 = sphi 0, %s148
      %s151 = sphi 0, %s150
      %s165 = sphi 0, %s151
      %s171 = sphi 0, %s173
      %s174 = sphi 0, %s171
      %s175 = sphi 0, %s174
      %s191 = sphi 0, %s175
    $region4: #{tpu_custom_call.1} parent=1 // loop_header_branch
      %21 = sbr.rel (%p19) target = $region8
    $region5: #{tpu_custom_call.1} parent=1 // loop_body
      %s23 = ssub.s32 %s18, 1
      %s24 = ssub.s32 %s18, 2
      %s31 = sadd.s32 1, %s26
      %p32 = scmp.ge.s32.totalorder %s31, 3
      %s33 = scalar_select %p32, 0, %s31
      %s34 = sadd.s32 1, %s25
      %s35 = scalar_select %p32, %s34, %s25
      %p36 = scmp.ge.s32.totalorder %s35, 3
      %s37 = scalar_select %p36, 0, %s35
      %s38 = ssub.s32 %s26, %s33
      %p39 = scmp.eq.s32.totalorder %s38, 0
      %s41 = sadd.s32 %s40, 1
      %s42 = scalar_select %p39, %s40, %s41
      %p45 = pneg %p39
      %p46 = scmp.eq.s32.totalorder %s18, 8
      %p47 = por %p45, %p46
      %p48 = scmp.ne.s32.totalorder %s40, %s43
      %p49 = scmp.eq.s32.totalorder %s18, 0
      %p50 = por %p48, %p49
      %p51 = scmp.ne.s32.totalorder %s40, %s43
      %p52 = scmp.eq.s32.totalorder %s23, 8
      %p53 = por %p51, %p52
      %p54 = scmp.ne.s32.totalorder %s43, %s44
      %p55 = scmp.eq.s32.totalorder %s23, 0
      %p56 = por %p54, %p55
      %p57 = scmp.ne.s32.totalorder %s43, %s44
      %p58 = scmp.eq.s32.totalorder %s24, 8
      %p59 = por %p57, %p58
      %p61 = scmp.ne.s32.totalorder %s44, %s60
      %p62 = scmp.eq.s32.totalorder %s24, 0
      %p63 = por %p61, %p62
      %s65 = sadd.s32 %s64, 1
      %p68 = scmp.eq.s32.totalorder %s18, 8
      %p69 = scmp.ne.s32.totalorder %s64, %s66
      %p70 = scmp.eq.s32.totalorder %s18, 0
      %p71 = por %p69, %p70
      %p72 = scmp.ne.s32.totalorder %s64, %s66
      %p73 = scmp.eq.s32.totalorder %s23, 8
      %p74 = por %p72, %p73
      %p75 = scmp.ne.s32.totalorder %s66, %s67
      %p76 = scmp.eq.s32.totalorder %s23, 0
      %p77 = por %p75, %p76
      %p78 = scmp.ne.s32.totalorder %s66, %s67
      %p79 = scmp.eq.s32.totalorder %s24, 8
      %p80 = por %p78, %p79
      %p82 = scmp.ne.s32.totalorder %s67, %s81
      %p83 = scmp.eq.s32.totalorder %s24, 0
      %p84 = por %p82, %p83
      %s86 = sadd.s32 %s85, 1
      %p89 = scmp.eq.s32.totalorder %s18, 8
      %p90 = scmp.ne.s32.totalorder %s85, %s87
      %p91 = scmp.eq.s32.totalorder %s18, 0
      %p92 = por %p90, %p91
      %p93 = scmp.ne.s32.totalorder %s85, %s87
      %p94 = scmp.eq.s32.totalorder %s23, 8
      %p95 = por %p93, %p94
      %p96 = scmp.ne.s32.totalorder %s87, %s88
      %p97 = scmp.eq.s32.totalorder %s23, 0
      %p98 = por %p96, %p97
      %p99 = scmp.ne.s32.totalorder %s87, %s88
      %p100 = scmp.eq.s32.totalorder %s24, 8
      %p101 = por %p99, %p100
      %p103 = scmp.ne.s32.totalorder %s88, %s102
      %p104 = scmp.eq.s32.totalorder %s24, 0
      %p105 = por %p103, %p104
      %s107 = sadd.s32 %s106, 1
      %p110 = scmp.eq.s32.totalorder %s18, 8
      %p111 = scmp.ne.s32.totalorder %s106, %s108
      %p112 = scmp.eq.s32.totalorder %s18, 0
      %p113 = por %p111, %p112
      %p114 = scmp.ne.s32.totalorder %s106, %s108
      %p115 = scmp.eq.s32.totalorder %s23, 8
      %p116 = por %p114, %p115
      %p117 = scmp.ne.s32.totalorder %s108, %s109
      %p118 = scmp.eq.s32.totalorder %s23, 0
      %p119 = por %p117, %p118
      %p120 = scmp.ne.s32.totalorder %s108, %s109
      %p121 = scmp.eq.s32.totalorder %s24, 8
      %p122 = por %p120, %p121
      %p124 = scmp.ne.s32.totalorder %s109, %s123
      %p125 = scmp.eq.s32.totalorder %s24, 0
      %p126 = por %p124, %p125
      %s128 = sadd.s32 %s127, 1
      %p131 = scmp.eq.s32.totalorder %s18, 8
      %p132 = scmp.ne.s32.totalorder %s127, %s129
      %p133 = scmp.eq.s32.totalorder %s18, 0
      %p134 = por %p132, %p133
      %p135 = scmp.ne.s32.totalorder %s127, %s129
      %p136 = scmp.eq.s32.totalorder %s23, 8
      %p137 = por %p135, %p136
      %p138 = scmp.ne.s32.totalorder %s129, %s130
      %p139 = scmp.eq.s32.totalorder %s23, 0
      %p140 = por %p138, %p139
      %p141 = scmp.ne.s32.totalorder %s129, %s130
      %p142 = scmp.eq.s32.totalorder %s24, 8
      %p143 = por %p141, %p142
      %p145 = scmp.ne.s32.totalorder %s130, %s144
      %p146 = scmp.eq.s32.totalorder %s24, 0
      %p147 = por %p145, %p146
      %s149 = sadd.s32 %s148, 1
      %p152 = scmp.eq.s32.totalorder %s18, 8
      %p153 = scmp.ne.s32.totalorder %s148, %s150
      %p154 = scmp.eq.s32.totalorder %s18, 0
      %p155 = por %p153, %p154
      %p156 = scmp.ne.s32.totalorder %s148, %s150
      %p157 = scmp.eq.s32.totalorder %s23, 8
      %p158 = por %p156, %p157
      %p159 = scmp.ne.s32.totalorder %s150, %s151
      %p160 = scmp.eq.s32.totalorder %s23, 0
      %p161 = por %p159, %p160
      %p162 = scmp.ne.s32.totalorder %s150, %s151
      %p163 = scmp.eq.s32.totalorder %s24, 8
      %p164 = por %p162, %p163
      %p166 = scmp.ne.s32.totalorder %s151, %s165
      %p167 = scmp.eq.s32.totalorder %s24, 0
      %p168 = por %p166, %p167
      %s169 = ssub.s32 %s26, %s33
      %p170 = scmp.eq.s32.totalorder %s169, 0
      %s172 = sadd.s32 %s171, 1
      %s173 = scalar_select %p170, %s171, %s172
      %p176 = pneg %p170
      %p177 = scmp.eq.s32.totalorder %s18, 8
      %p178 = por %p176, %p177
      %p179 = scmp.ne.s32.totalorder %s171, %s174
      %p180 = scmp.eq.s32.totalorder %s18, 0
      %p181 = por %p179, %p180
      %p182 = scmp.ne.s32.totalorder %s171, %s174
      %p183 = scmp.eq.s32.totalorder %s23, 8
      %p184 = por %p182, %p183
      %p185 = scmp.ne.s32.totalorder %s174, %s175
      %p186 = scmp.eq.s32.totalorder %s23, 0
      %p187 = por %p185, %p186
      %p188 = scmp.ne.s32.totalorder %s174, %s175
      %p189 = scmp.eq.s32.totalorder %s24, 8
      %p190 = por %p188, %p189
      %p192 = scmp.ne.s32.totalorder %s175, %s191
      %p193 = scmp.eq.s32.totalorder %s24, 0
      %p194 = por %p192, %p193
      %p195 = scmp.le.s32.totalorder 1, %s18
      %p196 = scmp.lt.s32.totalorder %s18, 10
      %p197 = pnand %p195, %p196
      %p198 = pneg %p197
      // Predicated region
      $region9: #{tpu_custom_call.1} parent=5 // pred_check
        _
      $region10: #{tpu_custom_call.1} parent=5 // pred_check_branch
        %200 = sbr.rel (%p197) target = $region12
      $region11: #{tpu_custom_call.1} parent=5 // pred_region
        %s201 = ssub.s32 %s18, 1
        // Predicated region
        $region13: #{tpu_custom_call.1} parent=11 // pred_check
          %p202 = pneg %p77
        $region14: #{tpu_custom_call.1} parent=11 // pred_check_branch
          %204 = sbr.rel (%p202) target = $region16
        $region15: #{tpu_custom_call.1} parent=11 // pred_region
          _
        $region16: #{tpu_custom_call.1} parent=11 // pred_fallthru
          _
        // Predicated region
        $region17: #{tpu_custom_call.1} parent=11 // pred_check
          %p205 = pneg %p98
        $region18: #{tpu_custom_call.1} parent=11 // pred_check_branch
          %207 = sbr.rel (%p205) target = $region20
        $region19: #{tpu_custom_call.1} parent=11 // pred_region
          _
        $region20: #{tpu_custom_call.1} parent=11 // pred_fallthru
          _
        // Predicated region
        $region21: #{tpu_custom_call.1} parent=11 // pred_check
          %p208 = pneg %p119
        $region22: #{tpu_custom_call.1} parent=11 // pred_check_branch
          %210 = sbr.rel (%p208) target = $region24
        $region23: #{tpu_custom_call.1} parent=11 // pred_region
          _
        $region24: #{tpu_custom_call.1} parent=11 // pred_fallthru
          _
        // Predicated region
        $region25: #{tpu_custom_call.1} parent=11 // pred_check
          %p211 = pneg %p140
        $region26: #{tpu_custom_call.1} parent=11 // pred_check_branch
          %213 = sbr.rel (%p211) target = $region28
        $region27: #{tpu_custom_call.1} parent=11 // pred_region
          _
        $region28: #{tpu_custom_call.1} parent=11 // pred_fallthru
          _
        // Predicated region
        $region29: #{tpu_custom_call.1} parent=11 // pred_check
          %p214 = pneg %p161
        $region30: #{tpu_custom_call.1} parent=11 // pred_check_branch
          %216 = sbr.rel (%p214) target = $region32
        $region31: #{tpu_custom_call.1} parent=11 // pred_region
          _
        $region32: #{tpu_custom_call.1} parent=11 // pred_fallthru
          _
      $region12: #{tpu_custom_call.1} parent=5 // pred_fallthru
        _
      %p217 = scmp.lt.s32.totalorder %s18, 9
      // Predicated region
      $region33: #{tpu_custom_call.1} parent=5 // pred_check
        %p218 = pneg %p217
      $region34: #{tpu_custom_call.1} parent=5 // pred_check_branch
        %220 = sbr.rel (%p218) target = $region36
      $region35: #{tpu_custom_call.1} parent=5 // pred_region
        // Predicated region
        $region37: #{tpu_custom_call.1} parent=35 // pred_check
          %p221 = pneg %p50
        $region38: #{tpu_custom_call.1} parent=35 // pred_check_branch
          %223 = sbr.rel (%p221) target = $region40
        $region39: #{tpu_custom_call.1} parent=35 // pred_region
          %s224 = sand.u32 %s40, 1
          %s225 = scalar_lea.sflag [#allocation7], %s224
          %s226 = sand.u32 %s40, 1
          %s227 = smul.addr %s226, 192
          %s228 = scalar_lea.vmem [#allocation6], %s227
          %s229 = smul.u32 16, %s26
          %s231 = ssub.s32 3072, 3072
          %232 = vsyncadd %s225, %s231
          %s233 = smul.addr %s229, 3
          %s234 = smul.addr %s233, 64
          %s235 = scalar_lea.hbm %s0, %s234
          %s236 = sshll.u32 %s228, 4
          %s237 = int_to_ptr.vmem [resolvable:$true] %s236
          %242 = dma.hbm_to_vmem [thread:$0]  %s235, 3072, %s237, %s225, 192, 192, 12
        $region40: #{tpu_custom_call.1} parent=35 // pred_fallthru
          _
      $region36: #{tpu_custom_call.1} parent=5 // pred_fallthru
        _
      %p243 = scmp.le.s32.totalorder 1, %s18
      %p244 = scmp.lt.s32.totalorder %s18, 10
      %p245 = pnand %p243, %p244
      %p246 = pneg %p245
      // Predicated region
      $region41: #{tpu_custom_call.1} parent=5 // pred_check
        _
      $region42: #{tpu_custom_call.1} parent=5 // pred_check_branch
        %248 = sbr.rel (%p245) target = $region44
      $region43: #{tpu_custom_call.1} parent=5 // pred_region
        %s249 = ssub.s32 %s18, 1
        %s250 = sand.u32 %s43, 1
        %s251 = scalar_lea.sflag [#allocation7], %s250
        %s252 = sand.u32 %s43, 1
        %s253 = smul.addr %s252, 192
        %s254 = scalar_lea.vmem [#allocation6], %s253
        // Predicated region
        $region45: #{tpu_custom_call.1} parent=43 // pred_check
          %p255 = pneg %p56
        $region46: #{tpu_custom_call.1} parent=43 // pred_check_branch
          %257 = sbr.rel (%p255) target = $region48
        $region47: #{tpu_custom_call.1} parent=43 // pred_region
          %258 = dma.done %s251, 3072
        $region48: #{tpu_custom_call.1} parent=43 // pred_fallthru
          _
        %s259 = sand.u32 %s43, 1
        %s260 = scalar_lea.sflag [#allocation7], %s259
        %s261 = sand.u32 %s43, 1
        %s262 = smul.addr %s261, 192
        %s263 = scalar_lea.vmem [#allocation6], %s262
        %p264 = pneg %p56
        %p265 = pneg %p53
        %p266 = pneg %p77
        %p267 = pneg %p74
        %p268 = pneg %p98
        %p269 = pneg %p95
        %p270 = pneg %p119
        %p271 = pneg %p116
        %p272 = pneg %p140
        %p273 = pneg %p137
        %p274 = pneg %p161
        %p275 = pneg %p158
        %p276 = pneg %p187
        %p277 = pneg %p184
        %s278 = sand.u32 %s174, 1
        %s279 = scalar_lea.sflag [#allocation8], %s278
        %s280 = sand.u32 %s174, 1
        %s281 = smul.addr %s280, 128
        %s282 = scalar_lea.vmem [#allocation9], %s281
        %s283 = smul.u32 16, %s28
        %s284 = smul.u32 16, %s28
        %s286 = smul.u32 %s28, 128
        %p287 = scmp.eq.s32.totalorder %s27, 0
        // Predicated region
        $region49: #{tpu_custom_call.1} parent=43 // pred_check
          %p288 = pneg %p287
        $region50: #{tpu_custom_call.1} parent=43 // pred_check_branch
          %290 = sbr.rel (%p288) target = $region52
        $region51: #{tpu_custom_call.1} parent=43 // pred_region
          %v291 = vld [vmem:[%s254] sm:$0xff]
          %v292 = vld [vmem:[%s254 + $0x8] sm:$0xf]
          %v293 = vld [vmem:[%s254 + $0xc] sm:$0xff]
          %v294 = vld [vmem:[%s254 + $0x14] sm:$0xf]
          %v295 = vld [vmem:[%s254 + $0x18] sm:$0xff]
          %v296 = vld [vmem:[%s254 + $0x20] sm:$0xf]
          %v297 = vld [vmem:[%s254 + $0x24] sm:$0xff]
          %v298 = vld [vmem:[%s254 + $0x2c] sm:$0xf]
          %v299 = vld [vmem:[%s254 + $0x30] sm:$0xff]
          %v300 = vld [vmem:[%s254 + $0x38] sm:$0xf]
          %v301 = vld [vmem:[%s254 + $0x3c] sm:$0xff]
          %v302 = vld [vmem:[%s254 + $0x44] sm:$0xf]
          %v303 = vld [vmem:[%s254 + $0x48] sm:$0xff]
          %v304 = vld [vmem:[%s254 + $0x50] sm:$0xf]
          %v305 = vld [vmem:[%s254 + $0x54] sm:$0xff]
          %v306 = vld [vmem:[%s254 + $0x5c] sm:$0xf]
          %v307 = vld [vmem:[%s254 + $0x60] sm:$0xff]
          %v308 = vld [vmem:[%s254 + $0x68] sm:$0xf]
          %v309 = vld [vmem:[%s254 + $0x6c] sm:$0xff]
          %v310 = vld [vmem:[%s254 + $0x74] sm:$0xf]
          %v311 = vld [vmem:[%s254 + $0x78] sm:$0xff]
          %v312 = vld [vmem:[%s254 + $0x80] sm:$0xf]
          %v313 = vld [vmem:[%s254 + $0x84] sm:$0xff]
          %v314 = vld [vmem:[%s254 + $0x8c] sm:$0xf]
          %v315 = vld [vmem:[%s254 + $0x90] sm:$0xff]
          %v316 = vld [vmem:[%s254 + $0x98] sm:$0xf]
          %v317 = vld [vmem:[%s254 + $0x9c] sm:$0xff]
          %v318 = vld [vmem:[%s254 + $0xa4] sm:$0xf]
          %v319 = vld [vmem:[%s254 + $0xa8] sm:$0xff]
          %v320 = vld [vmem:[%s254 + $0xb0] sm:$0xf]
          %v321 = vld [vmem:[%s254 + $0xb4] sm:$0xff]
          %v322 = vld [vmem:[%s254 + $0xbc] sm:$0xf]
          %v323 = vunpack.c.l.bf16 %v291
          %v324 = vunpack.c.h.bf16 %v291
          %v325 = vunpack.c.l.bf16 %v292
          %v326 = vunpack.c.l.bf16 %v293
          %v327 = vunpack.c.h.bf16 %v293
          %v328 = vunpack.c.l.bf16 %v294
          %v329 = vunpack.c.l.bf16 %v295
          %v330 = vunpack.c.h.bf16 %v295
          %v331 = vunpack.c.l.bf16 %v296
          %v332 = vunpack.c.l.bf16 %v297
          %v333 = vunpack.c.h.bf16 %v297
          %v334 = vunpack.c.l.bf16 %v298
          %v335 = vunpack.c.l.bf16 %v299
          %v336 = vunpack.c.h.bf16 %v299
          %v337 = vunpack.c.l.bf16 %v300
          %v338 = vunpack.c.l.bf16 %v301
          %v339 = vunpack.c.h.bf16 %v301
          %v340 = vunpack.c.l.bf16 %v302
          %v341 = vunpack.c.l.bf16 %v303
          %v342 = vunpack.c.h.bf16 %v303
          %v343 = vunpack.c.l.bf16 %v304
          %v344 = vunpack.c.l.bf16 %v305
          %v345 = vunpack.c.h.bf16 %v305
          %v346 = vunpack.c.l.bf16 %v306
          %v347 = vunpack.c.l.bf16 %v307
          %v348 = vunpack.c.h.bf16 %v307
          %v349 = vunpack.c.l.bf16 %v308
          %v350 = vunpack.c.l.bf16 %v309
          %v351 = vunpack.c.h.bf16 %v309
          %v352 = vunpack.c.l.bf16 %v310
          %v353 = vunpack.c.l.bf16 %v311
          %v354 = vunpack.c.h.bf16 %v311
          %v355 = vunpack.c.l.bf16 %v312
          %v356 = vunpack.c.l.bf16 %v313
          %v357 = vunpack.c.h.bf16 %v313
          %v358 = vunpack.c.l.bf16 %v314
          %v359 = vunpack.c.l.bf16 %v315
          %v360 = vunpack.c.h.bf16 %v315
          %v361 = vunpack.c.l.bf16 %v316
          %v362 = vunpack.c.l.bf16 %v317
          %v363 = vunpack.c.h.bf16 %v317
          %v364 = vunpack.c.l.bf16 %v318
          %v365 = vunpack.c.l.bf16 %v319
          %v366 = vunpack.c.h.bf16 %v319
          %v367 = vunpack.c.l.bf16 %v320
          %v368 = vunpack.c.l.bf16 %v321
          %v369 = vunpack.c.h.bf16 %v321
          %v370 = vunpack.c.l.bf16 %v322
          %v371 = vadd.f32 %v323, %v324
          %v372 = vadd.f32 %v371, %v325
          %373 = vadd.xlane.f32.xlu0 %v372
          %v374 = vpop.xlane.xlu0 %373
          %v375 = vadd.f32 %v326, %v327
          %v376 = vadd.f32 %v375, %v328
          %377 = vadd.xlane.f32.xlu0 %v376
          %v378 = vpop.xlane.xlu0 %377
          %v379 = vadd.f32 %v329, %v330
          %v380 = vadd.f32 %v379, %v331
          %381 = vadd.xlane.f32.xlu0 %v380
          %v382 = vpop.xlane.xlu0 %381
          %v383 = vadd.f32 %v332, %v333
          %v384 = vadd.f32 %v383, %v334
          %385 = vadd.xlane.f32.xlu0 %v384
          %v386 = vpop.xlane.xlu0 %385
          %v387 = vadd.f32 %v335, %v336
          %v388 = vadd.f32 %v387, %v337
          %389 = vadd.xlane.f32.xlu0 %v388
          %v390 = vpop.xlane.xlu0 %389
          %v391 = vadd.f32 %v338, %v339
          %v392 = vadd.f32 %v391, %v340
          %393 = vadd.xlane.f32.xlu0 %v392
          %v394 = vpop.xlane.xlu0 %393
          %v395 = vadd.f32 %v341, %v342
          %v396 = vadd.f32 %v395, %v343
          %397 = vadd.xlane.f32.xlu0 %v396
          %v398 = vpop.xlane.xlu0 %397
          %v399 = vadd.f32 %v344, %v345
          %v400 = vadd.f32 %v399, %v346
          %401 = vadd.xlane.f32.xlu0 %v400
          %v402 = vpop.xlane.xlu0 %401
          %v403 = vadd.f32 %v347, %v348
          %v404 = vadd.f32 %v403, %v349
          %405 = vadd.xlane.f32.xlu0 %v404
          %v406 = vpop.xlane.xlu0 %405
          %v407 = vadd.f32 %v350, %v351
          %v408 = vadd.f32 %v407, %v352
          %409 = vadd.xlane.f32.xlu0 %v408
          %v410 = vpop.xlane.xlu0 %409
          %v411 = vadd.f32 %v353, %v354
          %v412 = vadd.f32 %v411, %v355
          %413 = vadd.xlane.f32.xlu0 %v412
          %v414 = vpop.xlane.xlu0 %413
          %v415 = vadd.f32 %v356, %v357
          %v416 = vadd.f32 %v415, %v358
          %417 = vadd.xlane.f32.xlu0 %v416
          %v418 = vpop.xlane.xlu0 %417
          %v419 = vadd.f32 %v359, %v360
          %v420 = vadd.f32 %v419, %v361
          %421 = vadd.xlane.f32.xlu0 %v420
          %v422 = vpop.xlane.xlu0 %421
          %v423 = vadd.f32 %v362, %v363
          %v424 = vadd.f32 %v423, %v364
          %425 = vadd.xlane.f32.xlu0 %v424
          %v426 = vpop.xlane.xlu0 %425
          %v427 = vadd.f32 %v365, %v366
          %v428 = vadd.f32 %v427, %v367
          %429 = vadd.xlane.f32.xlu0 %v428
          %v430 = vpop.xlane.xlu0 %429
          %v431 = vadd.f32 %v368, %v369
          %v432 = vadd.f32 %v431, %v370
          %433 = vadd.xlane.f32.xlu0 %v432
          %v434 = vpop.xlane.xlu0 %433
          %v435 = vadd.f32 %v374, 1.0
          %v436 = vadd.f32 %v378, 1.0
          %v437 = vadd.f32 %v382, 1.0
          %v438 = vadd.f32 %v386, 1.0
          %v439 = vadd.f32 %v390, 1.0
          %v440 = vadd.f32 %v394, 1.0
          %v441 = vadd.f32 %v398, 1.0
          %v442 = vadd.f32 %v402, 1.0
          %v443 = vadd.f32 %v406, 1.0
          %v444 = vadd.f32 %v410, 1.0
          %v445 = vadd.f32 %v414, 1.0
          %v446 = vadd.f32 %v418, 1.0
          %v447 = vadd.f32 %v422, 1.0
          %v448 = vadd.f32 %v426, 1.0
          %v449 = vadd.f32 %v430, 1.0
          %v450 = vadd.f32 %v434, 1.0
          %v451 = vrsqrt.pop %v435
          %v452 = vrsqrt.pop %v436
          %v453 = vrsqrt.pop %v437
          %v454 = vrsqrt.pop %v438
          %v455 = vrsqrt.pop %v439
          %v456 = vrsqrt.pop %v440
          %v457 = vrsqrt.pop %v441
          %v458 = vrsqrt.pop %v442
          %v459 = vrsqrt.pop %v443
          %v460 = vrsqrt.pop %v444
          %v461 = vrsqrt.pop %v445
          %v462 = vrsqrt.pop %v446
          %v463 = vrsqrt.pop %v447
          %v464 = vrsqrt.pop %v448
          %v465 = vrsqrt.pop %v449
          %v466 = vrsqrt.pop %v450
          %s467 = scalar_lea.vmem [#allocation2], %s286
          %vm468 = vcmask 7168
          %469 = vst.msk [vmem:[%s467] sm:$0xff] %vm468, %v451
          %470 = vst.msk [vmem:[%s467 + $0x8] sm:$0xff] %vm468, %v452
          %471 = vst.msk [vmem:[%s467 + $0x10] sm:$0xff] %vm468, %v453
          %472 = vst.msk [vmem:[%s467 + $0x18] sm:$0xff] %vm468, %v454
          %473 = vst.msk [vmem:[%s467 + $0x20] sm:$0xff] %vm468, %v455
          %474 = vst.msk [vmem:[%s467 + $0x28] sm:$0xff] %vm468, %v456
          %475 = vst.msk [vmem:[%s467 + $0x30] sm:$0xff] %vm468, %v457
          %476 = vst.msk [vmem:[%s467 + $0x38] sm:$0xff] %vm468, %v458
          %477 = vst.msk [vmem:[%s467 + $0x40] sm:$0xff] %vm468, %v459
          %478 = vst.msk [vmem:[%s467 + $0x48] sm:$0xff] %vm468, %v460
          %479 = vst.msk [vmem:[%s467 + $0x50] sm:$0xff] %vm468, %v461
          %480 = vst.msk [vmem:[%s467 + $0x58] sm:$0xff] %vm468, %v462
          %481 = vst.msk [vmem:[%s467 + $0x60] sm:$0xff] %vm468, %v463
          %482 = vst.msk [vmem:[%s467 + $0x68] sm:$0xff] %vm468, %v464
          %483 = vst.msk [vmem:[%s467 + $0x70] sm:$0xff] %vm468, %v465
          %484 = vst.msk [vmem:[%s467 + $0x78] sm:$0xff] %vm468, %v466
        $region52: #{tpu_custom_call.1} parent=43 // pred_fallthru
          _
        %p485 = scmp.eq.s32.totalorder %s27, 1
        %p486 = scmp.eq.s32.totalorder %s28, 0
        %p487 = pnand %p485, %p486
        %p488 = pneg %p487
        // Predicated region
        $region53: #{tpu_custom_call.1} parent=43 // pred_check
          _
        $region54: #{tpu_custom_call.1} parent=43 // pred_check_branch
          %490 = sbr.rel (%p487) target = $region56
        $region55: #{tpu_custom_call.1} parent=43 // pred_region
          %v491 = vld [vmem:[%s1] sm:$0xff]
          %v492 = vld [vmem:[%s1 + $0x8] sm:$0xff]
          %v493 = vld [vmem:[%s1 + $0x10] sm:$0xff]
          %v494 = vld [vmem:[%s1 + $0x18] sm:$0xff]
          %v495 = vld [vmem:[%s1 + $0x20] sm:$0xff]
          %v496 = vld [vmem:[%s1 + $0x28] sm:$0xff]
          %v497 = vld [vmem:[%s1 + $0x30] sm:$0xff]
          %v498 = vld [vmem:[%s1 + $0x38] sm:$0xff]
          %v499 = vld [vmem:[%s1 + $0x40] sm:$0xff]
          %v500 = vld [vmem:[%s1 + $0x48] sm:$0xff]
          %v501 = vld [vmem:[%s1 + $0x50] sm:$0xff]
          %v502 = vld [vmem:[%s1 + $0x58] sm:$0xff]
          %v503 = vld [vmem:[%s1 + $0x60] sm:$0xff]
          %v504 = vld [vmem:[%s1 + $0x68] sm:$0xff]
          %v505 = vld [vmem:[%s1 + $0x70] sm:$0xff]
          %v506 = vld [vmem:[%s1 + $0x78] sm:$0xff]
          %v507 = vld [vmem:[%s1 + $0x80] sm:$0xff]
          %v508 = vld [vmem:[%s1 + $0x88] sm:$0xff]
          %v509 = vld [vmem:[%s1 + $0x90] sm:$0xff]
          %v510 = vld [vmem:[%s1 + $0x98] sm:$0xff]
          %v511 = vld [vmem:[%s1 + $0xa0] sm:$0xff]
          %v512 = vld [vmem:[%s1 + $0xa8] sm:$0xff]
          %v513 = vld [vmem:[%s1 + $0xb0] sm:$0xff]
          %v514 = vld [vmem:[%s1 + $0xb8] sm:$0xff]
          %v515 = vld [vmem:[%s1 + $0xc0] sm:$0xff]
          %v516 = vld [vmem:[%s1 + $0xc8] sm:$0xff]
          %v517 = vld [vmem:[%s1 + $0xd0] sm:$0xff]
          %v518 = vld [vmem:[%s1 + $0xd8] sm:$0xff]
          %v519 = vld [vmem:[%s1 + $0xe0] sm:$0xff]
          %v520 = vld [vmem:[%s1 + $0xe8] sm:$0xff]
          %v521 = vld [vmem:[%s1 + $0xf0] sm:$0xff]
          %v522 = vld [vmem:[%s1 + $0xf8] sm:$0xff]
          %v523 = vld [vmem:[%s1 + $0x100] sm:$0xff]
          %v524 = vld [vmem:[%s1 + $0x108] sm:$0xff]
          %v525 = vld [vmem:[%s1 + $0x110] sm:$0xff]
          %v526 = vld [vmem:[%s1 + $0x118] sm:$0xff]
          %v527 = vld [vmem:[%s1 + $0x120] sm:$0xff]
          %v528 = vld [vmem:[%s1 + $0x128] sm:$0xff]
          %v529 = vld [vmem:[%s1 + $0x130] sm:$0xff]
          %v530 = vld [vmem:[%s1 + $0x138] sm:$0xff]
          %v531 = vld [vmem:[%s1 + $0x140] sm:$0xff]
          %v532 = vld [vmem:[%s1 + $0x148] sm:$0xff]
          %v533 = vld [vmem:[%s1 + $0x150] sm:$0xff]
          %v534 = vld [vmem:[%s1 + $0x158] sm:$0xff]
          %v535 = vld [vmem:[%s1 + $0x160] sm:$0xff]
          %v536 = vld [vmem:[%s1 + $0x168] sm:$0xff]
          %v537 = vld [vmem:[%s1 + $0x170] sm:$0xff]
          %v538 = vld [vmem:[%s1 + $0x178] sm:$0xff]
          %vm539 = vcmask 261120
          %v540 = vsel %vm539, %v491, 0.0
          %541 = vadd.xlane.f32.xlu0 %v540
          %v542 = vpop.xlane.xlu0 %541
          %v543 = vsel %vm539, %v492, 0.0
          %544 = vadd.xlane.f32.xlu0 %v543
          %v545 = vpop.xlane.xlu0 %544
          %v546 = vsel %vm539, %v493, 0.0
          %547 = vadd.xlane.f32.xlu0 %v546
          %v548 = vpop.xlane.xlu0 %547
          %v549 = vsel %vm539, %v494, 0.0
          %550 = vadd.xlane.f32.xlu0 %v549
          %v551 = vpop.xlane.xlu0 %550
          %v552 = vsel %vm539, %v495, 0.0
          %553 = vadd.xlane.f32.xlu0 %v552
          %v554 = vpop.xlane.xlu0 %553
          %v555 = vsel %vm539, %v496, 0.0
          %556 = vadd.xlane.f32.xlu0 %v555
          %v557 = vpop.xlane.xlu0 %556
          %v558 = vsel %vm539, %v497, 0.0
          %559 = vadd.xlane.f32.xlu0 %v558
          %v560 = vpop.xlane.xlu0 %559
          %v561 = vsel %vm539, %v498, 0.0
          %562 = vadd.xlane.f32.xlu0 %v561
          %v563 = vpop.xlane.xlu0 %562
          %v564 = vsel %vm539, %v499, 0.0
          %565 = vadd.xlane.f32.xlu0 %v564
          %v566 = vpop.xlane.xlu0 %565
          %v567 = vsel %vm539, %v500, 0.0
          %568 = vadd.xlane.f32.xlu0 %v567
          %v569 = vpop.xlane.xlu0 %568
          %v570 = vsel %vm539, %v501, 0.0
          %571 = vadd.xlane.f32.xlu0 %v570
          %v572 = vpop.xlane.xlu0 %571
          %v573 = vsel %vm539, %v502, 0.0
          %574 = vadd.xlane.f32.xlu0 %v573
          %v575 = vpop.xlane.xlu0 %574
          %v576 = vsel %vm539, %v503, 0.0
          %577 = vadd.xlane.f32.xlu0 %v576
          %v578 = vpop.xlane.xlu0 %577
          %v579 = vsel %vm539, %v504, 0.0
          %580 = vadd.xlane.f32.xlu0 %v579
          %v581 = vpop.xlane.xlu0 %580
          %v582 = vsel %vm539, %v505, 0.0
          %583 = vadd.xlane.f32.xlu0 %v582
          %v584 = vpop.xlane.xlu0 %583
          %v585 = vsel %vm539, %v506, 0.0
          %586 = vadd.xlane.f32.xlu0 %v585
          %v587 = vpop.xlane.xlu0 %586
          %v588 = vsel %vm539, %v507, 0.0
          %589 = vadd.xlane.f32.xlu0 %v588
          %v590 = vpop.xlane.xlu0 %589
          %v591 = vsel %vm539, %v508, 0.0
          %592 = vadd.xlane.f32.xlu0 %v591
          %v593 = vpop.xlane.xlu0 %592
          %v594 = vsel %vm539, %v509, 0.0
          %595 = vadd.xlane.f32.xlu0 %v594
          %v596 = vpop.xlane.xlu0 %595
          %v597 = vsel %vm539, %v510, 0.0
          %598 = vadd.xlane.f32.xlu0 %v597
          %v599 = vpop.xlane.xlu0 %598
          %v600 = vsel %vm539, %v511, 0.0
          %601 = vadd.xlane.f32.xlu0 %v600
          %v602 = vpop.xlane.xlu0 %601
          %v603 = vsel %vm539, %v512, 0.0
          %604 = vadd.xlane.f32.xlu0 %v603
          %v605 = vpop.xlane.xlu0 %604
          %v606 = vsel %vm539, %v513, 0.0
          %607 = vadd.xlane.f32.xlu0 %v606
          %v608 = vpop.xlane.xlu0 %607
          %v609 = vsel %vm539, %v514, 0.0
          %610 = vadd.xlane.f32.xlu0 %v609
          %v611 = vpop.xlane.xlu0 %610
          %v612 = vsel %vm539, %v515, 0.0
          %613 = vadd.xlane.f32.xlu0 %v612
          %v614 = vpop.xlane.xlu0 %613
          %v615 = vsel %vm539, %v516, 0.0
          %616 = vadd.xlane.f32.xlu0 %v615
          %v617 = vpop.xlane.xlu0 %616
          %v618 = vsel %vm539, %v517, 0.0
          %619 = vadd.xlane.f32.xlu0 %v618
          %v620 = vpop.xlane.xlu0 %619
          %v621 = vsel %vm539, %v518, 0.0
          %622 = vadd.xlane.f32.xlu0 %v621
          %v623 = vpop.xlane.xlu0 %622
          %v624 = vsel %vm539, %v519, 0.0
          %625 = vadd.xlane.f32.xlu0 %v624
          %v626 = vpop.xlane.xlu0 %625
          %v627 = vsel %vm539, %v520, 0.0
          %628 = vadd.xlane.f32.xlu0 %v627
          %v629 = vpop.xlane.xlu0 %628
          %v630 = vsel %vm539, %v521, 0.0
          %631 = vadd.xlane.f32.xlu0 %v630
          %v632 = vpop.xlane.xlu0 %631
          %v633 = vsel %vm539, %v522, 0.0
          %634 = vadd.xlane.f32.xlu0 %v633
          %v635 = vpop.xlane.xlu0 %634
          %v636 = vsel %vm539, %v523, 0.0
          %637 = vadd.xlane.f32.xlu0 %v636
          %v638 = vpop.xlane.xlu0 %637
          %v639 = vsel %vm539, %v524, 0.0
          %640 = vadd.xlane.f32.xlu0 %v639
          %v641 = vpop.xlane.xlu0 %640
          %v642 = vsel %vm539, %v525, 0.0
          %643 = vadd.xlane.f32.xlu0 %v642
          %v644 = vpop.xlane.xlu0 %643
          %v645 = vsel %vm539, %v526, 0.0
          %646 = vadd.xlane.f32.xlu0 %v645
          %v647 = vpop.xlane.xlu0 %646
          %v648 = vsel %vm539, %v527, 0.0
          %649 = vadd.xlane.f32.xlu0 %v648
          %v650 = vpop.xlane.xlu0 %649
          %v651 = vsel %vm539, %v528, 0.0
          %652 = vadd.xlane.f32.xlu0 %v651
          %v653 = vpop.xlane.xlu0 %652
          %v654 = vsel %vm539, %v529, 0.0
          %655 = vadd.xlane.f32.xlu0 %v654
          %v656 = vpop.xlane.xlu0 %655
          %v657 = vsel %vm539, %v530, 0.0
          %658 = vadd.xlane.f32.xlu0 %v657
          %v659 = vpop.xlane.xlu0 %658
          %v660 = vsel %vm539, %v531, 0.0
          %661 = vadd.xlane.f32.xlu0 %v660
          %v662 = vpop.xlane.xlu0 %661
          %v663 = vsel %vm539, %v532, 0.0
          %664 = vadd.xlane.f32.xlu0 %v663
          %v665 = vpop.xlane.xlu0 %664
          %v666 = vsel %vm539, %v533, 0.0
          %667 = vadd.xlane.f32.xlu0 %v666
          %v668 = vpop.xlane.xlu0 %667
          %v669 = vsel %vm539, %v534, 0.0
          %670 = vadd.xlane.f32.xlu0 %v669
          %v671 = vpop.xlane.xlu0 %670
          %v672 = vsel %vm539, %v535, 0.0
          %673 = vadd.xlane.f32.xlu0 %v672
          %v674 = vpop.xlane.xlu0 %673
          %v675 = vsel %vm539, %v536, 0.0
          %676 = vadd.xlane.f32.xlu0 %v675
          %v677 = vpop.xlane.xlu0 %676
          %v678 = vsel %vm539, %v537, 0.0
          %679 = vadd.xlane.f32.xlu0 %v678
          %v680 = vpop.xlane.xlu0 %679
          %v681 = vsel %vm539, %v538, 0.0
          %682 = vadd.xlane.f32.xlu0 %v681
          %v683 = vpop.xlane.xlu0 %682
          %v684 = vrcp.pop 32.0
          %v685 = vmul.f32 %v542, %v684
          %v686 = vmul.f32 %v545, %v684
          %v687 = vmul.f32 %v548, %v684
          %v688 = vmul.f32 %v551, %v684
          %v689 = vmul.f32 %v554, %v684
          %v690 = vmul.f32 %v557, %v684
          %v691 = vmul.f32 %v560, %v684
          %v692 = vmul.f32 %v563, %v684
          %v693 = vmul.f32 %v566, %v684
          %v694 = vmul.f32 %v569, %v684
          %v695 = vmul.f32 %v572, %v684
          %v696 = vmul.f32 %v575, %v684
          %v697 = vmul.f32 %v578, %v684
          %v698 = vmul.f32 %v581, %v684
          %v699 = vmul.f32 %v584, %v684
          %v700 = vmul.f32 %v587, %v684
          %v701 = vmul.f32 %v590, %v684
          %v702 = vmul.f32 %v593, %v684
          %v703 = vmul.f32 %v596, %v684
          %v704 = vmul.f32 %v599, %v684
          %v705 = vmul.f32 %v602, %v684
          %v706 = vmul.f32 %v605, %v684
          %v707 = vmul.f32 %v608, %v684
          %v708 = vmul.f32 %v611, %v684
          %v709 = vmul.f32 %v614, %v684
          %v710 = vmul.f32 %v617, %v684
          %v711 = vmul.f32 %v620, %v684
          %v712 = vmul.f32 %v623, %v684
          %v713 = vmul.f32 %v626, %v684
          %v714 = vmul.f32 %v629, %v684
          %v715 = vmul.f32 %v632, %v684
          %v716 = vmul.f32 %v635, %v684
          %v717 = vmul.f32 %v638, %v684
          %v718 = vmul.f32 %v641, %v684
          %v719 = vmul.f32 %v644, %v684
          %v720 = vmul.f32 %v647, %v684
          %v721 = vmul.f32 %v650, %v684
          %v722 = vmul.f32 %v653, %v684
          %v723 = vmul.f32 %v656, %v684
          %v724 = vmul.f32 %v659, %v684
          %v725 = vmul.f32 %v662, %v684
          %v726 = vmul.f32 %v665, %v684
          %v727 = vmul.f32 %v668, %v684
          %v728 = vmul.f32 %v671, %v684
          %v729 = vmul.f32 %v674, %v684
          %v730 = vmul.f32 %v677, %v684
          %v731 = vmul.f32 %v680, %v684
          %v732 = vmul.f32 %v683, %v684
          %v733 = vsub.f32 %v491, %v685
          %v734 = vsub.f32 %v492, %v686
          %v735 = vsub.f32 %v493, %v687
          %v736 = vsub.f32 %v494, %v688
          %v737 = vsub.f32 %v495, %v689
          %v738 = vsub.f32 %v496, %v690
          %v739 = vsub.f32 %v497, %v691
          %v740 = vsub.f32 %v498, %v692
          %v741 = vsub.f32 %v499, %v693
          %v742 = vsub.f32 %v500, %v694
          %v743 = vsub.f32 %v501, %v695
          %v744 = vsub.f32 %v502, %v696
          %v745 = vsub.f32 %v503, %v697
          %v746 = vsub.f32 %v504, %v698
          %v747 = vsub.f32 %v505, %v699
          %v748 = vsub.f32 %v506, %v700
          %v749 = vsub.f32 %v507, %v701
          %v750 = vsub.f32 %v508, %v702
          %v751 = vsub.f32 %v509, %v703
          %v752 = vsub.f32 %v510, %v704
          %v753 = vsub.f32 %v511, %v705
          %v754 = vsub.f32 %v512, %v706
          %v755 = vsub.f32 %v513, %v707
          %v756 = vsub.f32 %v514, %v708
          %v757 = vsub.f32 %v515, %v709
          %v758 = vsub.f32 %v516, %v710
          %v759 = vsub.f32 %v517, %v711
          %v760 = vsub.f32 %v518, %v712
          %v761 = vsub.f32 %v519, %v713
          %v762 = vsub.f32 %v520, %v714
          %v763 = vsub.f32 %v521, %v715
          %v764 = vsub.f32 %v522, %v716
          %v765 = vsub.f32 %v523, %v717
          %v766 = vsub.f32 %v524, %v718
          %v767 = vsub.f32 %v525, %v719
          %v768 = vsub.f32 %v526, %v720
          %v769 = vsub.f32 %v527, %v721
          %v770 = vsub.f32 %v528, %v722
          %v771 = vsub.f32 %v529, %v723
          %v772 = vsub.f32 %v530, %v724
          %v773 = vsub.f32 %v531, %v725
          %v774 = vsub.f32 %v532, %v726
          %v775 = vsub.f32 %v533, %v727
          %v776 = vsub.f32 %v534, %v728
          %v777 = vsub.f32 %v535, %v729
          %v778 = vsub.f32 %v536, %v730
          %v779 = vsub.f32 %v537, %v731
          %v780 = vsub.f32 %v538, %v732
          %v781 = vmul.f32 %v733, %v733
          %v782 = vmul.f32 %v734, %v734
          %v783 = vmul.f32 %v735, %v735
          %v784 = vmul.f32 %v736, %v736
          %v785 = vmul.f32 %v737, %v737
          %v786 = vmul.f32 %v738, %v738
          %v787 = vmul.f32 %v739, %v739
          %v788 = vmul.f32 %v740, %v740
          %v789 = vmul.f32 %v741, %v741
          %v790 = vmul.f32 %v742, %v742
          %v791 = vmul.f32 %v743, %v743
          %v792 = vmul.f32 %v744, %v744
          %v793 = vmul.f32 %v745, %v745
          %v794 = vmul.f32 %v746, %v746
          %v795 = vmul.f32 %v747, %v747
          %v796 = vmul.f32 %v748, %v748
          %v797 = vmul.f32 %v749, %v749
          %v798 = vmul.f32 %v750, %v750
          %v799 = vmul.f32 %v751, %v751
          %v800 = vmul.f32 %v752, %v752
          %v801 = vmul.f32 %v753, %v753
          %v802 = vmul.f32 %v754, %v754
          %v803 = vmul.f32 %v755, %v755
          %v804 = vmul.f32 %v756, %v756
          %v805 = vmul.f32 %v757, %v757
          %v806 = vmul.f32 %v758, %v758
          %v807 = vmul.f32 %v759, %v759
          %v808 = vmul.f32 %v760, %v760
          %v809 = vmul.f32 %v761, %v761
          %v810 = vmul.f32 %v762, %v762
          %v811 = vmul.f32 %v763, %v763
          %v812 = vmul.f32 %v764, %v764
          %v813 = vmul.f32 %v765, %v765
          %v814 = vmul.f32 %v766, %v766
          %v815 = vmul.f32 %v767, %v767
          %v816 = vmul.f32 %v768, %v768
          %v817 = vmul.f32 %v769, %v769
          %v818 = vmul.f32 %v770, %v770
          %v819 = vmul.f32 %v771, %v771
          %v820 = vmul.f32 %v772, %v772
          %v821 = vmul.f32 %v773, %v773
          %v822 = vmul.f32 %v774, %v774
          %v823 = vmul.f32 %v775, %v775
          %v824 = vmul.f32 %v776, %v776
          %v825 = vmul.f32 %v777, %v777
          %v826 = vmul.f32 %v778, %v778
          %v827 = vmul.f32 %v779, %v779
          %v828 = vmul.f32 %v780, %v780
          %v829 = vsel %vm539, %v781, 0.0
          %830 = vadd.xlane.f32.xlu0 %v829
          %v831 = vpop.xlane.xlu0 %830
          %v832 = vsel %vm539, %v782, 0.0
          %833 = vadd.xlane.f32.xlu0 %v832
          %v834 = vpop.xlane.xlu0 %833
          %v835 = vsel %vm539, %v783, 0.0
          %836 = vadd.xlane.f32.xlu0 %v835
          %v837 = vpop.xlane.xlu0 %836
          %v838 = vsel %vm539, %v784, 0.0
          %839 = vadd.xlane.f32.xlu0 %v838
          %v840 = vpop.xlane.xlu0 %839
          %v841 = vsel %vm539, %v785, 0.0
          %842 = vadd.xlane.f32.xlu0 %v841
          %v843 = vpop.xlane.xlu0 %842
          %v844 = vsel %vm539, %v786, 0.0
          %845 = vadd.xlane.f32.xlu0 %v844
          %v846 = vpop.xlane.xlu0 %845
          %v847 = vsel %vm539, %v787, 0.0
          %848 = vadd.xlane.f32.xlu0 %v847
          %v849 = vpop.xlane.xlu0 %848
          %v850 = vsel %vm539, %v788, 0.0
          %851 = vadd.xlane.f32.xlu0 %v850
          %v852 = vpop.xlane.xlu0 %851
          %v853 = vsel %vm539, %v789, 0.0
          %854 = vadd.xlane.f32.xlu0 %v853
          %v855 = vpop.xlane.xlu0 %854
          %v856 = vsel %vm539, %v790, 0.0
          %857 = vadd.xlane.f32.xlu0 %v856
          %v858 = vpop.xlane.xlu0 %857
          %v859 = vsel %vm539, %v791, 0.0
          %860 = vadd.xlane.f32.xlu0 %v859
          %v861 = vpop.xlane.xlu0 %860
          %v862 = vsel %vm539, %v792, 0.0
          %863 = vadd.xlane.f32.xlu0 %v862
          %v864 = vpop.xlane.xlu0 %863
          %v865 = vsel %vm539, %v793, 0.0
          %866 = vadd.xlane.f32.xlu0 %v865
          %v867 = vpop.xlane.xlu0 %866
          %v868 = vsel %vm539, %v794, 0.0
          %869 = vadd.xlane.f32.xlu0 %v868
          %v870 = vpop.xlane.xlu0 %869
          %v871 = vsel %vm539, %v795, 0.0
          %872 = vadd.xlane.f32.xlu0 %v871
          %v873 = vpop.xlane.xlu0 %872
          %v874 = vsel %vm539, %v796, 0.0
          %875 = vadd.xlane.f32.xlu0 %v874
          %v876 = vpop.xlane.xlu0 %875
          %v877 = vsel %vm539, %v797, 0.0
          %878 = vadd.xlane.f32.xlu0 %v877
          %v879 = vpop.xlane.xlu0 %878
          %v880 = vsel %vm539, %v798, 0.0
          %881 = vadd.xlane.f32.xlu0 %v880
          %v882 = vpop.xlane.xlu0 %881
          %v883 = vsel %vm539, %v799, 0.0
          %884 = vadd.xlane.f32.xlu0 %v883
          %v885 = vpop.xlane.xlu0 %884
          %v886 = vsel %vm539, %v800, 0.0
          %887 = vadd.xlane.f32.xlu0 %v886
          %v888 = vpop.xlane.xlu0 %887
          %v889 = vsel %vm539, %v801, 0.0
          %890 = vadd.xlane.f32.xlu0 %v889
          %v891 = vpop.xlane.xlu0 %890
          %v892 = vsel %vm539, %v802, 0.0
          %893 = vadd.xlane.f32.xlu0 %v892
          %v894 = vpop.xlane.xlu0 %893
          %v895 = vsel %vm539, %v803, 0.0
          %896 = vadd.xlane.f32.xlu0 %v895
          %v897 = vpop.xlane.xlu0 %896
          %v898 = vsel %vm539, %v804, 0.0
          %899 = vadd.xlane.f32.xlu0 %v898
          %v900 = vpop.xlane.xlu0 %899
          %v901 = vsel %vm539, %v805, 0.0
          %902 = vadd.xlane.f32.xlu0 %v901
          %v903 = vpop.xlane.xlu0 %902
          %v904 = vsel %vm539, %v806, 0.0
          %905 = vadd.xlane.f32.xlu0 %v904
          %v906 = vpop.xlane.xlu0 %905
          %v907 = vsel %vm539, %v807, 0.0
          %908 = vadd.xlane.f32.xlu0 %v907
          %v909 = vpop.xlane.xlu0 %908
          %v910 = vsel %vm539, %v808, 0.0
          %911 = vadd.xlane.f32.xlu0 %v910
          %v912 = vpop.xlane.xlu0 %911
          %v913 = vsel %vm539, %v809, 0.0
          %914 = vadd.xlane.f32.xlu0 %v913
          %v915 = vpop.xlane.xlu0 %914
          %v916 = vsel %vm539, %v810, 0.0
          %917 = vadd.xlane.f32.xlu0 %v916
          %v918 = vpop.xlane.xlu0 %917
          %v919 = vsel %vm539, %v811, 0.0
          %920 = vadd.xlane.f32.xlu0 %v919
          %v921 = vpop.xlane.xlu0 %920
          %v922 = vsel %vm539, %v812, 0.0
          %923 = vadd.xlane.f32.xlu0 %v922
          %v924 = vpop.xlane.xlu0 %923
          %v925 = vsel %vm539, %v813, 0.0
          %926 = vadd.xlane.f32.xlu0 %v925
          %v927 = vpop.xlane.xlu0 %926
          %v928 = vsel %vm539, %v814, 0.0
          %929 = vadd.xlane.f32.xlu0 %v928
          %v930 = vpop.xlane.xlu0 %929
          %v931 = vsel %vm539, %v815, 0.0
          %932 = vadd.xlane.f32.xlu0 %v931
          %v933 = vpop.xlane.xlu0 %932
          %v934 = vsel %vm539, %v816, 0.0
          %935 = vadd.xlane.f32.xlu0 %v934
          %v936 = vpop.xlane.xlu0 %935
          %v937 = vsel %vm539, %v817, 0.0
          %938 = vadd.xlane.f32.xlu0 %v937
          %v939 = vpop.xlane.xlu0 %938
          %v940 = vsel %vm539, %v818, 0.0
          %941 = vadd.xlane.f32.xlu0 %v940
          %v942 = vpop.xlane.xlu0 %941
          %v943 = vsel %vm539, %v819, 0.0
          %944 = vadd.xlane.f32.xlu0 %v943
          %v945 = vpop.xlane.xlu0 %944
          %v946 = vsel %vm539, %v820, 0.0
          %947 = vadd.xlane.f32.xlu0 %v946
          %v948 = vpop.xlane.xlu0 %947
          %v949 = vsel %vm539, %v821, 0.0
          %950 = vadd.xlane.f32.xlu0 %v949
          %v951 = vpop.xlane.xlu0 %950
          %v952 = vsel %vm539, %v822, 0.0
          %953 = vadd.xlane.f32.xlu0 %v952
          %v954 = vpop.xlane.xlu0 %953
          %v955 = vsel %vm539, %v823, 0.0
          %956 = vadd.xlane.f32.xlu0 %v955
          %v957 = vpop.xlane.xlu0 %956
          %v958 = vsel %vm539, %v824, 0.0
          %959 = vadd.xlane.f32.xlu0 %v958
          %v960 = vpop.xlane.xlu0 %959
          %v961 = vsel %vm539, %v825, 0.0
          %962 = vadd.xlane.f32.xlu0 %v961
          %v963 = vpop.xlane.xlu0 %962
          %v964 = vsel %vm539, %v826, 0.0
          %965 = vadd.xlane.f32.xlu0 %v964
          %v966 = vpop.xlane.xlu0 %965
          %v967 = vsel %vm539, %v827, 0.0
          %968 = vadd.xlane.f32.xlu0 %v967
          %v969 = vpop.xlane.xlu0 %968
          %v970 = vsel %vm539, %v828, 0.0
          %971 = vadd.xlane.f32.xlu0 %v970
          %v972 = vpop.xlane.xlu0 %971
          %v973 = vrcp.pop 31.0
          %v974 = vmul.f32 %v831, %v973
          %v975 = vmul.f32 %v834, %v973
          %v976 = vmul.f32 %v837, %v973
          %v977 = vmul.f32 %v840, %v973
          %v978 = vmul.f32 %v843, %v973
          %v979 = vmul.f32 %v846, %v973
          %v980 = vmul.f32 %v849, %v973
          %v981 = vmul.f32 %v852, %v973
          %v982 = vmul.f32 %v855, %v973
          %v983 = vmul.f32 %v858, %v973
          %v984 = vmul.f32 %v861, %v973
          %v985 = vmul.f32 %v864, %v973
          %v986 = vmul.f32 %v867, %v973
          %v987 = vmul.f32 %v870, %v973
          %v988 = vmul.f32 %v873, %v973
          %v989 = vmul.f32 %v876, %v973
          %v990 = vmul.f32 %v879, %v973
          %v991 = vmul.f32 %v882, %v973
          %v992 = vmul.f32 %v885, %v973
          %v993 = vmul.f32 %v888, %v973
          %v994 = vmul.f32 %v891, %v973
          %v995 = vmul.f32 %v894, %v973
          %v996 = vmul.f32 %v897, %v973
          %v997 = vmul.f32 %v900, %v973
          %v998 = vmul.f32 %v903, %v973
          %v999 = vmul.f32 %v906, %v973
          %v1000 = vmul.f32 %v909, %v973
          %v1001 = vmul.f32 %v912, %v973
          %v1002 = vmul.f32 %v915, %v973
          %v1003 = vmul.f32 %v918, %v973
          %v1004 = vmul.f32 %v921, %v973
          %v1005 = vmul.f32 %v924, %v973
          %v1006 = vmul.f32 %v927, %v973
          %v1007 = vmul.f32 %v930, %v973
          %v1008 = vmul.f32 %v933, %v973
          %v1009 = vmul.f32 %v936, %v973
          %v1010 = vmul.f32 %v939, %v973
          %v1011 = vmul.f32 %v942, %v973
          %v1012 = vmul.f32 %v945, %v973
          %v1013 = vmul.f32 %v948, %v973
          %v1014 = vmul.f32 %v951, %v973
          %v1015 = vmul.f32 %v954, %v973
          %v1016 = vmul.f32 %v957, %v973
          %v1017 = vmul.f32 %v960, %v973
          %v1018 = vmul.f32 %v963, %v973
          %v1019 = vmul.f32 %v966, %v973
          %v1020 = vmul.f32 %v969, %v973
          %v1021 = vmul.f32 %v972, %v973
          %v1022 = vrsqrt.pop %v974
          %v1023 = vrsqrt.pop %v975
          %v1024 = vrsqrt.pop %v976
          %v1025 = vrsqrt.pop %v977
          %v1026 = vrsqrt.pop %v978
          %v1027 = vrsqrt.pop %v979
          %v1028 = vrsqrt.pop %v980
          %v1029 = vrsqrt.pop %v981
          %v1030 = vrsqrt.pop %v982
          %v1031 = vrsqrt.pop %v983
          %v1032 = vrsqrt.pop %v984
          %v1033 = vrsqrt.pop %v985
          %v1034 = vrsqrt.pop %v986
          %v1035 = vrsqrt.pop %v987
          %v1036 = vrsqrt.pop %v988
          %v1037 = vrsqrt.pop %v989
          %v1038 = vrsqrt.pop %v990
          %v1039 = vrsqrt.pop %v991
          %v1040 = vrsqrt.pop %v992
          %v1041 = vrsqrt.pop %v993
          %v1042 = vrsqrt.pop %v994
          %v1043 = vrsqrt.pop %v995
          %v1044 = vrsqrt.pop %v996
          %v1045 = vrsqrt.pop %v997
          %v1046 = vrsqrt.pop %v998
          %v1047 = vrsqrt.pop %v999
          %v1048 = vrsqrt.pop %v1000
          %v1049 = vrsqrt.pop %v1001
          %v1050 = vrsqrt.pop %v1002
          %v1051 = vrsqrt.pop %v1003
          %v1052 = vrsqrt.pop %v1004
          %v1053 = vrsqrt.pop %v1005
          %v1054 = vrsqrt.pop %v1006
          %v1055 = vrsqrt.pop %v1007
          %v1056 = vrsqrt.pop %v1008
          %v1057 = vrsqrt.pop %v1009
          %v1058 = vrsqrt.pop %v1010
          %v1059 = vrsqrt.pop %v1011
          %v1060 = vrsqrt.pop %v1012
          %v1061 = vrsqrt.pop %v1013
          %v1062 = vrsqrt.pop %v1014
          %v1063 = vrsqrt.pop %v1015
          %v1064 = vrsqrt.pop %v1016
          %v1065 = vrsqrt.pop %v1017
          %v1066 = vrsqrt.pop %v1018
          %v1067 = vrsqrt.pop %v1019
          %v1068 = vrsqrt.pop %v1020
          %v1069 = vrsqrt.pop %v1021
          %v1070 = vmul.f32 %v733, %v1022
          %v1071 = vmul.f32 %v734, %v1023
          %v1072 = vmul.f32 %v735, %v1024
          %v1073 = vmul.f32 %v736, %v1025
          %v1074 = vmul.f32 %v737, %v1026
          %v1075 = vmul.f32 %v738, %v1027
          %v1076 = vmul.f32 %v739, %v1028
          %v1077 = vmul.f32 %v740, %v1029
          %v1078 = vmul.f32 %v741, %v1030
          %v1079 = vmul.f32 %v742, %v1031
          %v1080 = vmul.f32 %v743, %v1032
          %v1081 = vmul.f32 %v744, %v1033
          %v1082 = vmul.f32 %v745, %v1034
          %v1083 = vmul.f32 %v746, %v1035
          %v1084 = vmul.f32 %v747, %v1036
          %v1085 = vmul.f32 %v748, %v1037
          %v1086 = vmul.f32 %v749, %v1038
          %v1087 = vmul.f32 %v750, %v1039
          %v1088 = vmul.f32 %v751, %v1040
          %v1089 = vmul.f32 %v752, %v1041
          %v1090 = vmul.f32 %v753, %v1042
          %v1091 = vmul.f32 %v754, %v1043
          %v1092 = vmul.f32 %v755, %v1044
          %v1093 = vmul.f32 %v756, %v1045
          %v1094 = vmul.f32 %v757, %v1046
          %v1095 = vmul.f32 %v758, %v1047
          %v1096 = vmul.f32 %v759, %v1048
          %v1097 = vmul.f32 %v760, %v1049
          %v1098 = vmul.f32 %v761, %v1050
          %v1099 = vmul.f32 %v762, %v1051
          %v1100 = vmul.f32 %v763, %v1052
          %v1101 = vmul.f32 %v764, %v1053
          %v1102 = vmul.f32 %v765, %v1054
          %v1103 = vmul.f32 %v766, %v1055
          %v1104 = vmul.f32 %v767, %v1056
          %v1105 = vmul.f32 %v768, %v1057
          %v1106 = vmul.f32 %v769, %v1058
          %v1107 = vmul.f32 %v770, %v1059
          %v1108 = vmul.f32 %v771, %v1060
          %v1109 = vmul.f32 %v772, %v1061
          %v1110 = vmul.f32 %v773, %v1062
          %v1111 = vmul.f32 %v774, %v1063
          %v1112 = vmul.f32 %v775, %v1064
          %v1113 = vmul.f32 %v776, %v1065
          %v1114 = vmul.f32 %v777, %v1066
          %v1115 = vmul.f32 %v778, %v1067
          %v1116 = vmul.f32 %v779, %v1068
          %v1117 = vmul.f32 %v780, %v1069
          %v1118 = vlaneseq
          %v1119 = vshrl.u32 %v1118, 7
          %v1120 = vadd.s32 %v1119, 8
          %v1121 = vadd.s32 %v1119, 16
          %v1122 = vadd.s32 %v1119, 24
          %v1123 = vadd.s32 %v1119, 32
          %v1124 = vadd.s32 %v1119, 40
          %v1125 = vadd.s32 %v1119, 48
          %v1126 = vadd.s32 %v1119, 56
          %v1127 = vadd.s32 %v1119, 64
          %v1128 = vadd.s32 %v1119, 72
          %v1129 = vadd.s32 %v1119, 80
          %v1130 = vadd.s32 %v1119, 88
          %v1131 = vadd.s32 %v1119, 96
          %v1132 = vadd.s32 %v1119, 104
          %v1133 = vadd.s32 %v1119, 112
          %v1134 = vadd.s32 %v1119, 120
          %v1135 = vadd.s32 %v1119, 128
          %v1136 = vadd.s32 %v1119, 136
          %v1137 = vadd.s32 %v1119, 144
          %v1138 = vadd.s32 %v1119, 152
          %v1139 = vadd.s32 %v1119, 160
          %v1140 = vadd.s32 %v1119, 168
          %v1141 = vadd.s32 %v1119, 176
          %v1142 = vadd.s32 %v1119, 184
          %v1143 = vadd.s32 %v1119, 192
          %v1144 = vadd.s32 %v1119, 200
          %v1145 = vadd.s32 %v1119, 208
          %v1146 = vadd.s32 %v1119, 216
          %v1147 = vadd.s32 %v1119, 224
          %v1148 = vadd.s32 %v1119, 232
          %v1149 = vadd.s32 %v1119, 240
          %v1150 = vadd.s32 %v1119, 248
          %v1151 = vadd.s32 %v1119, 256
          %v1152 = vadd.s32 %v1119, 264
          %v1153 = vadd.s32 %v1119, 272
          %v1154 = vadd.s32 %v1119, 280
          %v1155 = vadd.s32 %v1119, 288
          %v1156 = vadd.s32 %v1119, 296
          %v1157 = vadd.s32 %v1119, 304
          %v1158 = vadd.s32 %v1119, 312
          %v1159 = vadd.s32 %v1119, 320
          %v1160 = vadd.s32 %v1119, 328
          %v1161 = vadd.s32 %v1119, 336
          %v1162 = vadd.s32 %v1119, 344
          %v1163 = vadd.s32 %v1119, 352
          %v1164 = vadd.s32 %v1119, 360
          %v1165 = vadd.s32 %v1119, 368
          %v1166 = vadd.s32 %v1119, 376
          %vm1167 = vcmp.lt.s32.totalorder %v1119, 320
          %vm1168 = vcmp.lt.s32.totalorder %v1120, 320
          %vm1169 = vcmp.lt.s32.totalorder %v1121, 320
          %vm1170 = vcmp.lt.s32.totalorder %v1122, 320
          %vm1171 = vcmp.lt.s32.totalorder %v1123, 320
          %vm1172 = vcmp.lt.s32.totalorder %v1124, 320
          %vm1173 = vcmp.lt.s32.totalorder %v1125, 320
          %vm1174 = vcmp.lt.s32.totalorder %v1126, 320
          %vm1175 = vcmp.lt.s32.totalorder %v1127, 320
          %vm1176 = vcmp.lt.s32.totalorder %v1128, 320
          %vm1177 = vcmp.lt.s32.totalorder %v1129, 320
          %vm1178 = vcmp.lt.s32.totalorder %v1130, 320
          %vm1179 = vcmp.lt.s32.totalorder %v1131, 320
          %vm1180 = vcmp.lt.s32.totalorder %v1132, 320
          %vm1181 = vcmp.lt.s32.totalorder %v1133, 320
          %vm1182 = vcmp.lt.s32.totalorder %v1134, 320
          %vm1183 = vcmp.lt.s32.totalorder %v1135, 320
          %vm1184 = vcmp.lt.s32.totalorder %v1136, 320
          %vm1185 = vcmp.lt.s32.totalorder %v1137, 320
          %vm1186 = vcmp.lt.s32.totalorder %v1138, 320
          %vm1187 = vcmp.lt.s32.totalorder %v1139, 320
          %vm1188 = vcmp.lt.s32.totalorder %v1140, 320
          %vm1189 = vcmp.lt.s32.totalorder %v1141, 320
          %vm1190 = vcmp.lt.s32.totalorder %v1142, 320
          %vm1191 = vcmp.lt.s32.totalorder %v1143, 320
          %vm1192 = vcmp.lt.s32.totalorder %v1144, 320
          %vm1193 = vcmp.lt.s32.totalorder %v1145, 320
          %vm1194 = vcmp.lt.s32.totalorder %v1146, 320
          %vm1195 = vcmp.lt.s32.totalorder %v1147, 320
          %vm1196 = vcmp.lt.s32.totalorder %v1148, 320
          %vm1197 = vcmp.lt.s32.totalorder %v1149, 320
          %vm1198 = vcmp.lt.s32.totalorder %v1150, 320
          %vm1199 = vcmp.lt.s32.totalorder %v1151, 320
          %vm1200 = vcmp.lt.s32.totalorder %v1152, 320
          %vm1201 = vcmp.lt.s32.totalorder %v1153, 320
          %vm1202 = vcmp.lt.s32.totalorder %v1154, 320
          %vm1203 = vcmp.lt.s32.totalorder %v1155, 320
          %vm1204 = vcmp.lt.s32.totalorder %v1156, 320
          %vm1205 = vcmp.lt.s32.totalorder %v1157, 320
          %vm1206 = vcmp.lt.s32.totalorder %v1158, 320
          %vm1207 = vcmp.lt.s32.totalorder %v1159, 320
          %vm1208 = vcmp.lt.s32.totalorder %v1160, 320
          %vm1209 = vcmp.lt.s32.totalorder %v1161, 320
          %vm1210 = vcmp.lt.s32.totalorder %v1162, 320
          %vm1211 = vcmp.lt.s32.totalorder %v1163, 320
          %vm1212 = vcmp.lt.s32.totalorder %v1164, 320
          %vm1213 = vcmp.lt.s32.totalorder %v1165, 320
          %vm1214 = vcmp.lt.s32.totalorder %v1166, 320
          %v1215 = vsel %vm1167, 1, 0
          %v1216 = vsel %vm1168, 1, 0
          %v1217 = vsel %vm1169, 1, 0
          %v1218 = vsel %vm1170, 1, 0
          %v1219 = vsel %vm1171, 1, 0
          %v1220 = vsel %vm1172, 1, 0
          %v1221 = vsel %vm1173, 1, 0
          %v1222 = vsel %vm1174, 1, 0
          %v1223 = vsel %vm1175, 1, 0
          %v1224 = vsel %vm1176, 1, 0
          %v1225 = vsel %vm1177, 1, 0
          %v1226 = vsel %vm1178, 1, 0
          %v1227 = vsel %vm1179, 1, 0
          %v1228 = vsel %vm1180, 1, 0
          %v1229 = vsel %vm1181, 1, 0
          %v1230 = vsel %vm1182, 1, 0
          %v1231 = vsel %vm1183, 1, 0
          %v1232 = vsel %vm1184, 1, 0
          %v1233 = vsel %vm1185, 1, 0
          %v1234 = vsel %vm1186, 1, 0
          %v1235 = vsel %vm1187, 1, 0
          %v1236 = vsel %vm1188, 1, 0
          %v1237 = vsel %vm1189, 1, 0
          %v1238 = vsel %vm1190, 1, 0
          %v1239 = vsel %vm1191, 1, 0
          %v1240 = vsel %vm1192, 1, 0
          %v1241 = vsel %vm1193, 1, 0
          %v1242 = vsel %vm1194, 1, 0
          %v1243 = vsel %vm1195, 1, 0
          %v1244 = vsel %vm1196, 1, 0
          %v1245 = vsel %vm1197, 1, 0
          %v1246 = vsel %vm1198, 1, 0
          %v1247 = vsel %vm1199, 1, 0
          %v1248 = vsel %vm1200, 1, 0
          %v1249 = vsel %vm1201, 1, 0
          %v1250 = vsel %vm1202, 1, 0
          %v1251 = vsel %vm1203, 1, 0
          %v1252 = vsel %vm1204, 1, 0
          %v1253 = vsel %vm1205, 1, 0
          %v1254 = vsel %vm1206, 1, 0
          %v1255 = vsel %vm1207, 1, 0
          %v1256 = vsel %vm1208, 1, 0
          %v1257 = vsel %vm1209, 1, 0
          %v1258 = vsel %vm1210, 1, 0
          %v1259 = vsel %vm1211, 1, 0
          %v1260 = vsel %vm1212, 1, 0
          %v1261 = vsel %vm1213, 1, 0
          %v1262 = vsel %vm1214, 1, 0
          %vm1263 = vcmp.eq.s32.totalorder %v1215, 1
          %vm1264 = vcmp.eq.s32.totalorder %v1216, 1
          %vm1265 = vcmp.eq.s32.totalorder %v1217, 1
          %vm1266 = vcmp.eq.s32.totalorder %v1218, 1
          %vm1267 = vcmp.eq.s32.totalorder %v1219, 1
          %vm1268 = vcmp.eq.s32.totalorder %v1220, 1
          %vm1269 = vcmp.eq.s32.totalorder %v1221, 1
          %vm1270 = vcmp.eq.s32.totalorder %v1222, 1
          %vm1271 = vcmp.eq.s32.totalorder %v1223, 1
          %vm1272 = vcmp.eq.s32.totalorder %v1224, 1
          %vm1273 = vcmp.eq.s32.totalorder %v1225, 1
          %vm1274 = vcmp.eq.s32.totalorder %v1226, 1
          %vm1275 = vcmp.eq.s32.totalorder %v1227, 1
          %vm1276 = vcmp.eq.s32.totalorder %v1228, 1
          %vm1277 = vcmp.eq.s32.totalorder %v1229, 1
          %vm1278 = vcmp.eq.s32.totalorder %v1230, 1
          %vm1279 = vcmp.eq.s32.totalorder %v1231, 1
          %vm1280 = vcmp.eq.s32.totalorder %v1232, 1
          %vm1281 = vcmp.eq.s32.totalorder %v1233, 1
          %vm1282 = vcmp.eq.s32.totalorder %v1234, 1
          %vm1283 = vcmp.eq.s32.totalorder %v1235, 1
          %vm1284 = vcmp.eq.s32.totalorder %v1236, 1
          %vm1285 = vcmp.eq.s32.totalorder %v1237, 1
          %vm1286 = vcmp.eq.s32.totalorder %v1238, 1
          %vm1287 = vcmp.eq.s32.totalorder %v1239, 1
          %vm1288 = vcmp.eq.s32.totalorder %v1240, 1
          %vm1289 = vcmp.eq.s32.totalorder %v1241, 1
          %vm1290 = vcmp.eq.s32.totalorder %v1242, 1
          %vm1291 = vcmp.eq.s32.totalorder %v1243, 1
          %vm1292 = vcmp.eq.s32.totalorder %v1244, 1
          %vm1293 = vcmp.eq.s32.totalorder %v1245, 1
          %vm1294 = vcmp.eq.s32.totalorder %v1246, 1
          %vm1295 = vcmp.eq.s32.totalorder %v1247, 1
          %vm1296 = vcmp.eq.s32.totalorder %v1248, 1
          %vm1297 = vcmp.eq.s32.totalorder %v1249, 1
          %vm1298 = vcmp.eq.s32.totalorder %v1250, 1
          %vm1299 = vcmp.eq.s32.totalorder %v1251, 1
          %vm1300 = vcmp.eq.s32.totalorder %v1252, 1
          %vm1301 = vcmp.eq.s32.totalorder %v1253, 1
          %vm1302 = vcmp.eq.s32.totalorder %v1254, 1
          %vm1303 = vcmp.eq.s32.totalorder %v1255, 1
          %vm1304 = vcmp.eq.s32.totalorder %v1256, 1
          %vm1305 = vcmp.eq.s32.totalorder %v1257, 1
          %vm1306 = vcmp.eq.s32.totalorder %v1258, 1
          %vm1307 = vcmp.eq.s32.totalorder %v1259, 1
          %vm1308 = vcmp.eq.s32.totalorder %v1260, 1
          %vm1309 = vcmp.eq.s32.totalorder %v1261, 1
          %vm1310 = vcmp.eq.s32.totalorder %v1262, 1
          %v1311 = vsel %vm1263, %v1070, 0.0
          %v1312 = vsel %vm1264, %v1071, 0.0
          %v1313 = vsel %vm1265, %v1072, 0.0
          %v1314 = vsel %vm1266, %v1073, 0.0
          %v1315 = vsel %vm1267, %v1074, 0.0
          %v1316 = vsel %vm1268, %v1075, 0.0
          %v1317 = vsel %vm1269, %v1076, 0.0
          %v1318 = vsel %vm1270, %v1077, 0.0
          %v1319 = vsel %vm1271, %v1078, 0.0
          %v1320 = vsel %vm1272, %v1079, 0.0
          %v1321 = vsel %vm1273, %v1080, 0.0
          %v1322 = vsel %vm1274, %v1081, 0.0
          %v1323 = vsel %vm1275, %v1082, 0.0
          %v1324 = vsel %vm1276, %v1083, 0.0
          %v1325 = vsel %vm1277, %v1084, 0.0
          %v1326 = vsel %vm1278, %v1085, 0.0
          %v1327 = vsel %vm1279, %v1086, 0.0
          %v1328 = vsel %vm1280, %v1087, 0.0
          %v1329 = vsel %vm1281, %v1088, 0.0
          %v1330 = vsel %vm1282, %v1089, 0.0
          %v1331 = vsel %vm1283, %v1090, 0.0
          %v1332 = vsel %vm1284, %v1091, 0.0
          %v1333 = vsel %vm1285, %v1092, 0.0
          %v1334 = vsel %vm1286, %v1093, 0.0
          %v1335 = vsel %vm1287, %v1094, 0.0
          %v1336 = vsel %vm1288, %v1095, 0.0
          %v1337 = vsel %vm1289, %v1096, 0.0
          %v1338 = vsel %vm1290, %v1097, 0.0
          %v1339 = vsel %vm1291, %v1098, 0.0
          %v1340 = vsel %vm1292, %v1099, 0.0
          %v1341 = vsel %vm1293, %v1100, 0.0
          %v1342 = vsel %vm1294, %v1101, 0.0
          %v1343 = vsel %vm1295, %v1102, 0.0
          %v1344 = vsel %vm1296, %v1103, 0.0
          %v1345 = vsel %vm1297, %v1104, 0.0
          %v1346 = vsel %vm1298, %v1105, 0.0
          %v1347 = vsel %vm1299, %v1106, 0.0
          %v1348 = vsel %vm1300, %v1107, 0.0
          %v1349 = vsel %vm1301, %v1108, 0.0
          %v1350 = vsel %vm1302, %v1109, 0.0
          %v1351 = vsel %vm1303, %v1110, 0.0
          %v1352 = vsel %vm1304, %v1111, 0.0
          %v1353 = vsel %vm1305, %v1112, 0.0
          %v1354 = vsel %vm1306, %v1113, 0.0
          %v1355 = vsel %vm1307, %v1114, 0.0
          %v1356 = vsel %vm1308, %v1115, 0.0
          %v1357 = vsel %vm1309, %v1116, 0.0
          %v1358 = vsel %vm1310, %v1117, 0.0
          %v1359 = vld [vmem:[%s2] sm:$0xff]
          %v1360 = vld [vmem:[%s2 + $0x8] sm:$0xff]
          %v1361 = vld [vmem:[%s2 + $0x10] sm:$0xff]
          %v1362 = vld [vmem:[%s2 + $0x18] sm:$0xff]
          %v1363 = vld [vmem:[%s3] sm:$0x1]
          %v1365 = vlaneseq
          %v1366 = vshrl.u32 %v1365, 7
          %v1367 = vsub.s32 0, %v1366
          %v1368 = vrot.slane %v1363, %v1367
          %v1371 = vsel %vm539, %v1311, 0
          %v1374 = vsel %vm539, %v1312, 0
          %v1377 = vsel %vm539, %v1313, 0
          %v1380 = vsel %vm539, %v1314, 0
          %v1383 = vsel %vm539, %v1315, 0
          %v1386 = vsel %vm539, %v1316, 0
          %v1389 = vsel %vm539, %v1317, 0
          %v1392 = vsel %vm539, %v1318, 0
          %v1395 = vsel %vm539, %v1319, 0
          %v1398 = vsel %vm539, %v1320, 0
          %v1401 = vsel %vm539, %v1321, 0
          %v1404 = vsel %vm539, %v1322, 0
          %v1407 = vsel %vm539, %v1323, 0
          %v1410 = vsel %vm539, %v1324, 0
          %v1413 = vsel %vm539, %v1325, 0
          %v1416 = vsel %vm539, %v1326, 0
          %v1419 = vsel %vm539, %v1327, 0
          %v1422 = vsel %vm539, %v1328, 0
          %v1425 = vsel %vm539, %v1329, 0
          %v1428 = vsel %vm539, %v1330, 0
          %v1431 = vsel %vm539, %v1331, 0
          %v1434 = vsel %vm539, %v1332, 0
          %v1437 = vsel %vm539, %v1333, 0
          %v1440 = vsel %vm539, %v1334, 0
          %v1443 = vsel %vm539, %v1335, 0
          %v1446 = vsel %vm539, %v1336, 0
          %v1449 = vsel %vm539, %v1337, 0
          %v1452 = vsel %vm539, %v1338, 0
          %v1455 = vsel %vm539, %v1339, 0
          %v1458 = vsel %vm539, %v1340, 0
          %v1461 = vsel %vm539, %v1341, 0
          %v1464 = vsel %vm539, %v1342, 0
          %v1467 = vsel %vm539, %v1343, 0
          %v1470 = vsel %vm539, %v1344, 0
          %v1473 = vsel %vm539, %v1345, 0
          %v1476 = vsel %vm539, %v1346, 0
          %v1479 = vsel %vm539, %v1347, 0
          %v1482 = vsel %vm539, %v1348, 0
          %v1485 = vsel %vm539, %v1349, 0
          %v1488 = vsel %vm539, %v1350, 0
          %v1491 = vsel %vm539, %v1351, 0
          %v1494 = vsel %vm539, %v1352, 0
          %v1497 = vsel %vm539, %v1353, 0
          %v1500 = vsel %vm539, %v1354, 0
          %v1503 = vsel %vm539, %v1355, 0
          %v1506 = vsel %vm539, %v1356, 0
          %v1509 = vsel %vm539, %v1357, 0
          %v1512 = vsel %vm539, %v1358, 0
          %1514 = vmatprep.subr.mxu0 0.0
          %1515 = vmatpush1.msra.mxu0 %v1359
          %1516 = vmatprep.subr.mxu0 0.0
          %1517 = vmatpush1.msra.mxu0 %v1360
          %1518 = vmatprep.subr.mxu0 0.0
          %1519 = vmatpush1.msra.mxu0 %v1361
          %1520 = vmatprep.subr.mxu0 0.0
          %1521 = vmatpush1.msra.mxu0 %v1362
          %1522 = vmatprep.subr.mxu0 0.0
          %1523 = vmatpush1.msra.mxu0 0.0
          %1524 = vmatprep.subr.mxu0 0.0
          %1525 = vmatpush1.msra.mxu0 0.0
          %1526 = vmatprep.subr.mxu0 0.0
          %1527 = vmatpush1.msra.mxu0 0.0
          %1528 = vmatprep.subr.mxu0 0.0
          %1529 = vmatpush1.msra.mxu0 0.0
          %1530 = vmatprep.subr.mxu0 0.0
          %1531 = vmatpush1.msra.mxu0 0.0
          %1532 = vmatprep.subr.mxu0 0.0
          %1533 = vmatpush1.msra.mxu0 0.0
          %1534 = vmatprep.subr.mxu0 0.0
          %1535 = vmatpush1.msra.mxu0 0.0
          %1536 = vmatprep.subr.mxu0 0.0
          %1537 = vmatpush1.msra.mxu0 0.0
          %1538 = vmatprep.subr.mxu0 0.0
          %1539 = vmatpush1.msra.mxu0 0.0
          %1540 = vmatprep.subr.mxu0 0.0
          %1541 = vmatpush1.msra.mxu0 0.0
          %1542 = vmatprep.subr.mxu0 0.0
          %1543 = vmatpush1.msra.mxu0 0.0
          %1544 = vmatprep.subr.mxu0 0.0
          %1545 = vmatpush1.msra.mxu0 0.0
          %1546 = vmatprep.subr.mxu0 0.0
          %1547 = vmatpush1.msra.mxu0 0.0
          %1548 = vmatprep.subr.mxu0 0.0
          %1549 = vmatpush1.msra.mxu0 0.0
          %1550 = vmatprep.subr.mxu0 0.0
          %1551 = vmatpush1.msra.mxu0 0.0
          %1552 = vmatprep.subr.mxu0 0.0
          %1553 = vmatpush1.msra.mxu0 0.0
          %1554 = vmatprep.subr.mxu0 0.0
          %1555 = vmatpush1.msra.mxu0 0.0
          %1556 = vmatprep.subr.mxu0 0.0
          %1557 = vmatpush1.msra.mxu0 0.0
          %1558 = vmatprep.subr.mxu0 0.0
          %1559 = vmatpush1.msra.mxu0 0.0
          %1560 = vmatprep.subr.mxu0 0.0
          %1561 = vmatpush1.msra.mxu0 0.0
          %1562 = vmatprep.subr.mxu0 0.0
          %1563 = vmatpush1.msra.mxu0 0.0
          %1564 = vmatprep.subr.mxu0 0.0
          %1565 = vmatpush1.msra.mxu0 0.0
          %1566 = vmatprep.subr.mxu0 0.0
          %1567 = vmatpush1.msra.mxu0 0.0
          %1568 = vmatprep.subr.mxu0 0.0
          %1569 = vmatpush1.msra.mxu0 0.0
          %1570 = vmatprep.subr.mxu0 0.0
          %1571 = vmatpush1.msra.mxu0 0.0
          %1572 = vmatprep.subr.mxu0 0.0
          %1573 = vmatpush1.msra.mxu0 0.0
          %1574 = vmatprep.subr.mxu0 0.0
          %1575 = vmatpush1.msra.mxu0 0.0
          %1576 = vmatprep.subr.mxu0 0.0
          %1577 = vmatpush1.msra.mxu0 0.0
          %1578 = vmatprep.mubr.f32.mxu0 0.0
          %1579 = vmatmul.mubr.f32.gmra.mrb[0].mxu0 %v1371
          %v1580 = vpop.f32.mrb[0].mxu0
          %v1581 = vadd.f32 %v1368, %v1580
          %v1582 = vpop.f32.mrb[0].mxu0
          %1583 = vmatprep.mubr.f32.mxu0 0.0
          %1584 = vmatmul.mubr.f32.gmra.mrb[0].mxu0 %v1374
          %v1585 = vpop.f32.mrb[0].mxu0
          %v1586 = vadd.f32 %v1368, %v1585
          %v1587 = vpop.f32.mrb[0].mxu0
          %1588 = vmatprep.mubr.f32.mxu0 0.0
          %1589 = vmatmul.mubr.f32.gmra.mrb[0].mxu0 %v1377
          %v1590 = vpop.f32.mrb[0].mxu0
          %v1591 = vadd.f32 %v1368, %v1590
          %v1592 = vpop.f32.mrb[0].mxu0
          %1593 = vmatprep.mubr.f32.mxu0 0.0
          %1594 = vmatmul.mubr.f32.gmra.mrb[0].mxu0 %v1380
          %v1595 = vpop.f32.mrb[0].mxu0
          %v1596 = vadd.f32 %v1368, %v1595
          %v1597 = vpop.f32.mrb[0].mxu0
          %1598 = vmatprep.mubr.f32.mxu0 0.0
          %1599 = vmatmul.mubr.f32.gmra.mrb[0].mxu0 %v1383
          %v1600 = vpop.f32.mrb[0].mxu0
          %v1601 = vadd.f32 %v1368, %v1600
          %v1602 = vpop.f32.mrb[0].mxu0
          %1603 = vmatprep.mubr.f32.mxu0 0.0
          %1604 = vmatmul.mubr.f32.gmra.mrb[0].mxu0 %v1386
          %v1605 = vpop.f32.mrb[0].mxu0
          %v1606 = vadd.f32 %v1368, %v1605
          %v1607 = vpop.f32.mrb[0].mxu0
          %1608 = vmatprep.mubr.f32.mxu0 0.0
          %1609 = vmatmul.mubr.f32.gmra.mrb[0].mxu0 %v1389
          %v1610 = vpop.f32.mrb[0].mxu0
          %v1611 = vadd.f32 %v1368, %v1610
          %v1612 = vpop.f32.mrb[0].mxu0
          %1613 = vmatprep.mubr.f32.mxu0 0.0
          %1614 = vmatmul.mubr.f32.gmra.mrb[0].mxu0 %v1392
          %v1615 = vpop.f32.mrb[0].mxu0
          %v1616 = vadd.f32 %v1368, %v1615
          %v1617 = vpop.f32.mrb[0].mxu0
          %1618 = vmatprep.mubr.f32.mxu0 0.0
          %1619 = vmatmul.mubr.f32.gmra.mrb[0].mxu0 %v1395
          %v1620 = vpop.f32.mrb[0].mxu0
          %v1621 = vadd.f32 %v1368, %v1620
          %v1622 = vpop.f32.mrb[0].mxu0
          %1623 = vmatprep.mubr.f32.mxu0 0.0
          %1624 = vmatmul.mubr.f32.gmra.mrb[0].mxu0 %v1398
          %v1625 = vpop.f32.mrb[0].mxu0
          %v1626 = vadd.f32 %v1368, %v1625
          %v1627 = vpop.f32.mrb[0].mxu0
          %1628 = vmatprep.mubr.f32.mxu0 0.0
          %1629 = vmatmul.mubr.f32.gmra.mrb[0].mxu0 %v1401
          %v1630 = vpop.f32.mrb[0].mxu0
          %v1631 = vadd.f32 %v1368, %v1630
          %v1632 = vpop.f32.mrb[0].mxu0
          %1633 = vmatprep.mubr.f32.mxu0 0.0
          %1634 = vmatmul.mubr.f32.gmra.mrb[0].mxu0 %v1404
          %v1635 = vpop.f32.mrb[0].mxu0
          %v1636 = vadd.f32 %v1368, %v1635
          %v1637 = vpop.f32.mrb[0].mxu0
          %1638 = vmatprep.mubr.f32.mxu0 0.0
          %1639 = vmatmul.mubr.f32.gmra.mrb[0].mxu0 %v1407
          %v1640 = vpop.f32.mrb[0].mxu0
          %v1641 = vadd.f32 %v1368, %v1640
          %v1642 = vpop.f32.mrb[0].mxu0
          %1643 = vmatprep.mubr.f32.mxu0 0.0
          %1644 = vmatmul.mubr.f32.gmra.mrb[0].mxu0 %v1410
          %v1645 = vpop.f32.mrb[0].mxu0
          %v1646 = vadd.f32 %v1368, %v1645
          %v1647 = vpop.f32.mrb[0].mxu0
          %1648 = vmatprep.mubr.f32.mxu0 0.0
          %1649 = vmatmul.mubr.f32.gmra.mrb[0].mxu0 %v1413
          %v1650 = vpop.f32.mrb[0].mxu0
          %v1651 = vadd.f32 %v1368, %v1650
          %v1652 = vpop.f32.mrb[0].mxu0
          %1653 = vmatprep.mubr.f32.mxu0 0.0
          %1654 = vmatmul.mubr.f32.gmra.mrb[0].mxu0 %v1416
          %v1655 = vpop.f32.mrb[0].mxu0
          %v1656 = vadd.f32 %v1368, %v1655
          %v1657 = vpop.f32.mrb[0].mxu0
          %1658 = vmatprep.mubr.f32.mxu0 0.0
          %1659 = vmatmul.mubr.f32.gmra.mrb[0].mxu0 %v1419
          %v1660 = vpop.f32.mrb[0].mxu0
          %v1661 = vadd.f32 %v1368, %v1660
          %v1662 = vpop.f32.mrb[0].mxu0
          %1663 = vmatprep.mubr.f32.mxu0 0.0
          %1664 = vmatmul.mubr.f32.gmra.mrb[0].mxu0 %v1422
          %v1665 = vpop.f32.mrb[0].mxu0
          %v1666 = vadd.f32 %v1368, %v1665
          %v1667 = vpop.f32.mrb[0].mxu0
          %1668 = vmatprep.mubr.f32.mxu0 0.0
          %1669 = vmatmul.mubr.f32.gmra.mrb[0].mxu0 %v1425
          %v1670 = vpop.f32.mrb[0].mxu0
          %v1671 = vadd.f32 %v1368, %v1670
          %v1672 = vpop.f32.mrb[0].mxu0
          %1673 = vmatprep.mubr.f32.mxu0 0.0
          %1674 = vmatmul.mubr.f32.gmra.mrb[0].mxu0 %v1428
          %v1675 = vpop.f32.mrb[0].mxu0
          %v1676 = vadd.f32 %v1368, %v1675
          %v1677 = vpop.f32.mrb[0].mxu0
          %1678 = vmatprep.mubr.f32.mxu0 0.0
          %1679 = vmatmul.mubr.f32.gmra.mrb[0].mxu0 %v1431
          %v1680 = vpop.f32.mrb[0].mxu0
          %v1681 = vadd.f32 %v1368, %v1680
          %v1682 = vpop.f32.mrb[0].mxu0
          %1683 = vmatprep.mubr.f32.mxu0 0.0
          %1684 = vmatmul.mubr.f32.gmra.mrb[0].mxu0 %v1434
          %v1685 = vpop.f32.mrb[0].mxu0
          %v1686 = vadd.f32 %v1368, %v1685
          %v1687 = vpop.f32.mrb[0].mxu0
          %1688 = vmatprep.mubr.f32.mxu0 0.0
          %1689 = vmatmul.mubr.f32.gmra.mrb[0].mxu0 %v1437
          %v1690 = vpop.f32.mrb[0].mxu0
          %v1691 = vadd.f32 %v1368, %v1690
          %v1692 = vpop.f32.mrb[0].mxu0
          %1693 = vmatprep.mubr.f32.mxu0 0.0
          %1694 = vmatmul.mubr.f32.gmra.mrb[0].mxu0 %v1440
          %v1695 = vpop.f32.mrb[0].mxu0
          %v1696 = vadd.f32 %v1368, %v1695
          %v1697 = vpop.f32.mrb[0].mxu0
          %1698 = vmatprep.mubr.f32.mxu0 0.0
          %1699 = vmatmul.mubr.f32.gmra.mrb[0].mxu0 %v1443
          %v1700 = vpop.f32.mrb[0].mxu0
          %v1701 = vadd.f32 %v1368, %v1700
          %v1702 = vpop.f32.mrb[0].mxu0
          %1703 = vmatprep.mubr.f32.mxu0 0.0
          %1704 = vmatmul.mubr.f32.gmra.mrb[0].mxu0 %v1446
          %v1705 = vpop.f32.mrb[0].mxu0
          %v1706 = vadd.f32 %v1368, %v1705
          %v1707 = vpop.f32.mrb[0].mxu0
          %1708 = vmatprep.mubr.f32.mxu0 0.0
          %1709 = vmatmul.mubr.f32.gmra.mrb[0].mxu0 %v1449
          %v1710 = vpop.f32.mrb[0].mxu0
          %v1711 = vadd.f32 %v1368, %v1710
          %v1712 = vpop.f32.mrb[0].mxu0
          %1713 = vmatprep.mubr.f32.mxu0 0.0
          %1714 = vmatmul.mubr.f32.gmra.mrb[0].mxu0 %v1452
          %v1715 = vpop.f32.mrb[0].mxu0
          %v1716 = vadd.f32 %v1368, %v1715
          %v1717 = vpop.f32.mrb[0].mxu0
          %1718 = vmatprep.mubr.f32.mxu0 0.0
          %1719 = vmatmul.mubr.f32.gmra.mrb[0].mxu0 %v1455
          %v1720 = vpop.f32.mrb[0].mxu0
          %v1721 = vadd.f32 %v1368, %v1720
          %v1722 = vpop.f32.mrb[0].mxu0
          %1723 = vmatprep.mubr.f32.mxu0 0.0
          %1724 = vmatmul.mubr.f32.gmra.mrb[0].mxu0 %v1458
          %v1725 = vpop.f32.mrb[0].mxu0
          %v1726 = vadd.f32 %v1368, %v1725
          %v1727 = vpop.f32.mrb[0].mxu0
          %1728 = vmatprep.mubr.f32.mxu0 0.0
          %1729 = vmatmul.mubr.f32.gmra.mrb[0].mxu0 %v1461
          %v1730 = vpop.f32.mrb[0].mxu0
          %v1731 = vadd.f32 %v1368, %v1730
          %v1732 = vpop.f32.mrb[0].mxu0
          %1733 = vmatprep.mubr.f32.mxu0 0.0
          %1734 = vmatmul.mubr.f32.gmra.mrb[0].mxu0 %v1464
          %v1735 = vpop.f32.mrb[0].mxu0
          %v1736 = vadd.f32 %v1368, %v1735
          %v1737 = vpop.f32.mrb[0].mxu0
          %1738 = vmatprep.mubr.f32.mxu0 0.0
          %1739 = vmatmul.mubr.f32.gmra.mrb[0].mxu0 %v1467
          %v1740 = vpop.f32.mrb[0].mxu0
          %v1741 = vadd.f32 %v1368, %v1740
          %v1742 = vpop.f32.mrb[0].mxu0
          %1743 = vmatprep.mubr.f32.mxu0 0.0
          %1744 = vmatmul.mubr.f32.gmra.mrb[0].mxu0 %v1470
          %v1745 = vpop.f32.mrb[0].mxu0
          %v1746 = vadd.f32 %v1368, %v1745
          %v1747 = vpop.f32.mrb[0].mxu0
          %1748 = vmatprep.mubr.f32.mxu0 0.0
          %1749 = vmatmul.mubr.f32.gmra.mrb[0].mxu0 %v1473
          %v1750 = vpop.f32.mrb[0].mxu0
          %v1751 = vadd.f32 %v1368, %v1750
          %v1752 = vpop.f32.mrb[0].mxu0
          %1753 = vmatprep.mubr.f32.mxu0 0.0
          %1754 = vmatmul.mubr.f32.gmra.mrb[0].mxu0 %v1476
          %v1755 = vpop.f32.mrb[0].mxu0
          %v1756 = vadd.f32 %v1368, %v1755
          %v1757 = vpop.f32.mrb[0].mxu0
          %1758 = vmatprep.mubr.f32.mxu0 0.0
          %1759 = vmatmul.mubr.f32.gmra.mrb[0].mxu0 %v1479
          %v1760 = vpop.f32.mrb[0].mxu0
          %v1761 = vadd.f32 %v1368, %v1760
          %v1762 = vpop.f32.mrb[0].mxu0
          %1763 = vmatprep.mubr.f32.mxu0 0.0
          %1764 = vmatmul.mubr.f32.gmra.mrb[0].mxu0 %v1482
          %v1765 = vpop.f32.mrb[0].mxu0
          %v1766 = vadd.f32 %v1368, %v1765
          %v1767 = vpop.f32.mrb[0].mxu0
          %1768 = vmatprep.mubr.f32.mxu0 0.0
          %1769 = vmatmul.mubr.f32.gmra.mrb[0].mxu0 %v1485
          %v1770 = vpop.f32.mrb[0].mxu0
          %v1771 = vadd.f32 %v1368, %v1770
          %v1772 = vpop.f32.mrb[0].mxu0
          %1773 = vmatprep.mubr.f32.mxu0 0.0
          %1774 = vmatmul.mubr.f32.gmra.mrb[0].mxu0 %v1488
          %v1775 = vpop.f32.mrb[0].mxu0
          %v1776 = vadd.f32 %v1368, %v1775
          %v1777 = vpop.f32.mrb[0].mxu0
          %1778 = vmatprep.mubr.f32.mxu0 0.0
          %1779 = vmatmul.mubr.f32.gmra.mrb[0].mxu0 %v1491
          %v1780 = vpop.f32.mrb[0].mxu0
          %v1781 = vadd.f32 %v1368, %v1780
          %v1782 = vpop.f32.mrb[0].mxu0
          %1783 = vmatprep.mubr.f32.mxu0 0.0
          %1784 = vmatmul.mubr.f32.gmra.mrb[0].mxu0 %v1494
          %v1785 = vpop.f32.mrb[0].mxu0
          %v1786 = vadd.f32 %v1368, %v1785
          %v1787 = vpop.f32.mrb[0].mxu0
          %1788 = vmatprep.mubr.f32.mxu0 0.0
          %1789 = vmatmul.mubr.f32.gmra.mrb[0].mxu0 %v1497
          %v1790 = vpop.f32.mrb[0].mxu0
          %v1791 = vadd.f32 %v1368, %v1790
          %v1792 = vpop.f32.mrb[0].mxu0
          %1793 = vmatprep.mubr.f32.mxu0 0.0
          %1794 = vmatmul.mubr.f32.gmra.mrb[0].mxu0 %v1500
          %v1795 = vpop.f32.mrb[0].mxu0
          %v1796 = vadd.f32 %v1368, %v1795
          %v1797 = vpop.f32.mrb[0].mxu0
          %1798 = vmatprep.mubr.f32.mxu0 0.0
          %1799 = vmatmul.mubr.f32.gmra.mrb[0].mxu0 %v1503
          %v1800 = vpop.f32.mrb[0].mxu0
          %v1801 = vadd.f32 %v1368, %v1800
          %v1802 = vpop.f32.mrb[0].mxu0
          %1803 = vmatprep.mubr.f32.mxu0 0.0
          %1804 = vmatmul.mubr.f32.gmra.mrb[0].mxu0 %v1506
          %v1805 = vpop.f32.mrb[0].mxu0
          %v1806 = vadd.f32 %v1368, %v1805
          %v1807 = vpop.f32.mrb[0].mxu0
          %1808 = vmatprep.mubr.f32.mxu0 0.0
          %1809 = vmatmul.mubr.f32.gmra.mrb[0].mxu0 %v1509
          %v1810 = vpop.f32.mrb[0].mxu0
          %v1811 = vadd.f32 %v1368, %v1810
          %v1812 = vpop.f32.mrb[0].mxu0
          %1813 = vmatprep.mubr.f32.mxu0 0.0
          %1814 = vmatmul.mubr.f32.gmra.mrb[0].mxu0 %v1512
          %v1815 = vpop.f32.mrb[0].mxu0
          %v1816 = vadd.f32 %v1368, %v1815
          %v1817 = vpop.f32.mrb[0].mxu0
          %1818 = vdwg.mxu0
          %v1819 = vld [vmem:[#allocation2] sm:$0xff]
          %v1820 = vld [vmem:[#allocation2 + $0x8] sm:$0xff]
          %v1821 = vld [vmem:[#allocation2 + $0x10] sm:$0xff]
          %v1822 = vld [vmem:[#allocation2 + $0x18] sm:$0xff]
          %v1823 = vld [vmem:[#allocation2 + $0x20] sm:$0xff]
          %v1824 = vld [vmem:[#allocation2 + $0x28] sm:$0xff]
          %v1825 = vld [vmem:[#allocation2 + $0x30] sm:$0xff]
          %v1826 = vld [vmem:[#allocation2 + $0x38] sm:$0xff]
          %v1827 = vld [vmem:[#allocation2 + $0x40] sm:$0xff]
          %v1828 = vld [vmem:[#allocation2 + $0x48] sm:$0xff]
          %v1829 = vld [vmem:[#allocation2 + $0x50] sm:$0xff]
          %v1830 = vld [vmem:[#allocation2 + $0x58] sm:$0xff]
          %v1831 = vld [vmem:[#allocation2 + $0x60] sm:$0xff]
          %v1832 = vld [vmem:[#allocation2 + $0x68] sm:$0xff]
          %v1833 = vld [vmem:[#allocation2 + $0x70] sm:$0xff]
          %v1834 = vld [vmem:[#allocation2 + $0x78] sm:$0xff]
          %v1835 = vld [vmem:[#allocation2 + $0x80] sm:$0xff]
          %v1836 = vld [vmem:[#allocation2 + $0x88] sm:$0xff]
          %v1837 = vld [vmem:[#allocation2 + $0x90] sm:$0xff]
          %v1838 = vld [vmem:[#allocation2 + $0x98] sm:$0xff]
          %v1839 = vld [vmem:[#allocation2 + $0xa0] sm:$0xff]
          %v1840 = vld [vmem:[#allocation2 + $0xa8] sm:$0xff]
          %v1841 = vld [vmem:[#allocation2 + $0xb0] sm:$0xff]
          %v1842 = vld [vmem:[#allocation2 + $0xb8] sm:$0xff]
          %v1843 = vld [vmem:[#allocation2 + $0xc0] sm:$0xff]
          %v1844 = vld [vmem:[#allocation2 + $0xc8] sm:$0xff]
          %v1845 = vld [vmem:[#allocation2 + $0xd0] sm:$0xff]
          %v1846 = vld [vmem:[#allocation2 + $0xd8] sm:$0xff]
          %v1847 = vld [vmem:[#allocation2 + $0xe0] sm:$0xff]
          %v1848 = vld [vmem:[#allocation2 + $0xe8] sm:$0xff]
          %v1849 = vld [vmem:[#allocation2 + $0xf0] sm:$0xff]
          %v1850 = vld [vmem:[#allocation2 + $0xf8] sm:$0xff]
          %v1851 = vld [vmem:[#allocation2 + $0x100] sm:$0xff]
          %v1852 = vld [vmem:[#allocation2 + $0x108] sm:$0xff]
          %v1853 = vld [vmem:[#allocation2 + $0x110] sm:$0xff]
          %v1854 = vld [vmem:[#allocation2 + $0x118] sm:$0xff]
          %v1855 = vld [vmem:[#allocation2 + $0x120] sm:$0xff]
          %v1856 = vld [vmem:[#allocation2 + $0x128] sm:$0xff]
          %v1857 = vld [vmem:[#allocation2 + $0x130] sm:$0xff]
          %v1858 = vld [vmem:[#allocation2 + $0x138] sm:$0xff]
          %v1859 = vld [vmem:[#allocation2 + $0x140] sm:$0xff]
          %v1860 = vld [vmem:[#allocation2 + $0x148] sm:$0xff]
          %v1861 = vld [vmem:[#allocation2 + $0x150] sm:$0xff]
          %v1862 = vld [vmem:[#allocation2 + $0x158] sm:$0xff]
          %v1863 = vld [vmem:[#allocation2 + $0x160] sm:$0xff]
          %v1864 = vld [vmem:[#allocation2 + $0x168] sm:$0xff]
          %v1865 = vld [vmem:[#allocation2 + $0x170] sm:$0xff]
          %v1866 = vld [vmem:[#allocation2 + $0x178] sm:$0xff]
          %1868 = vset.pattern.permute.xlu0 0
          %1869 = vperm.xlu0 %1868, %v1819
          %v1870 = vpop.permute.xlu0 %1869
          %1873 = vset.pattern.permute.xlu0 0
          %1874 = vperm.xlu0 %1873, %v1820
          %v1875 = vpop.permute.xlu0 %1874
          %1878 = vset.pattern.permute.xlu0 0
          %1879 = vperm.xlu0 %1878, %v1821
          %v1880 = vpop.permute.xlu0 %1879
          %1883 = vset.pattern.permute.xlu0 0
          %1884 = vperm.xlu0 %1883, %v1822
          %v1885 = vpop.permute.xlu0 %1884
          %1888 = vset.pattern.permute.xlu0 0
          %1889 = vperm.xlu0 %1888, %v1823
          %v1890 = vpop.permute.xlu0 %1889
          %1893 = vset.pattern.permute.xlu0 0
          %1894 = vperm.xlu0 %1893, %v1824
          %v1895 = vpop.permute.xlu0 %1894
          %1898 = vset.pattern.permute.xlu0 0
          %1899 = vperm.xlu0 %1898, %v1825
          %v1900 = vpop.permute.xlu0 %1899
          %1903 = vset.pattern.permute.xlu0 0
          %1904 = vperm.xlu0 %1903, %v1826
          %v1905 = vpop.permute.xlu0 %1904
          %1908 = vset.pattern.permute.xlu0 0
          %1909 = vperm.xlu0 %1908, %v1827
          %v1910 = vpop.permute.xlu0 %1909
          %1913 = vset.pattern.permute.xlu0 0
          %1914 = vperm.xlu0 %1913, %v1828
          %v1915 = vpop.permute.xlu0 %1914
          %1918 = vset.pattern.permute.xlu0 0
          %1919 = vperm.xlu0 %1918, %v1829
          %v1920 = vpop.permute.xlu0 %1919
          %1923 = vset.pattern.permute.xlu0 0
          %1924 = vperm.xlu0 %1923, %v1830
          %v1925 = vpop.permute.xlu0 %1924
          %1928 = vset.pattern.permute.xlu0 0
          %1929 = vperm.xlu0 %1928, %v1831
          %v1930 = vpop.permute.xlu0 %1929
          %1933 = vset.pattern.permute.xlu0 0
          %1934 = vperm.xlu0 %1933, %v1832
          %v1935 = vpop.permute.xlu0 %1934
          %1938 = vset.pattern.permute.xlu0 0
          %1939 = vperm.xlu0 %1938, %v1833
          %v1940 = vpop.permute.xlu0 %1939
          %1943 = vset.pattern.permute.xlu0 0
          %1944 = vperm.xlu0 %1943, %v1834
          %v1945 = vpop.permute.xlu0 %1944
          %1948 = vset.pattern.permute.xlu0 0
          %1949 = vperm.xlu0 %1948, %v1835
          %v1950 = vpop.permute.xlu0 %1949
          %1953 = vset.pattern.permute.xlu0 0
          %1954 = vperm.xlu0 %1953, %v1836
          %v1955 = vpop.permute.xlu0 %1954
          %1958 = vset.pattern.permute.xlu0 0
          %1959 = vperm.xlu0 %1958, %v1837
          %v1960 = vpop.permute.xlu0 %1959
          %1963 = vset.pattern.permute.xlu0 0
          %1964 = vperm.xlu0 %1963, %v1838
          %v1965 = vpop.permute.xlu0 %1964
          %1968 = vset.pattern.permute.xlu0 0
          %1969 = vperm.xlu0 %1968, %v1839
          %v1970 = vpop.permute.xlu0 %1969
          %1973 = vset.pattern.permute.xlu0 0
          %1974 = vperm.xlu0 %1973, %v1840
          %v1975 = vpop.permute.xlu0 %1974
          %1978 = vset.pattern.permute.xlu0 0
          %1979 = vperm.xlu0 %1978, %v1841
          %v1980 = vpop.permute.xlu0 %1979
          %1983 = vset.pattern.permute.xlu0 0
          %1984 = vperm.xlu0 %1983, %v1842
          %v1985 = vpop.permute.xlu0 %1984
          %1988 = vset.pattern.permute.xlu0 0
          %1989 = vperm.xlu0 %1988, %v1843
          %v1990 = vpop.permute.xlu0 %1989
          %1993 = vset.pattern.permute.xlu0 0
          %1994 = vperm.xlu0 %1993, %v1844
          %v1995 = vpop.permute.xlu0 %1994
          %1998 = vset.pattern.permute.xlu0 0
          %1999 = vperm.xlu0 %1998, %v1845
          %v2000 = vpop.permute.xlu0 %1999
          %2003 = vset.pattern.permute.xlu0 0
          %2004 = vperm.xlu0 %2003, %v1846
          %v2005 = vpop.permute.xlu0 %2004
          %2008 = vset.pattern.permute.xlu0 0
          %2009 = vperm.xlu0 %2008, %v1847
          %v2010 = vpop.permute.xlu0 %2009
          %2013 = vset.pattern.permute.xlu0 0
          %2014 = vperm.xlu0 %2013, %v1848
          %v2015 = vpop.permute.xlu0 %2014
          %2018 = vset.pattern.permute.xlu0 0
          %2019 = vperm.xlu0 %2018, %v1849
          %v2020 = vpop.permute.xlu0 %2019
          %2023 = vset.pattern.permute.xlu0 0
          %2024 = vperm.xlu0 %2023, %v1850
          %v2025 = vpop.permute.xlu0 %2024
          %2028 = vset.pattern.permute.xlu0 0
          %2029 = vperm.xlu0 %2028, %v1851
          %v2030 = vpop.permute.xlu0 %2029
          %2033 = vset.pattern.permute.xlu0 0
          %2034 = vperm.xlu0 %2033, %v1852
          %v2035 = vpop.permute.xlu0 %2034
          %2038 = vset.pattern.permute.xlu0 0
          %2039 = vperm.xlu0 %2038, %v1853
          %v2040 = vpop.permute.xlu0 %2039
          %2043 = vset.pattern.permute.xlu0 0
          %2044 = vperm.xlu0 %2043, %v1854
          %v2045 = vpop.permute.xlu0 %2044
          %2048 = vset.pattern.permute.xlu0 0
          %2049 = vperm.xlu0 %2048, %v1855
          %v2050 = vpop.permute.xlu0 %2049
          %2053 = vset.pattern.permute.xlu0 0
          %2054 = vperm.xlu0 %2053, %v1856
          %v2055 = vpop.permute.xlu0 %2054
          %2058 = vset.pattern.permute.xlu0 0
          %2059 = vperm.xlu0 %2058, %v1857
          %v2060 = vpop.permute.xlu0 %2059
          %2063 = vset.pattern.permute.xlu0 0
          %2064 = vperm.xlu0 %2063, %v1858
          %v2065 = vpop.permute.xlu0 %2064
          %2068 = vset.pattern.permute.xlu0 0
          %2069 = vperm.xlu0 %2068, %v1859
          %v2070 = vpop.permute.xlu0 %2069
          %2073 = vset.pattern.permute.xlu0 0
          %2074 = vperm.xlu0 %2073, %v1860
          %v2075 = vpop.permute.xlu0 %2074
          %2078 = vset.pattern.permute.xlu0 0
          %2079 = vperm.xlu0 %2078, %v1861
          %v2080 = vpop.permute.xlu0 %2079
          %2083 = vset.pattern.permute.xlu0 0
          %2084 = vperm.xlu0 %2083, %v1862
          %v2085 = vpop.permute.xlu0 %2084
          %2088 = vset.pattern.permute.xlu0 0
          %2089 = vperm.xlu0 %2088, %v1863
          %v2090 = vpop.permute.xlu0 %2089
          %2093 = vset.pattern.permute.xlu0 0
          %2094 = vperm.xlu0 %2093, %v1864
          %v2095 = vpop.permute.xlu0 %2094
          %2098 = vset.pattern.permute.xlu0 0
          %2099 = vperm.xlu0 %2098, %v1865
          %v2100 = vpop.permute.xlu0 %2099
          %2103 = vset.pattern.permute.xlu0 0
          %2104 = vperm.xlu0 %2103, %v1866
          %v2105 = vpop.permute.xlu0 %2104
          %v2107 = vmul.f32 %v1870, %v1581
          %v2108 = vmul.f32 %v1875, %v1586
          %v2109 = vmul.f32 %v1880, %v1591
          %v2110 = vmul.f32 %v1885, %v1596
          %v2111 = vmul.f32 %v1890, %v1601
          %v2112 = vmul.f32 %v1895, %v1606
          %v2113 = vmul.f32 %v1900, %v1611
          %v2114 = vmul.f32 %v1905, %v1616
          %v2115 = vmul.f32 %v1910, %v1621
          %v2116 = vmul.f32 %v1915, %v1626
          %v2117 = vmul.f32 %v1920, %v1631
          %v2118 = vmul.f32 %v1925, %v1636
          %v2119 = vmul.f32 %v1930, %v1641
          %v2120 = vmul.f32 %v1935, %v1646
          %v2121 = vmul.f32 %v1940, %v1651
          %v2122 = vmul.f32 %v1945, %v1656
          %v2123 = vmul.f32 %v1950, %v1661
          %v2124 = vmul.f32 %v1955, %v1666
          %v2125 = vmul.f32 %v1960, %v1671
          %v2126 = vmul.f32 %v1965, %v1676
          %v2127 = vmul.f32 %v1970, %v1681
          %v2128 = vmul.f32 %v1975, %v1686
          %v2129 = vmul.f32 %v1980, %v1691
          %v2130 = vmul.f32 %v1985, %v1696
          %v2131 = vmul.f32 %v1990, %v1701
          %v2132 = vmul.f32 %v1995, %v1706
          %v2133 = vmul.f32 %v2000, %v1711
          %v2134 = vmul.f32 %v2005, %v1716
          %v2135 = vmul.f32 %v2010, %v1721
          %v2136 = vmul.f32 %v2015, %v1726
          %v2137 = vmul.f32 %v2020, %v1731
          %v2138 = vmul.f32 %v2025, %v1736
          %v2139 = vmul.f32 %v2030, %v1741
          %v2140 = vmul.f32 %v2035, %v1746
          %v2141 = vmul.f32 %v2040, %v1751
          %v2142 = vmul.f32 %v2045, %v1756
          %v2143 = vmul.f32 %v2050, %v1761
          %v2144 = vmul.f32 %v2055, %v1766
          %v2145 = vmul.f32 %v2060, %v1771
          %v2146 = vmul.f32 %v2065, %v1776
          %v2147 = vmul.f32 %v2070, %v1781
          %v2148 = vmul.f32 %v2075, %v1786
          %v2149 = vmul.f32 %v2080, %v1791
          %v2150 = vmul.f32 %v2085, %v1796
          %v2151 = vmul.f32 %v2090, %v1801
          %v2152 = vmul.f32 %v2095, %v1806
          %v2153 = vmul.f32 %v2100, %v1811
          %v2154 = vmul.f32 %v2105, %v1816
          %2155 = vst [vmem:[#allocation3] sm:$0xff] %v2107
          %2156 = vst [vmem:[#allocation3 + $0x8] sm:$0xff] %v2108
          %2157 = vst [vmem:[#allocation3 + $0x10] sm:$0xff] %v2109
          %2158 = vst [vmem:[#allocation3 + $0x18] sm:$0xff] %v2110
          %2159 = vst [vmem:[#allocation3 + $0x20] sm:$0xff] %v2111
          %2160 = vst [vmem:[#allocation3 + $0x28] sm:$0xff] %v2112
          %2161 = vst [vmem:[#allocation3 + $0x30] sm:$0xff] %v2113
          %2162 = vst [vmem:[#allocation3 + $0x38] sm:$0xff] %v2114
          %2163 = vst [vmem:[#allocation3 + $0x40] sm:$0xff] %v2115
          %2164 = vst [vmem:[#allocation3 + $0x48] sm:$0xff] %v2116
          %2165 = vst [vmem:[#allocation3 + $0x50] sm:$0xff] %v2117
          %2166 = vst [vmem:[#allocation3 + $0x58] sm:$0xff] %v2118
          %2167 = vst [vmem:[#allocation3 + $0x60] sm:$0xff] %v2119
          %2168 = vst [vmem:[#allocation3 + $0x68] sm:$0xff] %v2120
          %2169 = vst [vmem:[#allocation3 + $0x70] sm:$0xff] %v2121
          %2170 = vst [vmem:[#allocation3 + $0x78] sm:$0xff] %v2122
          %2171 = vst [vmem:[#allocation3 + $0x80] sm:$0xff] %v2123
          %2172 = vst [vmem:[#allocation3 + $0x88] sm:$0xff] %v2124
          %2173 = vst [vmem:[#allocation3 + $0x90] sm:$0xff] %v2125
          %2174 = vst [vmem:[#allocation3 + $0x98] sm:$0xff] %v2126
          %2175 = vst [vmem:[#allocation3 + $0xa0] sm:$0xff] %v2127
          %2176 = vst [vmem:[#allocation3 + $0xa8] sm:$0xff] %v2128
          %2177 = vst [vmem:[#allocation3 + $0xb0] sm:$0xff] %v2129
          %2178 = vst [vmem:[#allocation3 + $0xb8] sm:$0xff] %v2130
          %2179 = vst [vmem:[#allocation3 + $0xc0] sm:$0xff] %v2131
          %2180 = vst [vmem:[#allocation3 + $0xc8] sm:$0xff] %v2132
          %2181 = vst [vmem:[#allocation3 + $0xd0] sm:$0xff] %v2133
          %2182 = vst [vmem:[#allocation3 + $0xd8] sm:$0xff] %v2134
          %2183 = vst [vmem:[#allocation3 + $0xe0] sm:$0xff] %v2135
          %2184 = vst [vmem:[#allocation3 + $0xe8] sm:$0xff] %v2136
          %2185 = vst [vmem:[#allocation3 + $0xf0] sm:$0xff] %v2137
          %2186 = vst [vmem:[#allocation3 + $0xf8] sm:$0xff] %v2138
          %2187 = vst [vmem:[#allocation3 + $0x100] sm:$0xff] %v2139
          %2188 = vst [vmem:[#allocation3 + $0x108] sm:$0xff] %v2140
          %2189 = vst [vmem:[#allocation3 + $0x110] sm:$0xff] %v2141
          %2190 = vst [vmem:[#allocation3 + $0x118] sm:$0xff] %v2142
          %2191 = vst [vmem:[#allocation3 + $0x120] sm:$0xff] %v2143
          %2192 = vst [vmem:[#allocation3 + $0x128] sm:$0xff] %v2144
          %2193 = vst [vmem:[#allocation3 + $0x130] sm:$0xff] %v2145
          %2194 = vst [vmem:[#allocation3 + $0x138] sm:$0xff] %v2146
          %2195 = vst [vmem:[#allocation3 + $0x140] sm:$0xff] %v2147
          %2196 = vst [vmem:[#allocation3 + $0x148] sm:$0xff] %v2148
          %2197 = vst [vmem:[#allocation3 + $0x150] sm:$0xff] %v2149
          %2198 = vst [vmem:[#allocation3 + $0x158] sm:$0xff] %v2150
          %2199 = vst [vmem:[#allocation3 + $0x160] sm:$0xff] %v2151
          %2200 = vst [vmem:[#allocation3 + $0x168] sm:$0xff] %v2152
          %2201 = vst [vmem:[#allocation3 + $0x170] sm:$0xff] %v2153
          %2202 = vst [vmem:[#allocation3 + $0x178] sm:$0xff] %v2154
        $region56: #{tpu_custom_call.1} parent=43 // pred_fallthru
          _
        // Predicated region
        $region57: #{tpu_custom_call.1} parent=43 // pred_check
          %p2203 = pneg %p485
        $region58: #{tpu_custom_call.1} parent=43 // pred_check_branch
          %2205 = sbr.rel (%p2203) target = $region60
        $region59: #{tpu_custom_call.1} parent=43 // pred_region
          %v2206 = vld [vmem:[#allocation3] sm:$0xff]
          %v2207 = vld [vmem:[#allocation3 + $0x8] sm:$0xff]
          %v2208 = vld [vmem:[#allocation3 + $0x10] sm:$0xff]
          %v2209 = vld [vmem:[#allocation3 + $0x18] sm:$0xff]
          %v2210 = vld [vmem:[#allocation3 + $0x20] sm:$0xff]
          %v2211 = vld [vmem:[#allocation3 + $0x28] sm:$0xff]
          %v2212 = vld [vmem:[#allocation3 + $0x30] sm:$0xff]
          %v2213 = vld [vmem:[#allocation3 + $0x38] sm:$0xff]
          %v2214 = vld [vmem:[#allocation3 + $0x40] sm:$0xff]
          %v2215 = vld [vmem:[#allocation3 + $0x48] sm:$0xff]
          %v2216 = vld [vmem:[#allocation3 + $0x50] sm:$0xff]
          %v2217 = vld [vmem:[#allocation3 + $0x58] sm:$0xff]
          %v2218 = vld [vmem:[#allocation3 + $0x60] sm:$0xff]
          %v2219 = vld [vmem:[#allocation3 + $0x68] sm:$0xff]
          %v2220 = vld [vmem:[#allocation3 + $0x70] sm:$0xff]
          %v2221 = vld [vmem:[#allocation3 + $0x78] sm:$0xff]
          %v2222 = vld [vmem:[#allocation3 + $0x80] sm:$0xff]
          %v2223 = vld [vmem:[#allocation3 + $0x88] sm:$0xff]
          %v2224 = vld [vmem:[#allocation3 + $0x90] sm:$0xff]
          %v2225 = vld [vmem:[#allocation3 + $0x98] sm:$0xff]
          %v2226 = vld [vmem:[#allocation3 + $0xa0] sm:$0xff]
          %v2227 = vld [vmem:[#allocation3 + $0xa8] sm:$0xff]
          %v2228 = vld [vmem:[#allocation3 + $0xb0] sm:$0xff]
          %v2229 = vld [vmem:[#allocation3 + $0xb8] sm:$0xff]
          %v2230 = vld [vmem:[#allocation3 + $0xc0] sm:$0xff]
          %v2231 = vld [vmem:[#allocation3 + $0xc8] sm:$0xff]
          %v2232 = vld [vmem:[#allocation3 + $0xd0] sm:$0xff]
          %v2233 = vld [vmem:[#allocation3 + $0xd8] sm:$0xff]
          %v2234 = vld [vmem:[#allocation3 + $0xe0] sm:$0xff]
          %v2235 = vld [vmem:[#allocation3 + $0xe8] sm:$0xff]
          %v2236 = vld [vmem:[#allocation3 + $0xf0] sm:$0xff]
          %v2237 = vld [vmem:[#allocation3 + $0xf8] sm:$0xff]
          %v2238 = vld [vmem:[#allocation3 + $0x100] sm:$0xff]
          %v2239 = vld [vmem:[#allocation3 + $0x108] sm:$0xff]
          %v2240 = vld [vmem:[#allocation3 + $0x110] sm:$0xff]
          %v2241 = vld [vmem:[#allocation3 + $0x118] sm:$0xff]
          %v2242 = vld [vmem:[#allocation3 + $0x120] sm:$0xff]
          %v2243 = vld [vmem:[#allocation3 + $0x128] sm:$0xff]
          %v2244 = vld [vmem:[#allocation3 + $0x130] sm:$0xff]
          %v2245 = vld [vmem:[#allocation3 + $0x138] sm:$0xff]
          %v2246 = vld [vmem:[#allocation3 + $0x140] sm:$0xff]
          %v2247 = vld [vmem:[#allocation3 + $0x148] sm:$0xff]
          %v2248 = vld [vmem:[#allocation3 + $0x150] sm:$0xff]
          %v2249 = vld [vmem:[#allocation3 + $0x158] sm:$0xff]
          %v2250 = vld [vmem:[#allocation3 + $0x160] sm:$0xff]
          %v2251 = vld [vmem:[#allocation3 + $0x168] sm:$0xff]
          %v2252 = vld [vmem:[#allocation3 + $0x170] sm:$0xff]
          %v2253 = vld [vmem:[#allocation3 + $0x178] sm:$0xff]
          %v2254 = vpack.c.bf16 %v2207, %v2206
          %v2255 = vpack.c.bf16 %v2209, %v2208
          %v2256 = vpack.c.bf16 %v2211, %v2210
          %v2257 = vpack.c.bf16 %v2213, %v2212
          %v2258 = vpack.c.bf16 %v2215, %v2214
          %v2259 = vpack.c.bf16 %v2217, %v2216
          %v2260 = vpack.c.bf16 %v2219, %v2218
          %v2261 = vpack.c.bf16 %v2221, %v2220
          %v2262 = vpack.c.bf16 %v2223, %v2222
          %v2263 = vpack.c.bf16 %v2225, %v2224
          %v2264 = vpack.c.bf16 %v2227, %v2226
          %v2265 = vpack.c.bf16 %v2229, %v2228
          %v2266 = vpack.c.bf16 %v2231, %v2230
          %v2267 = vpack.c.bf16 %v2233, %v2232
          %v2268 = vpack.c.bf16 %v2235, %v2234
          %v2269 = vpack.c.bf16 %v2237, %v2236
          %v2270 = vpack.c.bf16 %v2239, %v2238
          %v2271 = vpack.c.bf16 %v2241, %v2240
          %v2272 = vpack.c.bf16 %v2243, %v2242
          %v2273 = vpack.c.bf16 %v2245, %v2244
          %v2274 = vpack.c.bf16 %v2247, %v2246
          %v2275 = vpack.c.bf16 %v2249, %v2248
          %v2276 = vpack.c.bf16 %v2251, %v2250
          %v2277 = vpack.c.bf16 %v2253, %v2252
          %v2278 = vld [vmem:[%s254] sm:$0xff]
          %v2279 = vld [vmem:[%s254 + $0x8] sm:$0xf]
          %v2280 = vld [vmem:[%s254 + $0xc] sm:$0xff]
          %v2281 = vld [vmem:[%s254 + $0x14] sm:$0xf]
          %v2282 = vld [vmem:[%s254 + $0x18] sm:$0xff]
          %v2283 = vld [vmem:[%s254 + $0x20] sm:$0xf]
          %v2284 = vld [vmem:[%s254 + $0x24] sm:$0xff]
          %v2285 = vld [vmem:[%s254 + $0x2c] sm:$0xf]
          %v2286 = vld [vmem:[%s254 + $0x30] sm:$0xff]
          %v2287 = vld [vmem:[%s254 + $0x38] sm:$0xf]
          %v2288 = vld [vmem:[%s254 + $0x3c] sm:$0xff]
          %v2289 = vld [vmem:[%s254 + $0x44] sm:$0xf]
          %v2290 = vld [vmem:[%s254 + $0x48] sm:$0xff]
          %v2291 = vld [vmem:[%s254 + $0x50] sm:$0xf]
          %v2292 = vld [vmem:[%s254 + $0x54] sm:$0xff]
          %v2293 = vld [vmem:[%s254 + $0x5c] sm:$0xf]
          %v2294 = vld [vmem:[%s254 + $0x60] sm:$0xff]
          %v2295 = vld [vmem:[%s254 + $0x68] sm:$0xf]
          %v2296 = vld [vmem:[%s254 + $0x6c] sm:$0xff]
          %v2297 = vld [vmem:[%s254 + $0x74] sm:$0xf]
          %v2298 = vld [vmem:[%s254 + $0x78] sm:$0xff]
          %v2299 = vld [vmem:[%s254 + $0x80] sm:$0xf]
          %v2300 = vld [vmem:[%s254 + $0x84] sm:$0xff]
          %v2301 = vld [vmem:[%s254 + $0x8c] sm:$0xf]
          %v2302 = vld [vmem:[%s254 + $0x90] sm:$0xff]
          %v2303 = vld [vmem:[%s254 + $0x98] sm:$0xf]
          %v2304 = vld [vmem:[%s254 + $0x9c] sm:$0xff]
          %v2305 = vld [vmem:[%s254 + $0xa4] sm:$0xf]
          %v2306 = vld [vmem:[%s254 + $0xa8] sm:$0xff]
          %v2307 = vld [vmem:[%s254 + $0xb0] sm:$0xf]
          %v2308 = vld [vmem:[%s254 + $0xb4] sm:$0xff]
          %v2309 = vld [vmem:[%s254 + $0xbc] sm:$0xf]
          %s2310 = scalar_lea.vmem [#allocation2], %s286
          %v2311 = vld [vmem:[%s2310] sm:$0xff]
          %v2312 = vld [vmem:[%s2310 + $0x8] sm:$0xff]
          %v2313 = vld [vmem:[%s2310 + $0x10] sm:$0xff]
          %v2314 = vld [vmem:[%s2310 + $0x18] sm:$0xff]
          %v2315 = vld [vmem:[%s2310 + $0x20] sm:$0xff]
          %v2316 = vld [vmem:[%s2310 + $0x28] sm:$0xff]
          %v2317 = vld [vmem:[%s2310 + $0x30] sm:$0xff]
          %v2318 = vld [vmem:[%s2310 + $0x38] sm:$0xff]
          %v2319 = vld [vmem:[%s2310 + $0x40] sm:$0xff]
          %v2320 = vld [vmem:[%s2310 + $0x48] sm:$0xff]
          %v2321 = vld [vmem:[%s2310 + $0x50] sm:$0xff]
          %v2322 = vld [vmem:[%s2310 + $0x58] sm:$0xff]
          %v2323 = vld [vmem:[%s2310 + $0x60] sm:$0xff]
          %v2324 = vld [vmem:[%s2310 + $0x68] sm:$0xff]
          %v2325 = vld [vmem:[%s2310 + $0x70] sm:$0xff]
          %v2326 = vld [vmem:[%s2310 + $0x78] sm:$0xff]
          %s2327 = scalar_lea.vmem [#allocation3], %s286
          %v2328 = vld [vmem:[%s2327] sm:$0xff]
          %v2329 = vld [vmem:[%s2327 + $0x8] sm:$0xff]
          %v2330 = vld [vmem:[%s2327 + $0x10] sm:$0xff]
          %v2331 = vld [vmem:[%s2327 + $0x18] sm:$0xff]
          %v2332 = vld [vmem:[%s2327 + $0x20] sm:$0xff]
          %v2333 = vld [vmem:[%s2327 + $0x28] sm:$0xff]
          %v2334 = vld [vmem:[%s2327 + $0x30] sm:$0xff]
          %v2335 = vld [vmem:[%s2327 + $0x38] sm:$0xff]
          %v2336 = vld [vmem:[%s2327 + $0x40] sm:$0xff]
          %v2337 = vld [vmem:[%s2327 + $0x48] sm:$0xff]
          %v2338 = vld [vmem:[%s2327 + $0x50] sm:$0xff]
          %v2339 = vld [vmem:[%s2327 + $0x58] sm:$0xff]
          %v2340 = vld [vmem:[%s2327 + $0x60] sm:$0xff]
          %v2341 = vld [vmem:[%s2327 + $0x68] sm:$0xff]
          %v2342 = vld [vmem:[%s2327 + $0x70] sm:$0xff]
          %v2343 = vld [vmem:[%s2327 + $0x78] sm:$0xff]
          %v2376 = vunpack.c.l.b16 %v2278
          %v2377 = vunpack.c.h.b16 %v2278
          %v2378 = vunpack.c.l.b16 %v2279
          %v2379 = vunpack.c.l.b16 %v2280
          %v2380 = vunpack.c.h.b16 %v2280
          %v2381 = vunpack.c.l.b16 %v2281
          %v2382 = vunpack.c.l.b16 %v2282
          %v2383 = vunpack.c.h.b16 %v2282
          %v2384 = vunpack.c.l.b16 %v2283
          %v2385 = vunpack.c.l.b16 %v2284
          %v2386 = vunpack.c.h.b16 %v2284
          %v2387 = vunpack.c.l.b16 %v2285
          %v2388 = vunpack.c.l.b16 %v2286
          %v2389 = vunpack.c.h.b16 %v2286
          %v2390 = vunpack.c.l.b16 %v2287
          %v2391 = vunpack.c.l.b16 %v2288
          %v2392 = vunpack.c.h.b16 %v2288
          %v2393 = vunpack.c.l.b16 %v2289
          %v2394 = vunpack.c.l.b16 %v2290
          %v2395 = vunpack.c.h.b16 %v2290
          %v2396 = vunpack.c.l.b16 %v2291
          %v2397 = vunpack.c.l.b16 %v2292
          %v2398 = vunpack.c.h.b16 %v2292
          %v2399 = vunpack.c.l.b16 %v2293
          %v2400 = vunpack.c.l.b16 %v2294
          %v2401 = vunpack.c.h.b16 %v2294
          %v2402 = vunpack.c.l.b16 %v2295
          %v2403 = vunpack.c.l.b16 %v2296
          %v2404 = vunpack.c.h.b16 %v2296
          %v2405 = vunpack.c.l.b16 %v2297
          %v2406 = vunpack.c.l.b16 %v2298
          %v2407 = vunpack.c.h.b16 %v2298
          %v2408 = vunpack.c.l.b16 %v2299
          %v2409 = vunpack.c.l.b16 %v2300
          %v2410 = vunpack.c.h.b16 %v2300
          %v2411 = vunpack.c.l.b16 %v2301
          %v2412 = vunpack.c.l.b16 %v2302
          %v2413 = vunpack.c.h.b16 %v2302
          %v2414 = vunpack.c.l.b16 %v2303
          %v2415 = vunpack.c.l.b16 %v2304
          %v2416 = vunpack.c.h.b16 %v2304
          %v2417 = vunpack.c.l.b16 %v2305
          %v2418 = vunpack.c.l.b16 %v2306
          %v2419 = vunpack.c.h.b16 %v2306
          %v2420 = vunpack.c.l.b16 %v2307
          %v2421 = vunpack.c.l.b16 %v2308
          %v2422 = vunpack.c.h.b16 %v2308
          %v2423 = vunpack.c.l.b16 %v2309
          %v2424 = vpack.c.b16 %v2379, %v2376
          %v2425 = vpack.c.b16 %v2380, %v2377
          %v2426 = vpack.c.b16 %v2381, %v2378
          %v2427 = vpack.c.b16 %v2385, %v2382
          %v2428 = vpack.c.b16 %v2386, %v2383
          %v2429 = vpack.c.b16 %v2387, %v2384
          %v2430 = vpack.c.b16 %v2391, %v2388
          %v2431 = vpack.c.b16 %v2392, %v2389
          %v2432 = vpack.c.b16 %v2393, %v2390
          %v2433 = vpack.c.b16 %v2397, %v2394
          %v2434 = vpack.c.b16 %v2398, %v2395
          %v2435 = vpack.c.b16 %v2399, %v2396
          %v2436 = vpack.c.b16 %v2403, %v2400
          %v2437 = vpack.c.b16 %v2404, %v2401
          %v2438 = vpack.c.b16 %v2405, %v2402
          %v2439 = vpack.c.b16 %v2409, %v2406
          %v2440 = vpack.c.b16 %v2410, %v2407
          %v2441 = vpack.c.b16 %v2411, %v2408
          %v2442 = vpack.c.b16 %v2415, %v2412
          %v2443 = vpack.c.b16 %v2416, %v2413
          %v2444 = vpack.c.b16 %v2417, %v2414
          %v2445 = vpack.c.b16 %v2421, %v2418
          %v2446 = vpack.c.b16 %v2422, %v2419
          %v2447 = vpack.c.b16 %v2423, %v2420
          %2472 = vmatprep.subr.bf16.mxu0 0
          %2473 = vmatpush1.bf16.msra.mxu0 %v2254
          %2474 = vmatprep.subr.bf16.mxu0 0
          %2475 = vmatpush1.bf16.msra.mxu0 %v2255
          %2476 = vmatprep.subr.bf16.mxu0 0
          %2477 = vmatpush1.bf16.msra.mxu0 %v2256
          %2478 = vmatprep.subr.bf16.mxu0 0
          %2479 = vmatpush1.bf16.msra.mxu0 %v2257
          %2480 = vmatprep.subr.bf16.mxu0 0
          %2481 = vmatpush1.bf16.msra.mxu0 %v2258
          %2482 = vmatprep.subr.bf16.mxu0 0
          %2483 = vmatpush1.bf16.msra.mxu0 %v2259
          %2484 = vmatprep.subr.bf16.mxu0 0
          %2485 = vmatpush1.bf16.msra.mxu0 %v2260
          %2486 = vmatprep.subr.bf16.mxu0 0
          %2487 = vmatpush1.bf16.msra.mxu0 %v2261
          %2488 = vmatprep.subr.bf16.mxu0 0
          %2489 = vmatpush1.bf16.msra.mxu0 %v2262
          %2490 = vmatprep.subr.bf16.mxu0 0
          %2491 = vmatpush1.bf16.msra.mxu0 %v2263
          %2492 = vmatprep.subr.bf16.mxu0 0
          %2493 = vmatpush1.bf16.msra.mxu0 %v2264
          %2494 = vmatprep.subr.bf16.mxu0 0
          %2495 = vmatpush1.bf16.msra.mxu0 %v2265
          %2496 = vmatprep.subr.bf16.mxu0 0
          %2497 = vmatpush1.bf16.msra.mxu0 %v2266
          %2498 = vmatprep.subr.bf16.mxu0 0
          %2499 = vmatpush1.bf16.msra.mxu0 %v2267
          %2500 = vmatprep.subr.bf16.mxu0 0
          %2501 = vmatpush1.bf16.msra.mxu0 %v2268
          %2502 = vmatprep.subr.bf16.mxu0 0
          %2503 = vmatpush1.bf16.msra.mxu0 %v2269
          %2504 = vmatprep.mubr.bf16.mxu0 %v2425
          %2505 = vmatmul.mubr.bf16.gmra.mrb[0].mxu0 %v2424
          %v2506 = vpop.f32.mrb[0].mxu0
          %v2507 = vadd.f32 %v2328, %v2506
          %v2508 = vpop.f32.mrb[0].mxu0
          %v2509 = vpop.f32.mrb[0].mxu0
          %v2510 = vadd.f32 %v2329, %v2509
          %v2511 = vpop.f32.mrb[0].mxu0
          %2512 = vmatprep.mubr.bf16.mxu0 %v2428
          %2513 = vmatmul.mubr.bf16.gmra.mrb[0].mxu0 %v2427
          %v2514 = vpop.f32.mrb[0].mxu0
          %v2515 = vadd.f32 %v2330, %v2514
          %v2516 = vpop.f32.mrb[0].mxu0
          %v2517 = vpop.f32.mrb[0].mxu0
          %v2518 = vadd.f32 %v2331, %v2517
          %v2519 = vpop.f32.mrb[0].mxu0
          %2520 = vmatprep.mubr.bf16.mxu0 %v2431
          %2521 = vmatmul.mubr.bf16.gmra.mrb[0].mxu0 %v2430
          %v2522 = vpop.f32.mrb[0].mxu0
          %v2523 = vadd.f32 %v2332, %v2522
          %v2524 = vpop.f32.mrb[0].mxu0
          %v2525 = vpop.f32.mrb[0].mxu0
          %v2526 = vadd.f32 %v2333, %v2525
          %v2527 = vpop.f32.mrb[0].mxu0
          %2528 = vmatprep.mubr.bf16.mxu0 %v2434
          %2529 = vmatmul.mubr.bf16.gmra.mrb[0].mxu0 %v2433
          %v2530 = vpop.f32.mrb[0].mxu0
          %v2531 = vadd.f32 %v2334, %v2530
          %v2532 = vpop.f32.mrb[0].mxu0
          %v2533 = vpop.f32.mrb[0].mxu0
          %v2534 = vadd.f32 %v2335, %v2533
          %v2535 = vpop.f32.mrb[0].mxu0
          %2536 = vmatprep.mubr.bf16.mxu0 %v2437
          %2537 = vmatmul.mubr.bf16.gmra.mrb[0].mxu0 %v2436
          %v2538 = vpop.f32.mrb[0].mxu0
          %v2539 = vadd.f32 %v2336, %v2538
          %v2540 = vpop.f32.mrb[0].mxu0
          %v2541 = vpop.f32.mrb[0].mxu0
          %v2542 = vadd.f32 %v2337, %v2541
          %v2543 = vpop.f32.mrb[0].mxu0
          %2544 = vmatprep.mubr.bf16.mxu0 %v2440
          %2545 = vmatmul.mubr.bf16.gmra.mrb[0].mxu0 %v2439
          %v2546 = vpop.f32.mrb[0].mxu0
          %v2547 = vadd.f32 %v2338, %v2546
          %v2548 = vpop.f32.mrb[0].mxu0
          %v2549 = vpop.f32.mrb[0].mxu0
          %v2550 = vadd.f32 %v2339, %v2549
          %v2551 = vpop.f32.mrb[0].mxu0
          %2552 = vmatprep.mubr.bf16.mxu0 %v2443
          %2553 = vmatmul.mubr.bf16.gmra.mrb[0].mxu0 %v2442
          %v2554 = vpop.f32.mrb[0].mxu0
          %v2555 = vadd.f32 %v2340, %v2554
          %v2556 = vpop.f32.mrb[0].mxu0
          %v2557 = vpop.f32.mrb[0].mxu0
          %v2558 = vadd.f32 %v2341, %v2557
          %v2559 = vpop.f32.mrb[0].mxu0
          %2560 = vmatprep.mubr.bf16.mxu0 %v2446
          %2561 = vmatmul.mubr.bf16.gmra.mrb[0].mxu0 %v2445
          %v2562 = vpop.f32.mrb[0].mxu0
          %v2563 = vadd.f32 %v2342, %v2562
          %v2564 = vpop.f32.mrb[0].mxu0
          %v2565 = vpop.f32.mrb[0].mxu0
          %v2566 = vadd.f32 %v2343, %v2565
          %v2567 = vpop.f32.mrb[0].mxu0
          %2568 = vdwg.mxu0
          %2569 = vmatprep.subr.bf16.mxu0 0
          %2570 = vmatpush1.bf16.msra.mxu0 %v2270
          %2571 = vmatprep.subr.bf16.mxu0 0
          %2572 = vmatpush1.bf16.msra.mxu0 %v2271
          %2573 = vmatprep.subr.bf16.mxu0 0
          %2574 = vmatpush1.bf16.msra.mxu0 %v2272
          %2575 = vmatprep.subr.bf16.mxu0 0
          %2576 = vmatpush1.bf16.msra.mxu0 %v2273
          %2577 = vmatprep.subr.bf16.mxu0 0
          %2578 = vmatpush1.bf16.msra.mxu0 %v2274
          %2579 = vmatprep.subr.bf16.mxu0 0
          %2580 = vmatpush1.bf16.msra.mxu0 %v2275
          %2581 = vmatprep.subr.bf16.mxu0 0
          %2582 = vmatpush1.bf16.msra.mxu0 %v2276
          %2583 = vmatprep.subr.bf16.mxu0 0
          %2584 = vmatpush1.bf16.msra.mxu0 %v2277
          %2585 = vmatprep.subr.bf16.mxu0 0
          %2586 = vmatpush1.bf16.msra.mxu0 0
          %2587 = vmatprep.subr.bf16.mxu0 0
          %2588 = vmatpush1.bf16.msra.mxu0 0
          %2589 = vmatprep.subr.bf16.mxu0 0
          %2590 = vmatpush1.bf16.msra.mxu0 0
          %2591 = vmatprep.subr.bf16.mxu0 0
          %2592 = vmatpush1.bf16.msra.mxu0 0
          %2593 = vmatprep.subr.bf16.mxu0 0
          %2594 = vmatpush1.bf16.msra.mxu0 0
          %2595 = vmatprep.subr.bf16.mxu0 0
          %2596 = vmatpush1.bf16.msra.mxu0 0
          %2597 = vmatprep.subr.bf16.mxu0 0
          %2598 = vmatpush1.bf16.msra.mxu0 0
          %2599 = vmatprep.subr.bf16.mxu0 0
          %2600 = vmatpush1.bf16.msra.mxu0 0
          %2601 = vmatprep.mubr.bf16.mxu0 0
          %2602 = vmatmul.mubr.bf16.gmra.mrb[0].mxu0 %v2426
          %v2603 = vpop.f32.mrb[0].mxu0
          %v2604 = vadd.f32 %v2507, %v2603
          %v2605 = vpop.f32.mrb[0].mxu0
          %v2606 = vpop.f32.mrb[0].mxu0
          %v2607 = vadd.f32 %v2510, %v2606
          %v2608 = vpop.f32.mrb[0].mxu0
          %2609 = vmatprep.mubr.bf16.mxu0 0
          %2610 = vmatmul.mubr.bf16.gmra.mrb[0].mxu0 %v2429
          %v2611 = vpop.f32.mrb[0].mxu0
          %v2612 = vadd.f32 %v2515, %v2611
          %v2613 = vpop.f32.mrb[0].mxu0
          %v2614 = vpop.f32.mrb[0].mxu0
          %v2615 = vadd.f32 %v2518, %v2614
          %v2616 = vpop.f32.mrb[0].mxu0
          %2617 = vmatprep.mubr.bf16.mxu0 0
          %2618 = vmatmul.mubr.bf16.gmra.mrb[0].mxu0 %v2432
          %v2619 = vpop.f32.mrb[0].mxu0
          %v2620 = vadd.f32 %v2523, %v2619
          %v2621 = vpop.f32.mrb[0].mxu0
          %v2622 = vpop.f32.mrb[0].mxu0
          %v2623 = vadd.f32 %v2526, %v2622
          %v2624 = vpop.f32.mrb[0].mxu0
          %2625 = vmatprep.mubr.bf16.mxu0 0
          %2626 = vmatmul.mubr.bf16.gmra.mrb[0].mxu0 %v2435
          %v2627 = vpop.f32.mrb[0].mxu0
          %v2628 = vadd.f32 %v2531, %v2627
          %v2629 = vpop.f32.mrb[0].mxu0
          %v2630 = vpop.f32.mrb[0].mxu0
          %v2631 = vadd.f32 %v2534, %v2630
          %v2632 = vpop.f32.mrb[0].mxu0
          %2633 = vmatprep.mubr.bf16.mxu0 0
          %2634 = vmatmul.mubr.bf16.gmra.mrb[0].mxu0 %v2438
          %v2635 = vpop.f32.mrb[0].mxu0
          %v2636 = vadd.f32 %v2539, %v2635
          %v2637 = vpop.f32.mrb[0].mxu0
          %v2638 = vpop.f32.mrb[0].mxu0
          %v2639 = vadd.f32 %v2542, %v2638
          %v2640 = vpop.f32.mrb[0].mxu0
          %2641 = vmatprep.mubr.bf16.mxu0 0
          %2642 = vmatmul.mubr.bf16.gmra.mrb[0].mxu0 %v2441
          %v2643 = vpop.f32.mrb[0].mxu0
          %v2644 = vadd.f32 %v2547, %v2643
          %v2645 = vpop.f32.mrb[0].mxu0
          %v2646 = vpop.f32.mrb[0].mxu0
          %v2647 = vadd.f32 %v2550, %v2646
          %v2648 = vpop.f32.mrb[0].mxu0
          %2649 = vmatprep.mubr.bf16.mxu0 0
          %2650 = vmatmul.mubr.bf16.gmra.mrb[0].mxu0 %v2444
          %v2651 = vpop.f32.mrb[0].mxu0
          %v2652 = vadd.f32 %v2555, %v2651
          %v2653 = vpop.f32.mrb[0].mxu0
          %v2654 = vpop.f32.mrb[0].mxu0
          %v2655 = vadd.f32 %v2558, %v2654
          %v2656 = vpop.f32.mrb[0].mxu0
          %2657 = vmatprep.mubr.bf16.mxu0 0
          %2658 = vmatmul.mubr.bf16.gmra.mrb[0].mxu0 %v2447
          %v2659 = vpop.f32.mrb[0].mxu0
          %v2660 = vadd.f32 %v2563, %v2659
          %v2661 = vpop.f32.mrb[0].mxu0
          %v2662 = vpop.f32.mrb[0].mxu0
          %v2663 = vadd.f32 %v2566, %v2662
          %v2664 = vpop.f32.mrb[0].mxu0
          %2665 = vdwg.mxu0
          %2667 = vset.pattern.permute.xlu0 0
          %2668 = vperm.xlu0 %2667, %v2311
          %v2669 = vpop.permute.xlu0 %2668
          %2672 = vset.pattern.permute.xlu0 0
          %2673 = vperm.xlu0 %2672, %v2312
          %v2674 = vpop.permute.xlu0 %2673
          %2677 = vset.pattern.permute.xlu0 0
          %2678 = vperm.xlu0 %2677, %v2313
          %v2679 = vpop.permute.xlu0 %2678
          %2682 = vset.pattern.permute.xlu0 0
          %2683 = vperm.xlu0 %2682, %v2314
          %v2684 = vpop.permute.xlu0 %2683
          %2687 = vset.pattern.permute.xlu0 0
          %2688 = vperm.xlu0 %2687, %v2315
          %v2689 = vpop.permute.xlu0 %2688
          %2692 = vset.pattern.permute.xlu0 0
          %2693 = vperm.xlu0 %2692, %v2316
          %v2694 = vpop.permute.xlu0 %2693
          %2697 = vset.pattern.permute.xlu0 0
          %2698 = vperm.xlu0 %2697, %v2317
          %v2699 = vpop.permute.xlu0 %2698
          %2702 = vset.pattern.permute.xlu0 0
          %2703 = vperm.xlu0 %2702, %v2318
          %v2704 = vpop.permute.xlu0 %2703
          %2707 = vset.pattern.permute.xlu0 0
          %2708 = vperm.xlu0 %2707, %v2319
          %v2709 = vpop.permute.xlu0 %2708
          %2712 = vset.pattern.permute.xlu0 0
          %2713 = vperm.xlu0 %2712, %v2320
          %v2714 = vpop.permute.xlu0 %2713
          %2717 = vset.pattern.permute.xlu0 0
          %2718 = vperm.xlu0 %2717, %v2321
          %v2719 = vpop.permute.xlu0 %2718
          %2722 = vset.pattern.permute.xlu0 0
          %2723 = vperm.xlu0 %2722, %v2322
          %v2724 = vpop.permute.xlu0 %2723
          %2727 = vset.pattern.permute.xlu0 0
          %2728 = vperm.xlu0 %2727, %v2323
          %v2729 = vpop.permute.xlu0 %2728
          %2732 = vset.pattern.permute.xlu0 0
          %2733 = vperm.xlu0 %2732, %v2324
          %v2734 = vpop.permute.xlu0 %2733
          %2737 = vset.pattern.permute.xlu0 0
          %2738 = vperm.xlu0 %2737, %v2325
          %v2739 = vpop.permute.xlu0 %2738
          %2742 = vset.pattern.permute.xlu0 0
          %2743 = vperm.xlu0 %2742, %v2326
          %v2744 = vpop.permute.xlu0 %2743
          %v2746 = vmul.f32 %v2669, %v2604
          %v2747 = vmul.f32 %v2674, %v2607
          %v2748 = vmul.f32 %v2679, %v2612
          %v2749 = vmul.f32 %v2684, %v2615
          %v2750 = vmul.f32 %v2689, %v2620
          %v2751 = vmul.f32 %v2694, %v2623
          %v2752 = vmul.f32 %v2699, %v2628
          %v2753 = vmul.f32 %v2704, %v2631
          %v2754 = vmul.f32 %v2709, %v2636
          %v2755 = vmul.f32 %v2714, %v2639
          %v2756 = vmul.f32 %v2719, %v2644
          %v2757 = vmul.f32 %v2724, %v2647
          %v2758 = vmul.f32 %v2729, %v2652
          %v2759 = vmul.f32 %v2734, %v2655
          %v2760 = vmul.f32 %v2739, %v2660
          %v2761 = vmul.f32 %v2744, %v2663
          %v2762 = vmax.f32 %v2746, 0.0
          %v2763 = vmax.f32 %v2747, 0.0
          %v2764 = vmax.f32 %v2748, 0.0
          %v2765 = vmax.f32 %v2749, 0.0
          %v2766 = vmax.f32 %v2750, 0.0
          %v2767 = vmax.f32 %v2751, 0.0
          %v2768 = vmax.f32 %v2752, 0.0
          %v2769 = vmax.f32 %v2753, 0.0
          %v2770 = vmax.f32 %v2754, 0.0
          %v2771 = vmax.f32 %v2755, 0.0
          %v2772 = vmax.f32 %v2756, 0.0
          %v2773 = vmax.f32 %v2757, 0.0
          %v2774 = vmax.f32 %v2758, 0.0
          %v2775 = vmax.f32 %v2759, 0.0
          %v2776 = vmax.f32 %v2760, 0.0
          %v2777 = vmax.f32 %v2761, 0.0
          %s2778 = scalar_lea.vmem [#allocation4], %s286
          %2779 = vst [vmem:[%s2778] sm:$0xff] %v2762
          %2780 = vst [vmem:[%s2778 + $0x8] sm:$0xff] %v2763
          %2781 = vst [vmem:[%s2778 + $0x10] sm:$0xff] %v2764
          %2782 = vst [vmem:[%s2778 + $0x18] sm:$0xff] %v2765
          %2783 = vst [vmem:[%s2778 + $0x20] sm:$0xff] %v2766
          %2784 = vst [vmem:[%s2778 + $0x28] sm:$0xff] %v2767
          %2785 = vst [vmem:[%s2778 + $0x30] sm:$0xff] %v2768
          %2786 = vst [vmem:[%s2778 + $0x38] sm:$0xff] %v2769
          %2787 = vst [vmem:[%s2778 + $0x40] sm:$0xff] %v2770
          %2788 = vst [vmem:[%s2778 + $0x48] sm:$0xff] %v2771
          %2789 = vst [vmem:[%s2778 + $0x50] sm:$0xff] %v2772
          %2790 = vst [vmem:[%s2778 + $0x58] sm:$0xff] %v2773
          %2791 = vst [vmem:[%s2778 + $0x60] sm:$0xff] %v2774
          %2792 = vst [vmem:[%s2778 + $0x68] sm:$0xff] %v2775
          %2793 = vst [vmem:[%s2778 + $0x70] sm:$0xff] %v2776
          %2794 = vst [vmem:[%s2778 + $0x78] sm:$0xff] %v2777
        $region60: #{tpu_custom_call.1} parent=43 // pred_fallthru
          _
        %p2795 = scmp.eq.s32.totalorder %s27, 2
        %p2796 = pnand %p2795, %p486
        %p2797 = pneg %p2796
        // Predicated region
        $region61: #{tpu_custom_call.1} parent=43 // pred_check
          _
        $region62: #{tpu_custom_call.1} parent=43 // pred_check_branch
          %2799 = sbr.rel (%p2796) target = $region64
        $region63: #{tpu_custom_call.1} parent=43 // pred_region
          %v2800 = vld [vmem:[#allocation4] sm:$0xff]
          %v2801 = vld [vmem:[#allocation4 + $0x8] sm:$0xff]
          %v2802 = vld [vmem:[#allocation4 + $0x10] sm:$0xff]
          %v2803 = vld [vmem:[#allocation4 + $0x18] sm:$0xff]
          %v2804 = vld [vmem:[#allocation4 + $0x20] sm:$0xff]
          %v2805 = vld [vmem:[#allocation4 + $0x28] sm:$0xff]
          %v2806 = vld [vmem:[#allocation4 + $0x30] sm:$0xff]
          %v2807 = vld [vmem:[#allocation4 + $0x38] sm:$0xff]
          %v2808 = vld [vmem:[#allocation4 + $0x40] sm:$0xff]
          %v2809 = vld [vmem:[#allocation4 + $0x48] sm:$0xff]
          %v2810 = vld [vmem:[#allocation4 + $0x50] sm:$0xff]
          %v2811 = vld [vmem:[#allocation4 + $0x58] sm:$0xff]
          %v2812 = vld [vmem:[#allocation4 + $0x60] sm:$0xff]
          %v2813 = vld [vmem:[#allocation4 + $0x68] sm:$0xff]
          %v2814 = vld [vmem:[#allocation4 + $0x70] sm:$0xff]
          %v2815 = vld [vmem:[#allocation4 + $0x78] sm:$0xff]
          %v2816 = vld [vmem:[#allocation4 + $0x80] sm:$0xff]
          %v2817 = vld [vmem:[#allocation4 + $0x88] sm:$0xff]
          %v2818 = vld [vmem:[#allocation4 + $0x90] sm:$0xff]
          %v2819 = vld [vmem:[#allocation4 + $0x98] sm:$0xff]
          %v2820 = vld [vmem:[#allocation4 + $0xa0] sm:$0xff]
          %v2821 = vld [vmem:[#allocation4 + $0xa8] sm:$0xff]
          %v2822 = vld [vmem:[#allocation4 + $0xb0] sm:$0xff]
          %v2823 = vld [vmem:[#allocation4 + $0xb8] sm:$0xff]
          %v2824 = vld [vmem:[#allocation4 + $0xc0] sm:$0xff]
          %v2825 = vld [vmem:[#allocation4 + $0xc8] sm:$0xff]
          %v2826 = vld [vmem:[#allocation4 + $0xd0] sm:$0xff]
          %v2827 = vld [vmem:[#allocation4 + $0xd8] sm:$0xff]
          %v2828 = vld [vmem:[#allocation4 + $0xe0] sm:$0xff]
          %v2829 = vld [vmem:[#allocation4 + $0xe8] sm:$0xff]
          %v2830 = vld [vmem:[#allocation4 + $0xf0] sm:$0xff]
          %v2831 = vld [vmem:[#allocation4 + $0xf8] sm:$0xff]
          %v2832 = vld [vmem:[#allocation4 + $0x100] sm:$0xff]
          %v2833 = vld [vmem:[#allocation4 + $0x108] sm:$0xff]
          %v2834 = vld [vmem:[#allocation4 + $0x110] sm:$0xff]
          %v2835 = vld [vmem:[#allocation4 + $0x118] sm:$0xff]
          %v2836 = vld [vmem:[#allocation4 + $0x120] sm:$0xff]
          %v2837 = vld [vmem:[#allocation4 + $0x128] sm:$0xff]
          %v2838 = vld [vmem:[#allocation4 + $0x130] sm:$0xff]
          %v2839 = vld [vmem:[#allocation4 + $0x138] sm:$0xff]
          %v2840 = vld [vmem:[#allocation4 + $0x140] sm:$0xff]
          %v2841 = vld [vmem:[#allocation4 + $0x148] sm:$0xff]
          %v2842 = vld [vmem:[#allocation4 + $0x150] sm:$0xff]
          %v2843 = vld [vmem:[#allocation4 + $0x158] sm:$0xff]
          %v2844 = vld [vmem:[#allocation4 + $0x160] sm:$0xff]
          %v2845 = vld [vmem:[#allocation4 + $0x168] sm:$0xff]
          %v2846 = vld [vmem:[#allocation4 + $0x170] sm:$0xff]
          %v2847 = vld [vmem:[#allocation4 + $0x178] sm:$0xff]
          %v2848 = vld [vmem:[%s4] sm:$0xff]
          %v2849 = vld [vmem:[%s4 + $0x8] sm:$0xff]
          %v2850 = vld [vmem:[%s4 + $0x10] sm:$0xff]
          %v2851 = vld [vmem:[%s4 + $0x18] sm:$0xff]
          %v2852 = vld [vmem:[%s4 + $0x20] sm:$0xff]
          %v2853 = vld [vmem:[%s4 + $0x28] sm:$0xff]
          %v2854 = vld [vmem:[%s4 + $0x30] sm:$0xff]
          %v2855 = vld [vmem:[%s4 + $0x38] sm:$0xff]
          %v2856 = vld [vmem:[%s4 + $0x40] sm:$0xff]
          %v2857 = vld [vmem:[%s4 + $0x48] sm:$0xff]
          %v2858 = vld [vmem:[%s4 + $0x50] sm:$0xff]
          %v2859 = vld [vmem:[%s4 + $0x58] sm:$0xff]
          %v2860 = vld [vmem:[%s4 + $0x60] sm:$0xff]
          %v2861 = vld [vmem:[%s4 + $0x68] sm:$0xff]
          %v2862 = vld [vmem:[%s4 + $0x70] sm:$0xff]
          %v2863 = vld [vmem:[%s4 + $0x78] sm:$0xff]
          %v2864 = vld [vmem:[#allocation2] sm:$0xff]
          %v2865 = vld [vmem:[#allocation2 + $0x8] sm:$0xff]
          %v2866 = vld [vmem:[#allocation2 + $0x10] sm:$0xff]
          %v2867 = vld [vmem:[#allocation2 + $0x18] sm:$0xff]
          %v2868 = vld [vmem:[#allocation2 + $0x20] sm:$0xff]
          %v2869 = vld [vmem:[#allocation2 + $0x28] sm:$0xff]
          %v2870 = vld [vmem:[#allocation2 + $0x30] sm:$0xff]
          %v2871 = vld [vmem:[#allocation2 + $0x38] sm:$0xff]
          %v2872 = vld [vmem:[#allocation2 + $0x40] sm:$0xff]
          %v2873 = vld [vmem:[#allocation2 + $0x48] sm:$0xff]
          %v2874 = vld [vmem:[#allocation2 + $0x50] sm:$0xff]
          %v2875 = vld [vmem:[#allocation2 + $0x58] sm:$0xff]
          %v2876 = vld [vmem:[#allocation2 + $0x60] sm:$0xff]
          %v2877 = vld [vmem:[#allocation2 + $0x68] sm:$0xff]
          %v2878 = vld [vmem:[#allocation2 + $0x70] sm:$0xff]
          %v2879 = vld [vmem:[#allocation2 + $0x78] sm:$0xff]
          %v2880 = vld [vmem:[#allocation2 + $0x80] sm:$0xff]
          %v2881 = vld [vmem:[#allocation2 + $0x88] sm:$0xff]
          %v2882 = vld [vmem:[#allocation2 + $0x90] sm:$0xff]
          %v2883 = vld [vmem:[#allocation2 + $0x98] sm:$0xff]
          %v2884 = vld [vmem:[#allocation2 + $0xa0] sm:$0xff]
          %v2885 = vld [vmem:[#allocation2 + $0xa8] sm:$0xff]
          %v2886 = vld [vmem:[#allocation2 + $0xb0] sm:$0xff]
          %v2887 = vld [vmem:[#allocation2 + $0xb8] sm:$0xff]
          %v2888 = vld [vmem:[#allocation2 + $0xc0] sm:$0xff]
          %v2889 = vld [vmem:[#allocation2 + $0xc8] sm:$0xff]
          %v2890 = vld [vmem:[#allocation2 + $0xd0] sm:$0xff]
          %v2891 = vld [vmem:[#allocation2 + $0xd8] sm:$0xff]
          %v2892 = vld [vmem:[#allocation2 + $0xe0] sm:$0xff]
          %v2893 = vld [vmem:[#allocation2 + $0xe8] sm:$0xff]
          %v2894 = vld [vmem:[#allocation2 + $0xf0] sm:$0xff]
          %v2895 = vld [vmem:[#allocation2 + $0xf8] sm:$0xff]
          %v2896 = vld [vmem:[#allocation2 + $0x100] sm:$0xff]
          %v2897 = vld [vmem:[#allocation2 + $0x108] sm:$0xff]
          %v2898 = vld [vmem:[#allocation2 + $0x110] sm:$0xff]
          %v2899 = vld [vmem:[#allocation2 + $0x118] sm:$0xff]
          %v2900 = vld [vmem:[#allocation2 + $0x120] sm:$0xff]
          %v2901 = vld [vmem:[#allocation2 + $0x128] sm:$0xff]
          %v2902 = vld [vmem:[#allocation2 + $0x130] sm:$0xff]
          %v2903 = vld [vmem:[#allocation2 + $0x138] sm:$0xff]
          %v2904 = vld [vmem:[#allocation2 + $0x140] sm:$0xff]
          %v2905 = vld [vmem:[#allocation2 + $0x148] sm:$0xff]
          %v2906 = vld [vmem:[#allocation2 + $0x150] sm:$0xff]
          %v2907 = vld [vmem:[#allocation2 + $0x158] sm:$0xff]
          %v2908 = vld [vmem:[#allocation2 + $0x160] sm:$0xff]
          %v2909 = vld [vmem:[#allocation2 + $0x168] sm:$0xff]
          %v2910 = vld [vmem:[#allocation2 + $0x170] sm:$0xff]
          %v2911 = vld [vmem:[#allocation2 + $0x178] sm:$0xff]
          %v2912 = vld [vmem:[%s5] sm:$0x1]
          %v2914 = vlaneseq
          %v2915 = vshrl.u32 %v2914, 7
          %v2916 = vsub.s32 0, %v2915
          %v2917 = vrot.slane %v2912, %v2916
          %2919 = vmatprep.subr.mxu0 0.0
          %2920 = vmatpush1.msra.mxu0 %v2848
          %2921 = vmatprep.subr.mxu0 0.0
          %2922 = vmatpush1.msra.mxu0 %v2849
          %2923 = vmatprep.subr.mxu0 0.0
          %2924 = vmatpush1.msra.mxu0 %v2850
          %2925 = vmatprep.subr.mxu0 0.0
          %2926 = vmatpush1.msra.mxu0 %v2851
          %2927 = vmatprep.subr.mxu0 0.0
          %2928 = vmatpush1.msra.mxu0 %v2852
          %2929 = vmatprep.subr.mxu0 0.0
          %2930 = vmatpush1.msra.mxu0 %v2853
          %2931 = vmatprep.subr.mxu0 0.0
          %2932 = vmatpush1.msra.mxu0 %v2854
          %2933 = vmatprep.subr.mxu0 0.0
          %2934 = vmatpush1.msra.mxu0 %v2855
          %2935 = vmatprep.subr.mxu0 0.0
          %2936 = vmatpush1.msra.mxu0 %v2856
          %2937 = vmatprep.subr.mxu0 0.0
          %2938 = vmatpush1.msra.mxu0 %v2857
          %2939 = vmatprep.subr.mxu0 0.0
          %2940 = vmatpush1.msra.mxu0 %v2858
          %2941 = vmatprep.subr.mxu0 0.0
          %2942 = vmatpush1.msra.mxu0 %v2859
          %2943 = vmatprep.subr.mxu0 0.0
          %2944 = vmatpush1.msra.mxu0 %v2860
          %2945 = vmatprep.subr.mxu0 0.0
          %2946 = vmatpush1.msra.mxu0 %v2861
          %2947 = vmatprep.subr.mxu0 0.0
          %2948 = vmatpush1.msra.mxu0 %v2862
          %2949 = vmatprep.subr.mxu0 0.0
          %2950 = vmatpush1.msra.mxu0 %v2863
          %2951 = vmatprep.subr.mxu0 0.0
          %2952 = vmatpush1.msra.mxu0 0.0
          %2953 = vmatprep.subr.mxu0 0.0
          %2954 = vmatpush1.msra.mxu0 0.0
          %2955 = vmatprep.subr.mxu0 0.0
          %2956 = vmatpush1.msra.mxu0 0.0
          %2957 = vmatprep.subr.mxu0 0.0
          %2958 = vmatpush1.msra.mxu0 0.0
          %2959 = vmatprep.subr.mxu0 0.0
          %2960 = vmatpush1.msra.mxu0 0.0
          %2961 = vmatprep.subr.mxu0 0.0
          %2962 = vmatpush1.msra.mxu0 0.0
          %2963 = vmatprep.subr.mxu0 0.0
          %2964 = vmatpush1.msra.mxu0 0.0
          %2965 = vmatprep.subr.mxu0 0.0
          %2966 = vmatpush1.msra.mxu0 0.0
          %2967 = vmatprep.subr.mxu0 0.0
          %2968 = vmatpush1.msra.mxu0 0.0
          %2969 = vmatprep.subr.mxu0 0.0
          %2970 = vmatpush1.msra.mxu0 0.0
          %2971 = vmatprep.subr.mxu0 0.0
          %2972 = vmatpush1.msra.mxu0 0.0
          %2973 = vmatprep.subr.mxu0 0.0
          %2974 = vmatpush1.msra.mxu0 0.0
          %2975 = vmatprep.subr.mxu0 0.0
          %2976 = vmatpush1.msra.mxu0 0.0
          %2977 = vmatprep.subr.mxu0 0.0
          %2978 = vmatpush1.msra.mxu0 0.0
          %2979 = vmatprep.subr.mxu0 0.0
          %2980 = vmatpush1.msra.mxu0 0.0
          %2981 = vmatprep.subr.mxu0 0.0
          %2982 = vmatpush1.msra.mxu0 0.0
          %2983 = vmatprep.mubr.f32.mxu0 0.0
          %2984 = vmatmul.mubr.f32.gmra.mrb[0].mxu0 %v2800
          %v2985 = vpop.f32.mrb[0].mxu0
          %v2986 = vadd.f32 %v2917, %v2985
          %v2987 = vpop.f32.mrb[0].mxu0
          %2988 = vmatprep.mubr.f32.mxu0 0.0
          %2989 = vmatmul.mubr.f32.gmra.mrb[0].mxu0 %v2801
          %v2990 = vpop.f32.mrb[0].mxu0
          %v2991 = vadd.f32 %v2917, %v2990
          %v2992 = vpop.f32.mrb[0].mxu0
          %2993 = vmatprep.mubr.f32.mxu0 0.0
          %2994 = vmatmul.mubr.f32.gmra.mrb[0].mxu0 %v2802
          %v2995 = vpop.f32.mrb[0].mxu0
          %v2996 = vadd.f32 %v2917, %v2995
          %v2997 = vpop.f32.mrb[0].mxu0
          %2998 = vmatprep.mubr.f32.mxu0 0.0
          %2999 = vmatmul.mubr.f32.gmra.mrb[0].mxu0 %v2803
          %v3000 = vpop.f32.mrb[0].mxu0
          %v3001 = vadd.f32 %v2917, %v3000
          %v3002 = vpop.f32.mrb[0].mxu0
          %3003 = vmatprep.mubr.f32.mxu0 0.0
          %3004 = vmatmul.mubr.f32.gmra.mrb[0].mxu0 %v2804
          %v3005 = vpop.f32.mrb[0].mxu0
          %v3006 = vadd.f32 %v2917, %v3005
          %v3007 = vpop.f32.mrb[0].mxu0
          %3008 = vmatprep.mubr.f32.mxu0 0.0
          %3009 = vmatmul.mubr.f32.gmra.mrb[0].mxu0 %v2805
          %v3010 = vpop.f32.mrb[0].mxu0
          %v3011 = vadd.f32 %v2917, %v3010
          %v3012 = vpop.f32.mrb[0].mxu0
          %3013 = vmatprep.mubr.f32.mxu0 0.0
          %3014 = vmatmul.mubr.f32.gmra.mrb[0].mxu0 %v2806
          %v3015 = vpop.f32.mrb[0].mxu0
          %v3016 = vadd.f32 %v2917, %v3015
          %v3017 = vpop.f32.mrb[0].mxu0
          %3018 = vmatprep.mubr.f32.mxu0 0.0
          %3019 = vmatmul.mubr.f32.gmra.mrb[0].mxu0 %v2807
          %v3020 = vpop.f32.mrb[0].mxu0
          %v3021 = vadd.f32 %v2917, %v3020
          %v3022 = vpop.f32.mrb[0].mxu0
          %3023 = vmatprep.mubr.f32.mxu0 0.0
          %3024 = vmatmul.mubr.f32.gmra.mrb[0].mxu0 %v2808
          %v3025 = vpop.f32.mrb[0].mxu0
          %v3026 = vadd.f32 %v2917, %v3025
          %v3027 = vpop.f32.mrb[0].mxu0
          %3028 = vmatprep.mubr.f32.mxu0 0.0
          %3029 = vmatmul.mubr.f32.gmra.mrb[0].mxu0 %v2809
          %v3030 = vpop.f32.mrb[0].mxu0
          %v3031 = vadd.f32 %v2917, %v3030
          %v3032 = vpop.f32.mrb[0].mxu0
          %3033 = vmatprep.mubr.f32.mxu0 0.0
          %3034 = vmatmul.mubr.f32.gmra.mrb[0].mxu0 %v2810
          %v3035 = vpop.f32.mrb[0].mxu0
          %v3036 = vadd.f32 %v2917, %v3035
          %v3037 = vpop.f32.mrb[0].mxu0
          %3038 = vmatprep.mubr.f32.mxu0 0.0
          %3039 = vmatmul.mubr.f32.gmra.mrb[0].mxu0 %v2811
          %v3040 = vpop.f32.mrb[0].mxu0
          %v3041 = vadd.f32 %v2917, %v3040
          %v3042 = vpop.f32.mrb[0].mxu0
          %3043 = vmatprep.mubr.f32.mxu0 0.0
          %3044 = vmatmul.mubr.f32.gmra.mrb[0].mxu0 %v2812
          %v3045 = vpop.f32.mrb[0].mxu0
          %v3046 = vadd.f32 %v2917, %v3045
          %v3047 = vpop.f32.mrb[0].mxu0
          %3048 = vmatprep.mubr.f32.mxu0 0.0
          %3049 = vmatmul.mubr.f32.gmra.mrb[0].mxu0 %v2813
          %v3050 = vpop.f32.mrb[0].mxu0
          %v3051 = vadd.f32 %v2917, %v3050
          %v3052 = vpop.f32.mrb[0].mxu0
          %3053 = vmatprep.mubr.f32.mxu0 0.0
          %3054 = vmatmul.mubr.f32.gmra.mrb[0].mxu0 %v2814
          %v3055 = vpop.f32.mrb[0].mxu0
          %v3056 = vadd.f32 %v2917, %v3055
          %v3057 = vpop.f32.mrb[0].mxu0
          %3058 = vmatprep.mubr.f32.mxu0 0.0
          %3059 = vmatmul.mubr.f32.gmra.mrb[0].mxu0 %v2815
          %v3060 = vpop.f32.mrb[0].mxu0
          %v3061 = vadd.f32 %v2917, %v3060
          %v3062 = vpop.f32.mrb[0].mxu0
          %3063 = vmatprep.mubr.f32.mxu0 0.0
          %3064 = vmatmul.mubr.f32.gmra.mrb[0].mxu0 %v2816
          %v3065 = vpop.f32.mrb[0].mxu0
          %v3066 = vadd.f32 %v2917, %v3065
          %v3067 = vpop.f32.mrb[0].mxu0
          %3068 = vmatprep.mubr.f32.mxu0 0.0
          %3069 = vmatmul.mubr.f32.gmra.mrb[0].mxu0 %v2817
          %v3070 = vpop.f32.mrb[0].mxu0
          %v3071 = vadd.f32 %v2917, %v3070
          %v3072 = vpop.f32.mrb[0].mxu0
          %3073 = vmatprep.mubr.f32.mxu0 0.0
          %3074 = vmatmul.mubr.f32.gmra.mrb[0].mxu0 %v2818
          %v3075 = vpop.f32.mrb[0].mxu0
          %v3076 = vadd.f32 %v2917, %v3075
          %v3077 = vpop.f32.mrb[0].mxu0
          %3078 = vmatprep.mubr.f32.mxu0 0.0
          %3079 = vmatmul.mubr.f32.gmra.mrb[0].mxu0 %v2819
          %v3080 = vpop.f32.mrb[0].mxu0
          %v3081 = vadd.f32 %v2917, %v3080
          %v3082 = vpop.f32.mrb[0].mxu0
          %3083 = vmatprep.mubr.f32.mxu0 0.0
          %3084 = vmatmul.mubr.f32.gmra.mrb[0].mxu0 %v2820
          %v3085 = vpop.f32.mrb[0].mxu0
          %v3086 = vadd.f32 %v2917, %v3085
          %v3087 = vpop.f32.mrb[0].mxu0
          %3088 = vmatprep.mubr.f32.mxu0 0.0
          %3089 = vmatmul.mubr.f32.gmra.mrb[0].mxu0 %v2821
          %v3090 = vpop.f32.mrb[0].mxu0
          %v3091 = vadd.f32 %v2917, %v3090
          %v3092 = vpop.f32.mrb[0].mxu0
          %3093 = vmatprep.mubr.f32.mxu0 0.0
          %3094 = vmatmul.mubr.f32.gmra.mrb[0].mxu0 %v2822
          %v3095 = vpop.f32.mrb[0].mxu0
          %v3096 = vadd.f32 %v2917, %v3095
          %v3097 = vpop.f32.mrb[0].mxu0
          %3098 = vmatprep.mubr.f32.mxu0 0.0
          %3099 = vmatmul.mubr.f32.gmra.mrb[0].mxu0 %v2823
          %v3100 = vpop.f32.mrb[0].mxu0
          %v3101 = vadd.f32 %v2917, %v3100
          %v3102 = vpop.f32.mrb[0].mxu0
          %3103 = vmatprep.mubr.f32.mxu0 0.0
          %3104 = vmatmul.mubr.f32.gmra.mrb[0].mxu0 %v2824
          %v3105 = vpop.f32.mrb[0].mxu0
          %v3106 = vadd.f32 %v2917, %v3105
          %v3107 = vpop.f32.mrb[0].mxu0
          %3108 = vmatprep.mubr.f32.mxu0 0.0
          %3109 = vmatmul.mubr.f32.gmra.mrb[0].mxu0 %v2825
          %v3110 = vpop.f32.mrb[0].mxu0
          %v3111 = vadd.f32 %v2917, %v3110
          %v3112 = vpop.f32.mrb[0].mxu0
          %3113 = vmatprep.mubr.f32.mxu0 0.0
          %3114 = vmatmul.mubr.f32.gmra.mrb[0].mxu0 %v2826
          %v3115 = vpop.f32.mrb[0].mxu0
          %v3116 = vadd.f32 %v2917, %v3115
          %v3117 = vpop.f32.mrb[0].mxu0
          %3118 = vmatprep.mubr.f32.mxu0 0.0
          %3119 = vmatmul.mubr.f32.gmra.mrb[0].mxu0 %v2827
          %v3120 = vpop.f32.mrb[0].mxu0
          %v3121 = vadd.f32 %v2917, %v3120
          %v3122 = vpop.f32.mrb[0].mxu0
          %3123 = vmatprep.mubr.f32.mxu0 0.0
          %3124 = vmatmul.mubr.f32.gmra.mrb[0].mxu0 %v2828
          %v3125 = vpop.f32.mrb[0].mxu0
          %v3126 = vadd.f32 %v2917, %v3125
          %v3127 = vpop.f32.mrb[0].mxu0
          %3128 = vmatprep.mubr.f32.mxu0 0.0
          %3129 = vmatmul.mubr.f32.gmra.mrb[0].mxu0 %v2829
          %v3130 = vpop.f32.mrb[0].mxu0
          %v3131 = vadd.f32 %v2917, %v3130
          %v3132 = vpop.f32.mrb[0].mxu0
          %3133 = vmatprep.mubr.f32.mxu0 0.0
          %3134 = vmatmul.mubr.f32.gmra.mrb[0].mxu0 %v2830
          %v3135 = vpop.f32.mrb[0].mxu0
          %v3136 = vadd.f32 %v2917, %v3135
          %v3137 = vpop.f32.mrb[0].mxu0
          %3138 = vmatprep.mubr.f32.mxu0 0.0
          %3139 = vmatmul.mubr.f32.gmra.mrb[0].mxu0 %v2831
          %v3140 = vpop.f32.mrb[0].mxu0
          %v3141 = vadd.f32 %v2917, %v3140
          %v3142 = vpop.f32.mrb[0].mxu0
          %3143 = vmatprep.mubr.f32.mxu0 0.0
          %3144 = vmatmul.mubr.f32.gmra.mrb[0].mxu0 %v2832
          %v3145 = vpop.f32.mrb[0].mxu0
          %v3146 = vadd.f32 %v2917, %v3145
          %v3147 = vpop.f32.mrb[0].mxu0
          %3148 = vmatprep.mubr.f32.mxu0 0.0
          %3149 = vmatmul.mubr.f32.gmra.mrb[0].mxu0 %v2833
          %v3150 = vpop.f32.mrb[0].mxu0
          %v3151 = vadd.f32 %v2917, %v3150
          %v3152 = vpop.f32.mrb[0].mxu0
          %3153 = vmatprep.mubr.f32.mxu0 0.0
          %3154 = vmatmul.mubr.f32.gmra.mrb[0].mxu0 %v2834
          %v3155 = vpop.f32.mrb[0].mxu0
          %v3156 = vadd.f32 %v2917, %v3155
          %v3157 = vpop.f32.mrb[0].mxu0
          %3158 = vmatprep.mubr.f32.mxu0 0.0
          %3159 = vmatmul.mubr.f32.gmra.mrb[0].mxu0 %v2835
          %v3160 = vpop.f32.mrb[0].mxu0
          %v3161 = vadd.f32 %v2917, %v3160
          %v3162 = vpop.f32.mrb[0].mxu0
          %3163 = vmatprep.mubr.f32.mxu0 0.0
          %3164 = vmatmul.mubr.f32.gmra.mrb[0].mxu0 %v2836
          %v3165 = vpop.f32.mrb[0].mxu0
          %v3166 = vadd.f32 %v2917, %v3165
          %v3167 = vpop.f32.mrb[0].mxu0
          %3168 = vmatprep.mubr.f32.mxu0 0.0
          %3169 = vmatmul.mubr.f32.gmra.mrb[0].mxu0 %v2837
          %v3170 = vpop.f32.mrb[0].mxu0
          %v3171 = vadd.f32 %v2917, %v3170
          %v3172 = vpop.f32.mrb[0].mxu0
          %3173 = vmatprep.mubr.f32.mxu0 0.0
          %3174 = vmatmul.mubr.f32.gmra.mrb[0].mxu0 %v2838
          %v3175 = vpop.f32.mrb[0].mxu0
          %v3176 = vadd.f32 %v2917, %v3175
          %v3177 = vpop.f32.mrb[0].mxu0
          %3178 = vmatprep.mubr.f32.mxu0 0.0
          %3179 = vmatmul.mubr.f32.gmra.mrb[0].mxu0 %v2839
          %v3180 = vpop.f32.mrb[0].mxu0
          %v3181 = vadd.f32 %v2917, %v3180
          %v3182 = vpop.f32.mrb[0].mxu0
          %3183 = vmatprep.mubr.f32.mxu0 0.0
          %3184 = vmatmul.mubr.f32.gmra.mrb[0].mxu0 %v2840
          %v3185 = vpop.f32.mrb[0].mxu0
          %v3186 = vadd.f32 %v2917, %v3185
          %v3187 = vpop.f32.mrb[0].mxu0
          %3188 = vmatprep.mubr.f32.mxu0 0.0
          %3189 = vmatmul.mubr.f32.gmra.mrb[0].mxu0 %v2841
          %v3190 = vpop.f32.mrb[0].mxu0
          %v3191 = vadd.f32 %v2917, %v3190
          %v3192 = vpop.f32.mrb[0].mxu0
          %3193 = vmatprep.mubr.f32.mxu0 0.0
          %3194 = vmatmul.mubr.f32.gmra.mrb[0].mxu0 %v2842
          %v3195 = vpop.f32.mrb[0].mxu0
          %v3196 = vadd.f32 %v2917, %v3195
          %v3197 = vpop.f32.mrb[0].mxu0
          %3198 = vmatprep.mubr.f32.mxu0 0.0
          %3199 = vmatmul.mubr.f32.gmra.mrb[0].mxu0 %v2843
          %v3200 = vpop.f32.mrb[0].mxu0
          %v3201 = vadd.f32 %v2917, %v3200
          %v3202 = vpop.f32.mrb[0].mxu0
          %3203 = vmatprep.mubr.f32.mxu0 0.0
          %3204 = vmatmul.mubr.f32.gmra.mrb[0].mxu0 %v2844
          %v3205 = vpop.f32.mrb[0].mxu0
          %v3206 = vadd.f32 %v2917, %v3205
          %v3207 = vpop.f32.mrb[0].mxu0
          %3208 = vmatprep.mubr.f32.mxu0 0.0
          %3209 = vmatmul.mubr.f32.gmra.mrb[0].mxu0 %v2845
          %v3210 = vpop.f32.mrb[0].mxu0
          %v3211 = vadd.f32 %v2917, %v3210
          %v3212 = vpop.f32.mrb[0].mxu0
          %3213 = vmatprep.mubr.f32.mxu0 0.0
          %3214 = vmatmul.mubr.f32.gmra.mrb[0].mxu0 %v2846
          %v3215 = vpop.f32.mrb[0].mxu0
          %v3216 = vadd.f32 %v2917, %v3215
          %v3217 = vpop.f32.mrb[0].mxu0
          %3218 = vmatprep.mubr.f32.mxu0 0.0
          %3219 = vmatmul.mubr.f32.gmra.mrb[0].mxu0 %v2847
          %v3220 = vpop.f32.mrb[0].mxu0
          %v3221 = vadd.f32 %v2917, %v3220
          %v3222 = vpop.f32.mrb[0].mxu0
          %3223 = vdwg.mxu0
          %3225 = vset.pattern.permute.xlu0 0
          %3226 = vperm.xlu0 %3225, %v2864
          %v3227 = vpop.permute.xlu0 %3226
          %3230 = vset.pattern.permute.xlu0 0
          %3231 = vperm.xlu0 %3230, %v2865
          %v3232 = vpop.permute.xlu0 %3231
          %3235 = vset.pattern.permute.xlu0 0
          %3236 = vperm.xlu0 %3235, %v2866
          %v3237 = vpop.permute.xlu0 %3236
          %3240 = vset.pattern.permute.xlu0 0
          %3241 = vperm.xlu0 %3240, %v2867
          %v3242 = vpop.permute.xlu0 %3241
          %3245 = vset.pattern.permute.xlu0 0
          %3246 = vperm.xlu0 %3245, %v2868
          %v3247 = vpop.permute.xlu0 %3246
          %3250 = vset.pattern.permute.xlu0 0
          %3251 = vperm.xlu0 %3250, %v2869
          %v3252 = vpop.permute.xlu0 %3251
          %3255 = vset.pattern.permute.xlu0 0
          %3256 = vperm.xlu0 %3255, %v2870
          %v3257 = vpop.permute.xlu0 %3256
          %3260 = vset.pattern.permute.xlu0 0
          %3261 = vperm.xlu0 %3260, %v2871
          %v3262 = vpop.permute.xlu0 %3261
          %3265 = vset.pattern.permute.xlu0 0
          %3266 = vperm.xlu0 %3265, %v2872
          %v3267 = vpop.permute.xlu0 %3266
          %3270 = vset.pattern.permute.xlu0 0
          %3271 = vperm.xlu0 %3270, %v2873
          %v3272 = vpop.permute.xlu0 %3271
          %3275 = vset.pattern.permute.xlu0 0
          %3276 = vperm.xlu0 %3275, %v2874
          %v3277 = vpop.permute.xlu0 %3276
          %3280 = vset.pattern.permute.xlu0 0
          %3281 = vperm.xlu0 %3280, %v2875
          %v3282 = vpop.permute.xlu0 %3281
          %3285 = vset.pattern.permute.xlu0 0
          %3286 = vperm.xlu0 %3285, %v2876
          %v3287 = vpop.permute.xlu0 %3286
          %3290 = vset.pattern.permute.xlu0 0
          %3291 = vperm.xlu0 %3290, %v2877
          %v3292 = vpop.permute.xlu0 %3291
          %3295 = vset.pattern.permute.xlu0 0
          %3296 = vperm.xlu0 %3295, %v2878
          %v3297 = vpop.permute.xlu0 %3296
          %3300 = vset.pattern.permute.xlu0 0
          %3301 = vperm.xlu0 %3300, %v2879
          %v3302 = vpop.permute.xlu0 %3301
          %3305 = vset.pattern.permute.xlu0 0
          %3306 = vperm.xlu0 %3305, %v2880
          %v3307 = vpop.permute.xlu0 %3306
          %3310 = vset.pattern.permute.xlu0 0
          %3311 = vperm.xlu0 %3310, %v2881
          %v3312 = vpop.permute.xlu0 %3311
          %3315 = vset.pattern.permute.xlu0 0
          %3316 = vperm.xlu0 %3315, %v2882
          %v3317 = vpop.permute.xlu0 %3316
          %3320 = vset.pattern.permute.xlu0 0
          %3321 = vperm.xlu0 %3320, %v2883
          %v3322 = vpop.permute.xlu0 %3321
          %3325 = vset.pattern.permute.xlu0 0
          %3326 = vperm.xlu0 %3325, %v2884
          %v3327 = vpop.permute.xlu0 %3326
          %3330 = vset.pattern.permute.xlu0 0
          %3331 = vperm.xlu0 %3330, %v2885
          %v3332 = vpop.permute.xlu0 %3331
          %3335 = vset.pattern.permute.xlu0 0
          %3336 = vperm.xlu0 %3335, %v2886
          %v3337 = vpop.permute.xlu0 %3336
          %3340 = vset.pattern.permute.xlu0 0
          %3341 = vperm.xlu0 %3340, %v2887
          %v3342 = vpop.permute.xlu0 %3341
          %3345 = vset.pattern.permute.xlu0 0
          %3346 = vperm.xlu0 %3345, %v2888
          %v3347 = vpop.permute.xlu0 %3346
          %3350 = vset.pattern.permute.xlu0 0
          %3351 = vperm.xlu0 %3350, %v2889
          %v3352 = vpop.permute.xlu0 %3351
          %3355 = vset.pattern.permute.xlu0 0
          %3356 = vperm.xlu0 %3355, %v2890
          %v3357 = vpop.permute.xlu0 %3356
          %3360 = vset.pattern.permute.xlu0 0
          %3361 = vperm.xlu0 %3360, %v2891
          %v3362 = vpop.permute.xlu0 %3361
          %3365 = vset.pattern.permute.xlu0 0
          %3366 = vperm.xlu0 %3365, %v2892
          %v3367 = vpop.permute.xlu0 %3366
          %3370 = vset.pattern.permute.xlu0 0
          %3371 = vperm.xlu0 %3370, %v2893
          %v3372 = vpop.permute.xlu0 %3371
          %3375 = vset.pattern.permute.xlu0 0
          %3376 = vperm.xlu0 %3375, %v2894
          %v3377 = vpop.permute.xlu0 %3376
          %3380 = vset.pattern.permute.xlu0 0
          %3381 = vperm.xlu0 %3380, %v2895
          %v3382 = vpop.permute.xlu0 %3381
          %3385 = vset.pattern.permute.xlu0 0
          %3386 = vperm.xlu0 %3385, %v2896
          %v3387 = vpop.permute.xlu0 %3386
          %3390 = vset.pattern.permute.xlu0 0
          %3391 = vperm.xlu0 %3390, %v2897
          %v3392 = vpop.permute.xlu0 %3391
          %3395 = vset.pattern.permute.xlu0 0
          %3396 = vperm.xlu0 %3395, %v2898
          %v3397 = vpop.permute.xlu0 %3396
          %3400 = vset.pattern.permute.xlu0 0
          %3401 = vperm.xlu0 %3400, %v2899
          %v3402 = vpop.permute.xlu0 %3401
          %3405 = vset.pattern.permute.xlu0 0
          %3406 = vperm.xlu0 %3405, %v2900
          %v3407 = vpop.permute.xlu0 %3406
          %3410 = vset.pattern.permute.xlu0 0
          %3411 = vperm.xlu0 %3410, %v2901
          %v3412 = vpop.permute.xlu0 %3411
          %3415 = vset.pattern.permute.xlu0 0
          %3416 = vperm.xlu0 %3415, %v2902
          %v3417 = vpop.permute.xlu0 %3416
          %3420 = vset.pattern.permute.xlu0 0
          %3421 = vperm.xlu0 %3420, %v2903
          %v3422 = vpop.permute.xlu0 %3421
          %3425 = vset.pattern.permute.xlu0 0
          %3426 = vperm.xlu0 %3425, %v2904
          %v3427 = vpop.permute.xlu0 %3426
          %3430 = vset.pattern.permute.xlu0 0
          %3431 = vperm.xlu0 %3430, %v2905
          %v3432 = vpop.permute.xlu0 %3431
          %3435 = vset.pattern.permute.xlu0 0
          %3436 = vperm.xlu0 %3435, %v2906
          %v3437 = vpop.permute.xlu0 %3436
          %3440 = vset.pattern.permute.xlu0 0
          %3441 = vperm.xlu0 %3440, %v2907
          %v3442 = vpop.permute.xlu0 %3441
          %3445 = vset.pattern.permute.xlu0 0
          %3446 = vperm.xlu0 %3445, %v2908
          %v3447 = vpop.permute.xlu0 %3446
          %3450 = vset.pattern.permute.xlu0 0
          %3451 = vperm.xlu0 %3450, %v2909
          %v3452 = vpop.permute.xlu0 %3451
          %3455 = vset.pattern.permute.xlu0 0
          %3456 = vperm.xlu0 %3455, %v2910
          %v3457 = vpop.permute.xlu0 %3456
          %3460 = vset.pattern.permute.xlu0 0
          %3461 = vperm.xlu0 %3460, %v2911
          %v3462 = vpop.permute.xlu0 %3461
          %v3464 = vmul.f32 %v3227, %v2986
          %v3465 = vmul.f32 %v3232, %v2991
          %v3466 = vmul.f32 %v3237, %v2996
          %v3467 = vmul.f32 %v3242, %v3001
          %v3468 = vmul.f32 %v3247, %v3006
          %v3469 = vmul.f32 %v3252, %v3011
          %v3470 = vmul.f32 %v3257, %v3016
          %v3471 = vmul.f32 %v3262, %v3021
          %v3472 = vmul.f32 %v3267, %v3026
          %v3473 = vmul.f32 %v3272, %v3031
          %v3474 = vmul.f32 %v3277, %v3036
          %v3475 = vmul.f32 %v3282, %v3041
          %v3476 = vmul.f32 %v3287, %v3046
          %v3477 = vmul.f32 %v3292, %v3051
          %v3478 = vmul.f32 %v3297, %v3056
          %v3479 = vmul.f32 %v3302, %v3061
          %v3480 = vmul.f32 %v3307, %v3066
          %v3481 = vmul.f32 %v3312, %v3071
          %v3482 = vmul.f32 %v3317, %v3076
          %v3483 = vmul.f32 %v3322, %v3081
          %v3484 = vmul.f32 %v3327, %v3086
          %v3485 = vmul.f32 %v3332, %v3091
          %v3486 = vmul.f32 %v3337, %v3096
          %v3487 = vmul.f32 %v3342, %v3101
          %v3488 = vmul.f32 %v3347, %v3106
          %v3489 = vmul.f32 %v3352, %v3111
          %v3490 = vmul.f32 %v3357, %v3116
          %v3491 = vmul.f32 %v3362, %v3121
          %v3492 = vmul.f32 %v3367, %v3126
          %v3493 = vmul.f32 %v3372, %v3131
          %v3494 = vmul.f32 %v3377, %v3136
          %v3495 = vmul.f32 %v3382, %v3141
          %v3496 = vmul.f32 %v3387, %v3146
          %v3497 = vmul.f32 %v3392, %v3151
          %v3498 = vmul.f32 %v3397, %v3156
          %v3499 = vmul.f32 %v3402, %v3161
          %v3500 = vmul.f32 %v3407, %v3166
          %v3501 = vmul.f32 %v3412, %v3171
          %v3502 = vmul.f32 %v3417, %v3176
          %v3503 = vmul.f32 %v3422, %v3181
          %v3504 = vmul.f32 %v3427, %v3186
          %v3505 = vmul.f32 %v3432, %v3191
          %v3506 = vmul.f32 %v3437, %v3196
          %v3507 = vmul.f32 %v3442, %v3201
          %v3508 = vmul.f32 %v3447, %v3206
          %v3509 = vmul.f32 %v3452, %v3211
          %v3510 = vmul.f32 %v3457, %v3216
          %v3511 = vmul.f32 %v3462, %v3221
          %3512 = vst [vmem:[#allocation5] sm:$0xff] %v3464
          %3513 = vst [vmem:[#allocation5 + $0x8] sm:$0xff] %v3465
          %3514 = vst [vmem:[#allocation5 + $0x10] sm:$0xff] %v3466
          %3515 = vst [vmem:[#allocation5 + $0x18] sm:$0xff] %v3467
          %3516 = vst [vmem:[#allocation5 + $0x20] sm:$0xff] %v3468
          %3517 = vst [vmem:[#allocation5 + $0x28] sm:$0xff] %v3469
          %3518 = vst [vmem:[#allocation5 + $0x30] sm:$0xff] %v3470
          %3519 = vst [vmem:[#allocation5 + $0x38] sm:$0xff] %v3471
          %3520 = vst [vmem:[#allocation5 + $0x40] sm:$0xff] %v3472
          %3521 = vst [vmem:[#allocation5 + $0x48] sm:$0xff] %v3473
          %3522 = vst [vmem:[#allocation5 + $0x50] sm:$0xff] %v3474
          %3523 = vst [vmem:[#allocation5 + $0x58] sm:$0xff] %v3475
          %3524 = vst [vmem:[#allocation5 + $0x60] sm:$0xff] %v3476
          %3525 = vst [vmem:[#allocation5 + $0x68] sm:$0xff] %v3477
          %3526 = vst [vmem:[#allocation5 + $0x70] sm:$0xff] %v3478
          %3527 = vst [vmem:[#allocation5 + $0x78] sm:$0xff] %v3479
          %3528 = vst [vmem:[#allocation5 + $0x80] sm:$0xff] %v3480
          %3529 = vst [vmem:[#allocation5 + $0x88] sm:$0xff] %v3481
          %3530 = vst [vmem:[#allocation5 + $0x90] sm:$0xff] %v3482
          %3531 = vst [vmem:[#allocation5 + $0x98] sm:$0xff] %v3483
          %3532 = vst [vmem:[#allocation5 + $0xa0] sm:$0xff] %v3484
          %3533 = vst [vmem:[#allocation5 + $0xa8] sm:$0xff] %v3485
          %3534 = vst [vmem:[#allocation5 + $0xb0] sm:$0xff] %v3486
          %3535 = vst [vmem:[#allocation5 + $0xb8] sm:$0xff] %v3487
          %3536 = vst [vmem:[#allocation5 + $0xc0] sm:$0xff] %v3488
          %3537 = vst [vmem:[#allocation5 + $0xc8] sm:$0xff] %v3489
          %3538 = vst [vmem:[#allocation5 + $0xd0] sm:$0xff] %v3490
          %3539 = vst [vmem:[#allocation5 + $0xd8] sm:$0xff] %v3491
          %3540 = vst [vmem:[#allocation5 + $0xe0] sm:$0xff] %v3492
          %3541 = vst [vmem:[#allocation5 + $0xe8] sm:$0xff] %v3493
          %3542 = vst [vmem:[#allocation5 + $0xf0] sm:$0xff] %v3494
          %3543 = vst [vmem:[#allocation5 + $0xf8] sm:$0xff] %v3495
          %3544 = vst [vmem:[#allocation5 + $0x100] sm:$0xff] %v3496
          %3545 = vst [vmem:[#allocation5 + $0x108] sm:$0xff] %v3497
          %3546 = vst [vmem:[#allocation5 + $0x110] sm:$0xff] %v3498
          %3547 = vst [vmem:[#allocation5 + $0x118] sm:$0xff] %v3499
          %3548 = vst [vmem:[#allocation5 + $0x120] sm:$0xff] %v3500
          %3549 = vst [vmem:[#allocation5 + $0x128] sm:$0xff] %v3501
          %3550 = vst [vmem:[#allocation5 + $0x130] sm:$0xff] %v3502
          %3551 = vst [vmem:[#allocation5 + $0x138] sm:$0xff] %v3503
          %3552 = vst [vmem:[#allocation5 + $0x140] sm:$0xff] %v3504
          %3553 = vst [vmem:[#allocation5 + $0x148] sm:$0xff] %v3505
          %3554 = vst [vmem:[#allocation5 + $0x150] sm:$0xff] %v3506
          %3555 = vst [vmem:[#allocation5 + $0x158] sm:$0xff] %v3507
          %3556 = vst [vmem:[#allocation5 + $0x160] sm:$0xff] %v3508
          %3557 = vst [vmem:[#allocation5 + $0x168] sm:$0xff] %v3509
          %3558 = vst [vmem:[#allocation5 + $0x170] sm:$0xff] %v3510
          %3559 = vst [vmem:[#allocation5 + $0x178] sm:$0xff] %v3511
        $region64: #{tpu_custom_call.1} parent=43 // pred_fallthru
          _
        // Predicated region
        $region65: #{tpu_custom_call.1} parent=43 // pred_check
          %p3560 = pneg %p2795
        $region66: #{tpu_custom_call.1} parent=43 // pred_check_branch
          %3562 = sbr.rel (%p3560) target = $region68
        $region67: #{tpu_custom_call.1} parent=43 // pred_region
          %v3563 = vld [vmem:[#allocation5] sm:$0xff]
          %v3564 = vld [vmem:[#allocation5 + $0x8] sm:$0xff]
          %v3565 = vld [vmem:[#allocation5 + $0x10] sm:$0xff]
          %v3566 = vld [vmem:[#allocation5 + $0x18] sm:$0xff]
          %v3567 = vld [vmem:[#allocation5 + $0x20] sm:$0xff]
          %v3568 = vld [vmem:[#allocation5 + $0x28] sm:$0xff]
          %v3569 = vld [vmem:[#allocation5 + $0x30] sm:$0xff]
          %v3570 = vld [vmem:[#allocation5 + $0x38] sm:$0xff]
          %v3571 = vld [vmem:[#allocation5 + $0x40] sm:$0xff]
          %v3572 = vld [vmem:[#allocation5 + $0x48] sm:$0xff]
          %v3573 = vld [vmem:[#allocation5 + $0x50] sm:$0xff]
          %v3574 = vld [vmem:[#allocation5 + $0x58] sm:$0xff]
          %v3575 = vld [vmem:[#allocation5 + $0x60] sm:$0xff]
          %v3576 = vld [vmem:[#allocation5 + $0x68] sm:$0xff]
          %v3577 = vld [vmem:[#allocation5 + $0x70] sm:$0xff]
          %v3578 = vld [vmem:[#allocation5 + $0x78] sm:$0xff]
          %v3579 = vld [vmem:[#allocation5 + $0x80] sm:$0xff]
          %v3580 = vld [vmem:[#allocation5 + $0x88] sm:$0xff]
          %v3581 = vld [vmem:[#allocation5 + $0x90] sm:$0xff]
          %v3582 = vld [vmem:[#allocation5 + $0x98] sm:$0xff]
          %v3583 = vld [vmem:[#allocation5 + $0xa0] sm:$0xff]
          %v3584 = vld [vmem:[#allocation5 + $0xa8] sm:$0xff]
          %v3585 = vld [vmem:[#allocation5 + $0xb0] sm:$0xff]
          %v3586 = vld [vmem:[#allocation5 + $0xb8] sm:$0xff]
          %v3587 = vld [vmem:[#allocation5 + $0xc0] sm:$0xff]
          %v3588 = vld [vmem:[#allocation5 + $0xc8] sm:$0xff]
          %v3589 = vld [vmem:[#allocation5 + $0xd0] sm:$0xff]
          %v3590 = vld [vmem:[#allocation5 + $0xd8] sm:$0xff]
          %v3591 = vld [vmem:[#allocation5 + $0xe0] sm:$0xff]
          %v3592 = vld [vmem:[#allocation5 + $0xe8] sm:$0xff]
          %v3593 = vld [vmem:[#allocation5 + $0xf0] sm:$0xff]
          %v3594 = vld [vmem:[#allocation5 + $0xf8] sm:$0xff]
          %v3595 = vld [vmem:[#allocation5 + $0x100] sm:$0xff]
          %v3596 = vld [vmem:[#allocation5 + $0x108] sm:$0xff]
          %v3597 = vld [vmem:[#allocation5 + $0x110] sm:$0xff]
          %v3598 = vld [vmem:[#allocation5 + $0x118] sm:$0xff]
          %v3599 = vld [vmem:[#allocation5 + $0x120] sm:$0xff]
          %v3600 = vld [vmem:[#allocation5 + $0x128] sm:$0xff]
          %v3601 = vld [vmem:[#allocation5 + $0x130] sm:$0xff]
          %v3602 = vld [vmem:[#allocation5 + $0x138] sm:$0xff]
          %v3603 = vld [vmem:[#allocation5 + $0x140] sm:$0xff]
          %v3604 = vld [vmem:[#allocation5 + $0x148] sm:$0xff]
          %v3605 = vld [vmem:[#allocation5 + $0x150] sm:$0xff]
          %v3606 = vld [vmem:[#allocation5 + $0x158] sm:$0xff]
          %v3607 = vld [vmem:[#allocation5 + $0x160] sm:$0xff]
          %v3608 = vld [vmem:[#allocation5 + $0x168] sm:$0xff]
          %v3609 = vld [vmem:[#allocation5 + $0x170] sm:$0xff]
          %v3610 = vld [vmem:[#allocation5 + $0x178] sm:$0xff]
          %v3611 = vpack.c.bf16 %v3564, %v3563
          %v3612 = vpack.c.bf16 %v3566, %v3565
          %v3613 = vpack.c.bf16 %v3568, %v3567
          %v3614 = vpack.c.bf16 %v3570, %v3569
          %v3615 = vpack.c.bf16 %v3572, %v3571
          %v3616 = vpack.c.bf16 %v3574, %v3573
          %v3617 = vpack.c.bf16 %v3576, %v3575
          %v3618 = vpack.c.bf16 %v3578, %v3577
          %v3619 = vpack.c.bf16 %v3580, %v3579
          %v3620 = vpack.c.bf16 %v3582, %v3581
          %v3621 = vpack.c.bf16 %v3584, %v3583
          %v3622 = vpack.c.bf16 %v3586, %v3585
          %v3623 = vpack.c.bf16 %v3588, %v3587
          %v3624 = vpack.c.bf16 %v3590, %v3589
          %v3625 = vpack.c.bf16 %v3592, %v3591
          %v3626 = vpack.c.bf16 %v3594, %v3593
          %v3627 = vpack.c.bf16 %v3596, %v3595
          %v3628 = vpack.c.bf16 %v3598, %v3597
          %v3629 = vpack.c.bf16 %v3600, %v3599
          %v3630 = vpack.c.bf16 %v3602, %v3601
          %v3631 = vpack.c.bf16 %v3604, %v3603
          %v3632 = vpack.c.bf16 %v3606, %v3605
          %v3633 = vpack.c.bf16 %v3608, %v3607
          %v3634 = vpack.c.bf16 %v3610, %v3609
          %v3635 = vld [vmem:[%s254] sm:$0xff]
          %v3636 = vld [vmem:[%s254 + $0x8] sm:$0xf]
          %v3637 = vld [vmem:[%s254 + $0xc] sm:$0xff]
          %v3638 = vld [vmem:[%s254 + $0x14] sm:$0xf]
          %v3639 = vld [vmem:[%s254 + $0x18] sm:$0xff]
          %v3640 = vld [vmem:[%s254 + $0x20] sm:$0xf]
          %v3641 = vld [vmem:[%s254 + $0x24] sm:$0xff]
          %v3642 = vld [vmem:[%s254 + $0x2c] sm:$0xf]
          %v3643 = vld [vmem:[%s254 + $0x30] sm:$0xff]
          %v3644 = vld [vmem:[%s254 + $0x38] sm:$0xf]
          %v3645 = vld [vmem:[%s254 + $0x3c] sm:$0xff]
          %v3646 = vld [vmem:[%s254 + $0x44] sm:$0xf]
          %v3647 = vld [vmem:[%s254 + $0x48] sm:$0xff]
          %v3648 = vld [vmem:[%s254 + $0x50] sm:$0xf]
          %v3649 = vld [vmem:[%s254 + $0x54] sm:$0xff]
          %v3650 = vld [vmem:[%s254 + $0x5c] sm:$0xf]
          %v3651 = vld [vmem:[%s254 + $0x60] sm:$0xff]
          %v3652 = vld [vmem:[%s254 + $0x68] sm:$0xf]
          %v3653 = vld [vmem:[%s254 + $0x6c] sm:$0xff]
          %v3654 = vld [vmem:[%s254 + $0x74] sm:$0xf]
          %v3655 = vld [vmem:[%s254 + $0x78] sm:$0xff]
          %v3656 = vld [vmem:[%s254 + $0x80] sm:$0xf]
          %v3657 = vld [vmem:[%s254 + $0x84] sm:$0xff]
          %v3658 = vld [vmem:[%s254 + $0x8c] sm:$0xf]
          %v3659 = vld [vmem:[%s254 + $0x90] sm:$0xff]
          %v3660 = vld [vmem:[%s254 + $0x98] sm:$0xf]
          %v3661 = vld [vmem:[%s254 + $0x9c] sm:$0xff]
          %v3662 = vld [vmem:[%s254 + $0xa4] sm:$0xf]
          %v3663 = vld [vmem:[%s254 + $0xa8] sm:$0xff]
          %v3664 = vld [vmem:[%s254 + $0xb0] sm:$0xf]
          %v3665 = vld [vmem:[%s254 + $0xb4] sm:$0xff]
          %v3666 = vld [vmem:[%s254 + $0xbc] sm:$0xf]
          %s3667 = scalar_lea.vmem [#allocation2], %s286
          %v3668 = vld [vmem:[%s3667] sm:$0xff]
          %v3669 = vld [vmem:[%s3667 + $0x8] sm:$0xff]
          %v3670 = vld [vmem:[%s3667 + $0x10] sm:$0xff]
          %v3671 = vld [vmem:[%s3667 + $0x18] sm:$0xff]
          %v3672 = vld [vmem:[%s3667 + $0x20] sm:$0xff]
          %v3673 = vld [vmem:[%s3667 + $0x28] sm:$0xff]
          %v3674 = vld [vmem:[%s3667 + $0x30] sm:$0xff]
          %v3675 = vld [vmem:[%s3667 + $0x38] sm:$0xff]
          %v3676 = vld [vmem:[%s3667 + $0x40] sm:$0xff]
          %v3677 = vld [vmem:[%s3667 + $0x48] sm:$0xff]
          %v3678 = vld [vmem:[%s3667 + $0x50] sm:$0xff]
          %v3679 = vld [vmem:[%s3667 + $0x58] sm:$0xff]
          %v3680 = vld [vmem:[%s3667 + $0x60] sm:$0xff]
          %v3681 = vld [vmem:[%s3667 + $0x68] sm:$0xff]
          %v3682 = vld [vmem:[%s3667 + $0x70] sm:$0xff]
          %v3683 = vld [vmem:[%s3667 + $0x78] sm:$0xff]
          %s3684 = scalar_lea.vmem [#allocation5], %s286
          %v3685 = vld [vmem:[%s3684] sm:$0xff]
          %v3686 = vld [vmem:[%s3684 + $0x8] sm:$0xff]
          %v3687 = vld [vmem:[%s3684 + $0x10] sm:$0xff]
          %v3688 = vld [vmem:[%s3684 + $0x18] sm:$0xff]
          %v3689 = vld [vmem:[%s3684 + $0x20] sm:$0xff]
          %v3690 = vld [vmem:[%s3684 + $0x28] sm:$0xff]
          %v3691 = vld [vmem:[%s3684 + $0x30] sm:$0xff]
          %v3692 = vld [vmem:[%s3684 + $0x38] sm:$0xff]
          %v3693 = vld [vmem:[%s3684 + $0x40] sm:$0xff]
          %v3694 = vld [vmem:[%s3684 + $0x48] sm:$0xff]
          %v3695 = vld [vmem:[%s3684 + $0x50] sm:$0xff]
          %v3696 = vld [vmem:[%s3684 + $0x58] sm:$0xff]
          %v3697 = vld [vmem:[%s3684 + $0x60] sm:$0xff]
          %v3698 = vld [vmem:[%s3684 + $0x68] sm:$0xff]
          %v3699 = vld [vmem:[%s3684 + $0x70] sm:$0xff]
          %v3700 = vld [vmem:[%s3684 + $0x78] sm:$0xff]
          %v3733 = vunpack.c.l.b16 %v3635
          %v3734 = vunpack.c.h.b16 %v3635
          %v3735 = vunpack.c.l.b16 %v3636
          %v3736 = vunpack.c.l.b16 %v3637
          %v3737 = vunpack.c.h.b16 %v3637
          %v3738 = vunpack.c.l.b16 %v3638
          %v3739 = vunpack.c.l.b16 %v3639
          %v3740 = vunpack.c.h.b16 %v3639
          %v3741 = vunpack.c.l.b16 %v3640
          %v3742 = vunpack.c.l.b16 %v3641
          %v3743 = vunpack.c.h.b16 %v3641
          %v3744 = vunpack.c.l.b16 %v3642
          %v3745 = vunpack.c.l.b16 %v3643
          %v3746 = vunpack.c.h.b16 %v3643
          %v3747 = vunpack.c.l.b16 %v3644
          %v3748 = vunpack.c.l.b16 %v3645
          %v3749 = vunpack.c.h.b16 %v3645
          %v3750 = vunpack.c.l.b16 %v3646
          %v3751 = vunpack.c.l.b16 %v3647
          %v3752 = vunpack.c.h.b16 %v3647
          %v3753 = vunpack.c.l.b16 %v3648
          %v3754 = vunpack.c.l.b16 %v3649
          %v3755 = vunpack.c.h.b16 %v3649
          %v3756 = vunpack.c.l.b16 %v3650
          %v3757 = vunpack.c.l.b16 %v3651
          %v3758 = vunpack.c.h.b16 %v3651
          %v3759 = vunpack.c.l.b16 %v3652
          %v3760 = vunpack.c.l.b16 %v3653
          %v3761 = vunpack.c.h.b16 %v3653
          %v3762 = vunpack.c.l.b16 %v3654
          %v3763 = vunpack.c.l.b16 %v3655
          %v3764 = vunpack.c.h.b16 %v3655
          %v3765 = vunpack.c.l.b16 %v3656
          %v3766 = vunpack.c.l.b16 %v3657
          %v3767 = vunpack.c.h.b16 %v3657
          %v3768 = vunpack.c.l.b16 %v3658
          %v3769 = vunpack.c.l.b16 %v3659
          %v3770 = vunpack.c.h.b16 %v3659
          %v3771 = vunpack.c.l.b16 %v3660
          %v3772 = vunpack.c.l.b16 %v3661
          %v3773 = vunpack.c.h.b16 %v3661
          %v3774 = vunpack.c.l.b16 %v3662
          %v3775 = vunpack.c.l.b16 %v3663
          %v3776 = vunpack.c.h.b16 %v3663
          %v3777 = vunpack.c.l.b16 %v3664
          %v3778 = vunpack.c.l.b16 %v3665
          %v3779 = vunpack.c.h.b16 %v3665
          %v3780 = vunpack.c.l.b16 %v3666
          %v3781 = vpack.c.b16 %v3736, %v3733
          %v3782 = vpack.c.b16 %v3737, %v3734
          %v3783 = vpack.c.b16 %v3738, %v3735
          %v3784 = vpack.c.b16 %v3742, %v3739
          %v3785 = vpack.c.b16 %v3743, %v3740
          %v3786 = vpack.c.b16 %v3744, %v3741
          %v3787 = vpack.c.b16 %v3748, %v3745
          %v3788 = vpack.c.b16 %v3749, %v3746
          %v3789 = vpack.c.b16 %v3750, %v3747
          %v3790 = vpack.c.b16 %v3754, %v3751
          %v3791 = vpack.c.b16 %v3755, %v3752
          %v3792 = vpack.c.b16 %v3756, %v3753
          %v3793 = vpack.c.b16 %v3760, %v3757
          %v3794 = vpack.c.b16 %v3761, %v3758
          %v3795 = vpack.c.b16 %v3762, %v3759
          %v3796 = vpack.c.b16 %v3766, %v3763
          %v3797 = vpack.c.b16 %v3767, %v3764
          %v3798 = vpack.c.b16 %v3768, %v3765
          %v3799 = vpack.c.b16 %v3772, %v3769
          %v3800 = vpack.c.b16 %v3773, %v3770
          %v3801 = vpack.c.b16 %v3774, %v3771
          %v3802 = vpack.c.b16 %v3778, %v3775
          %v3803 = vpack.c.b16 %v3779, %v3776
          %v3804 = vpack.c.b16 %v3780, %v3777
          %3829 = vmatprep.subr.bf16.mxu0 0
          %3830 = vmatpush1.bf16.msra.mxu0 %v3611
          %3831 = vmatprep.subr.bf16.mxu0 0
          %3832 = vmatpush1.bf16.msra.mxu0 %v3612
          %3833 = vmatprep.subr.bf16.mxu0 0
          %3834 = vmatpush1.bf16.msra.mxu0 %v3613
          %3835 = vmatprep.subr.bf16.mxu0 0
          %3836 = vmatpush1.bf16.msra.mxu0 %v3614
          %3837 = vmatprep.subr.bf16.mxu0 0
          %3838 = vmatpush1.bf16.msra.mxu0 %v3615
          %3839 = vmatprep.subr.bf16.mxu0 0
          %3840 = vmatpush1.bf16.msra.mxu0 %v3616
          %3841 = vmatprep.subr.bf16.mxu0 0
          %3842 = vmatpush1.bf16.msra.mxu0 %v3617
          %3843 = vmatprep.subr.bf16.mxu0 0
          %3844 = vmatpush1.bf16.msra.mxu0 %v3618
          %3845 = vmatprep.subr.bf16.mxu0 0
          %3846 = vmatpush1.bf16.msra.mxu0 %v3619
          %3847 = vmatprep.subr.bf16.mxu0 0
          %3848 = vmatpush1.bf16.msra.mxu0 %v3620
          %3849 = vmatprep.subr.bf16.mxu0 0
          %3850 = vmatpush1.bf16.msra.mxu0 %v3621
          %3851 = vmatprep.subr.bf16.mxu0 0
          %3852 = vmatpush1.bf16.msra.mxu0 %v3622
          %3853 = vmatprep.subr.bf16.mxu0 0
          %3854 = vmatpush1.bf16.msra.mxu0 %v3623
          %3855 = vmatprep.subr.bf16.mxu0 0
          %3856 = vmatpush1.bf16.msra.mxu0 %v3624
          %3857 = vmatprep.subr.bf16.mxu0 0
          %3858 = vmatpush1.bf16.msra.mxu0 %v3625
          %3859 = vmatprep.subr.bf16.mxu0 0
          %3860 = vmatpush1.bf16.msra.mxu0 %v3626
          %3861 = vmatprep.mubr.bf16.mxu0 %v3782
          %3862 = vmatmul.mubr.bf16.gmra.mrb[0].mxu0 %v3781
          %v3863 = vpop.f32.mrb[0].mxu0
          %v3864 = vadd.f32 %v3685, %v3863
          %v3865 = vpop.f32.mrb[0].mxu0
          %v3866 = vpop.f32.mrb[0].mxu0
          %v3867 = vadd.f32 %v3686, %v3866
          %v3868 = vpop.f32.mrb[0].mxu0
          %3869 = vmatprep.mubr.bf16.mxu0 %v3785
          %3870 = vmatmul.mubr.bf16.gmra.mrb[0].mxu0 %v3784
          %v3871 = vpop.f32.mrb[0].mxu0
          %v3872 = vadd.f32 %v3687, %v3871
          %v3873 = vpop.f32.mrb[0].mxu0
          %v3874 = vpop.f32.mrb[0].mxu0
          %v3875 = vadd.f32 %v3688, %v3874
          %v3876 = vpop.f32.mrb[0].mxu0
          %3877 = vmatprep.mubr.bf16.mxu0 %v3788
          %3878 = vmatmul.mubr.bf16.gmra.mrb[0].mxu0 %v3787
          %v3879 = vpop.f32.mrb[0].mxu0
          %v3880 = vadd.f32 %v3689, %v3879
          %v3881 = vpop.f32.mrb[0].mxu0
          %v3882 = vpop.f32.mrb[0].mxu0
          %v3883 = vadd.f32 %v3690, %v3882
          %v3884 = vpop.f32.mrb[0].mxu0
          %3885 = vmatprep.mubr.bf16.mxu0 %v3791
          %3886 = vmatmul.mubr.bf16.gmra.mrb[0].mxu0 %v3790
          %v3887 = vpop.f32.mrb[0].mxu0
          %v3888 = vadd.f32 %v3691, %v3887
          %v3889 = vpop.f32.mrb[0].mxu0
          %v3890 = vpop.f32.mrb[0].mxu0
          %v3891 = vadd.f32 %v3692, %v3890
          %v3892 = vpop.f32.mrb[0].mxu0
          %3893 = vmatprep.mubr.bf16.mxu0 %v3794
          %3894 = vmatmul.mubr.bf16.gmra.mrb[0].mxu0 %v3793
          %v3895 = vpop.f32.mrb[0].mxu0
          %v3896 = vadd.f32 %v3693, %v3895
          %v3897 = vpop.f32.mrb[0].mxu0
          %v3898 = vpop.f32.mrb[0].mxu0
          %v3899 = vadd.f32 %v3694, %v3898
          %v3900 = vpop.f32.mrb[0].mxu0
          %3901 = vmatprep.mubr.bf16.mxu0 %v3797
          %3902 = vmatmul.mubr.bf16.gmra.mrb[0].mxu0 %v3796
          %v3903 = vpop.f32.mrb[0].mxu0
          %v3904 = vadd.f32 %v3695, %v3903
          %v3905 = vpop.f32.mrb[0].mxu0
          %v3906 = vpop.f32.mrb[0].mxu0
          %v3907 = vadd.f32 %v3696, %v3906
          %v3908 = vpop.f32.mrb[0].mxu0
          %3909 = vmatprep.mubr.bf16.mxu0 %v3800
          %3910 = vmatmul.mubr.bf16.gmra.mrb[0].mxu0 %v3799
          %v3911 = vpop.f32.mrb[0].mxu0
          %v3912 = vadd.f32 %v3697, %v3911
          %v3913 = vpop.f32.mrb[0].mxu0
          %v3914 = vpop.f32.mrb[0].mxu0
          %v3915 = vadd.f32 %v3698, %v3914
          %v3916 = vpop.f32.mrb[0].mxu0
          %3917 = vmatprep.mubr.bf16.mxu0 %v3803
          %3918 = vmatmul.mubr.bf16.gmra.mrb[0].mxu0 %v3802
          %v3919 = vpop.f32.mrb[0].mxu0
          %v3920 = vadd.f32 %v3699, %v3919
          %v3921 = vpop.f32.mrb[0].mxu0
          %v3922 = vpop.f32.mrb[0].mxu0
          %v3923 = vadd.f32 %v3700, %v3922
          %v3924 = vpop.f32.mrb[0].mxu0
          %3925 = vdwg.mxu0
          %3926 = vmatprep.subr.bf16.mxu0 0
          %3927 = vmatpush1.bf16.msra.mxu0 %v3627
          %3928 = vmatprep.subr.bf16.mxu0 0
          %3929 = vmatpush1.bf16.msra.mxu0 %v3628
          %3930 = vmatprep.subr.bf16.mxu0 0
          %3931 = vmatpush1.bf16.msra.mxu0 %v3629
          %3932 = vmatprep.subr.bf16.mxu0 0
          %3933 = vmatpush1.bf16.msra.mxu0 %v3630
          %3934 = vmatprep.subr.bf16.mxu0 0
          %3935 = vmatpush1.bf16.msra.mxu0 %v3631
          %3936 = vmatprep.subr.bf16.mxu0 0
          %3937 = vmatpush1.bf16.msra.mxu0 %v3632
          %3938 = vmatprep.subr.bf16.mxu0 0
          %3939 = vmatpush1.bf16.msra.mxu0 %v3633
          %3940 = vmatprep.subr.bf16.mxu0 0
          %3941 = vmatpush1.bf16.msra.mxu0 %v3634
          %3942 = vmatprep.subr.bf16.mxu0 0
          %3943 = vmatpush1.bf16.msra.mxu0 0
          %3944 = vmatprep.subr.bf16.mxu0 0
          %3945 = vmatpush1.bf16.msra.mxu0 0
          %3946 = vmatprep.subr.bf16.mxu0 0
          %3947 = vmatpush1.bf16.msra.mxu0 0
          %3948 = vmatprep.subr.bf16.mxu0 0
          %3949 = vmatpush1.bf16.msra.mxu0 0
          %3950 = vmatprep.subr.bf16.mxu0 0
          %3951 = vmatpush1.bf16.msra.mxu0 0
          %3952 = vmatprep.subr.bf16.mxu0 0
          %3953 = vmatpush1.bf16.msra.mxu0 0
          %3954 = vmatprep.subr.bf16.mxu0 0
          %3955 = vmatpush1.bf16.msra.mxu0 0
          %3956 = vmatprep.subr.bf16.mxu0 0
          %3957 = vmatpush1.bf16.msra.mxu0 0
          %3958 = vmatprep.mubr.bf16.mxu0 0
          %3959 = vmatmul.mubr.bf16.gmra.mrb[0].mxu0 %v3783
          %v3960 = vpop.f32.mrb[0].mxu0
          %v3961 = vadd.f32 %v3864, %v3960
          %v3962 = vpop.f32.mrb[0].mxu0
          %v3963 = vpop.f32.mrb[0].mxu0
          %v3964 = vadd.f32 %v3867, %v3963
          %v3965 = vpop.f32.mrb[0].mxu0
          %3966 = vmatprep.mubr.bf16.mxu0 0
          %3967 = vmatmul.mubr.bf16.gmra.mrb[0].mxu0 %v3786
          %v3968 = vpop.f32.mrb[0].mxu0
          %v3969 = vadd.f32 %v3872, %v3968
          %v3970 = vpop.f32.mrb[0].mxu0
          %v3971 = vpop.f32.mrb[0].mxu0
          %v3972 = vadd.f32 %v3875, %v3971
          %v3973 = vpop.f32.mrb[0].mxu0
          %3974 = vmatprep.mubr.bf16.mxu0 0
          %3975 = vmatmul.mubr.bf16.gmra.mrb[0].mxu0 %v3789
          %v3976 = vpop.f32.mrb[0].mxu0
          %v3977 = vadd.f32 %v3880, %v3976
          %v3978 = vpop.f32.mrb[0].mxu0
          %v3979 = vpop.f32.mrb[0].mxu0
          %v3980 = vadd.f32 %v3883, %v3979
          %v3981 = vpop.f32.mrb[0].mxu0
          %3982 = vmatprep.mubr.bf16.mxu0 0
          %3983 = vmatmul.mubr.bf16.gmra.mrb[0].mxu0 %v3792
          %v3984 = vpop.f32.mrb[0].mxu0
          %v3985 = vadd.f32 %v3888, %v3984
          %v3986 = vpop.f32.mrb[0].mxu0
          %v3987 = vpop.f32.mrb[0].mxu0
          %v3988 = vadd.f32 %v3891, %v3987
          %v3989 = vpop.f32.mrb[0].mxu0
          %3990 = vmatprep.mubr.bf16.mxu0 0
          %3991 = vmatmul.mubr.bf16.gmra.mrb[0].mxu0 %v3795
          %v3992 = vpop.f32.mrb[0].mxu0
          %v3993 = vadd.f32 %v3896, %v3992
          %v3994 = vpop.f32.mrb[0].mxu0
          %v3995 = vpop.f32.mrb[0].mxu0
          %v3996 = vadd.f32 %v3899, %v3995
          %v3997 = vpop.f32.mrb[0].mxu0
          %3998 = vmatprep.mubr.bf16.mxu0 0
          %3999 = vmatmul.mubr.bf16.gmra.mrb[0].mxu0 %v3798
          %v4000 = vpop.f32.mrb[0].mxu0
          %v4001 = vadd.f32 %v3904, %v4000
          %v4002 = vpop.f32.mrb[0].mxu0
          %v4003 = vpop.f32.mrb[0].mxu0
          %v4004 = vadd.f32 %v3907, %v4003
          %v4005 = vpop.f32.mrb[0].mxu0
          %4006 = vmatprep.mubr.bf16.mxu0 0
          %4007 = vmatmul.mubr.bf16.gmra.mrb[0].mxu0 %v3801
          %v4008 = vpop.f32.mrb[0].mxu0
          %v4009 = vadd.f32 %v3912, %v4008
          %v4010 = vpop.f32.mrb[0].mxu0
          %v4011 = vpop.f32.mrb[0].mxu0
          %v4012 = vadd.f32 %v3915, %v4011
          %v4013 = vpop.f32.mrb[0].mxu0
          %4014 = vmatprep.mubr.bf16.mxu0 0
          %4015 = vmatmul.mubr.bf16.gmra.mrb[0].mxu0 %v3804
          %v4016 = vpop.f32.mrb[0].mxu0
          %v4017 = vadd.f32 %v3920, %v4016
          %v4018 = vpop.f32.mrb[0].mxu0
          %v4019 = vpop.f32.mrb[0].mxu0
          %v4020 = vadd.f32 %v3923, %v4019
          %v4021 = vpop.f32.mrb[0].mxu0
          %4022 = vdwg.mxu0
          %4024 = vset.pattern.permute.xlu0 0
          %4025 = vperm.xlu0 %4024, %v3668
          %v4026 = vpop.permute.xlu0 %4025
          %4029 = vset.pattern.permute.xlu0 0
          %4030 = vperm.xlu0 %4029, %v3669
          %v4031 = vpop.permute.xlu0 %4030
          %4034 = vset.pattern.permute.xlu0 0
          %4035 = vperm.xlu0 %4034, %v3670
          %v4036 = vpop.permute.xlu0 %4035
          %4039 = vset.pattern.permute.xlu0 0
          %4040 = vperm.xlu0 %4039, %v3671
          %v4041 = vpop.permute.xlu0 %4040
          %4044 = vset.pattern.permute.xlu0 0
          %4045 = vperm.xlu0 %4044, %v3672
          %v4046 = vpop.permute.xlu0 %4045
          %4049 = vset.pattern.permute.xlu0 0
          %4050 = vperm.xlu0 %4049, %v3673
          %v4051 = vpop.permute.xlu0 %4050
          %4054 = vset.pattern.permute.xlu0 0
          %4055 = vperm.xlu0 %4054, %v3674
          %v4056 = vpop.permute.xlu0 %4055
          %4059 = vset.pattern.permute.xlu0 0
          %4060 = vperm.xlu0 %4059, %v3675
          %v4061 = vpop.permute.xlu0 %4060
          %4064 = vset.pattern.permute.xlu0 0
          %4065 = vperm.xlu0 %4064, %v3676
          %v4066 = vpop.permute.xlu0 %4065
          %4069 = vset.pattern.permute.xlu0 0
          %4070 = vperm.xlu0 %4069, %v3677
          %v4071 = vpop.permute.xlu0 %4070
          %4074 = vset.pattern.permute.xlu0 0
          %4075 = vperm.xlu0 %4074, %v3678
          %v4076 = vpop.permute.xlu0 %4075
          %4079 = vset.pattern.permute.xlu0 0
          %4080 = vperm.xlu0 %4079, %v3679
          %v4081 = vpop.permute.xlu0 %4080
          %4084 = vset.pattern.permute.xlu0 0
          %4085 = vperm.xlu0 %4084, %v3680
          %v4086 = vpop.permute.xlu0 %4085
          %4089 = vset.pattern.permute.xlu0 0
          %4090 = vperm.xlu0 %4089, %v3681
          %v4091 = vpop.permute.xlu0 %4090
          %4094 = vset.pattern.permute.xlu0 0
          %4095 = vperm.xlu0 %4094, %v3682
          %v4096 = vpop.permute.xlu0 %4095
          %4099 = vset.pattern.permute.xlu0 0
          %4100 = vperm.xlu0 %4099, %v3683
          %v4101 = vpop.permute.xlu0 %4100
          %v4103 = vmul.f32 %v4026, %v3961
          %v4104 = vmul.f32 %v4031, %v3964
          %v4105 = vmul.f32 %v4036, %v3969
          %v4106 = vmul.f32 %v4041, %v3972
          %v4107 = vmul.f32 %v4046, %v3977
          %v4108 = vmul.f32 %v4051, %v3980
          %v4109 = vmul.f32 %v4056, %v3985
          %v4110 = vmul.f32 %v4061, %v3988
          %v4111 = vmul.f32 %v4066, %v3993
          %v4112 = vmul.f32 %v4071, %v3996
          %v4113 = vmul.f32 %v4076, %v4001
          %v4114 = vmul.f32 %v4081, %v4004
          %v4115 = vmul.f32 %v4086, %v4009
          %v4116 = vmul.f32 %v4091, %v4012
          %v4117 = vmul.f32 %v4096, %v4017
          %v4118 = vmul.f32 %v4101, %v4020
          %v4119 = vlaneseq
          %v4120 = vand.u32 %v4119, 127
          %vm4121 = vcmp.lt.s32.totalorder %v4120, 8
          %v4122 = vsel %vm4121, %v4103, -inf
          %v4123 = vsel %vm4121, %v4104, -inf
          %v4124 = vsel %vm4121, %v4105, -inf
          %v4125 = vsel %vm4121, %v4106, -inf
          %v4126 = vsel %vm4121, %v4107, -inf
          %v4127 = vsel %vm4121, %v4108, -inf
          %v4128 = vsel %vm4121, %v4109, -inf
          %v4129 = vsel %vm4121, %v4110, -inf
          %v4130 = vsel %vm4121, %v4111, -inf
          %v4131 = vsel %vm4121, %v4112, -inf
          %v4132 = vsel %vm4121, %v4113, -inf
          %v4133 = vsel %vm4121, %v4114, -inf
          %v4134 = vsel %vm4121, %v4115, -inf
          %v4135 = vsel %vm4121, %v4116, -inf
          %v4136 = vsel %vm4121, %v4117, -inf
          %v4137 = vsel %vm4121, %v4118, -inf
          %4138 = vmax.xlane.f32.xlu0 %v4122
          %v4139 = vpop.xlane.xlu0 %4138
          %4140 = vmax.xlane.f32.xlu0 %v4123
          %v4141 = vpop.xlane.xlu0 %4140
          %4142 = vmax.xlane.f32.xlu0 %v4124
          %v4143 = vpop.xlane.xlu0 %4142
          %4144 = vmax.xlane.f32.xlu0 %v4125
          %v4145 = vpop.xlane.xlu0 %4144
          %4146 = vmax.xlane.f32.xlu0 %v4126
          %v4147 = vpop.xlane.xlu0 %4146
          %4148 = vmax.xlane.f32.xlu0 %v4127
          %v4149 = vpop.xlane.xlu0 %4148
          %4150 = vmax.xlane.f32.xlu0 %v4128
          %v4151 = vpop.xlane.xlu0 %4150
          %4152 = vmax.xlane.f32.xlu0 %v4129
          %v4153 = vpop.xlane.xlu0 %4152
          %4154 = vmax.xlane.f32.xlu0 %v4130
          %v4155 = vpop.xlane.xlu0 %4154
          %4156 = vmax.xlane.f32.xlu0 %v4131
          %v4157 = vpop.xlane.xlu0 %4156
          %4158 = vmax.xlane.f32.xlu0 %v4132
          %v4159 = vpop.xlane.xlu0 %4158
          %4160 = vmax.xlane.f32.xlu0 %v4133
          %v4161 = vpop.xlane.xlu0 %4160
          %4162 = vmax.xlane.f32.xlu0 %v4134
          %v4163 = vpop.xlane.xlu0 %4162
          %4164 = vmax.xlane.f32.xlu0 %v4135
          %v4165 = vpop.xlane.xlu0 %4164
          %4166 = vmax.xlane.f32.xlu0 %v4136
          %v4167 = vpop.xlane.xlu0 %4166
          %4168 = vmax.xlane.f32.xlu0 %v4137
          %v4169 = vpop.xlane.xlu0 %4168
          %v4170 = vsub.f32 %v4122, %v4139
          %v4171 = vsub.f32 %v4123, %v4141
          %v4172 = vsub.f32 %v4124, %v4143
          %v4173 = vsub.f32 %v4125, %v4145
          %v4174 = vsub.f32 %v4126, %v4147
          %v4175 = vsub.f32 %v4127, %v4149
          %v4176 = vsub.f32 %v4128, %v4151
          %v4177 = vsub.f32 %v4129, %v4153
          %v4178 = vsub.f32 %v4130, %v4155
          %v4179 = vsub.f32 %v4131, %v4157
          %v4180 = vsub.f32 %v4132, %v4159
          %v4181 = vsub.f32 %v4133, %v4161
          %v4182 = vsub.f32 %v4134, %v4163
          %v4183 = vsub.f32 %v4135, %v4165
          %v4184 = vsub.f32 %v4136, %v4167
          %v4185 = vsub.f32 %v4137, %v4169
          %v4186 = vmul.f32 %v4170, 1.442695
          %v4187 = vpow.pop %v4186
          %v4188 = vmul.f32 %v4171, 1.442695
          %v4189 = vpow.pop %v4188
          %v4190 = vmul.f32 %v4172, 1.442695
          %v4191 = vpow.pop %v4190
          %v4192 = vmul.f32 %v4173, 1.442695
          %v4193 = vpow.pop %v4192
          %v4194 = vmul.f32 %v4174, 1.442695
          %v4195 = vpow.pop %v4194
          %v4196 = vmul.f32 %v4175, 1.442695
          %v4197 = vpow.pop %v4196
          %v4198 = vmul.f32 %v4176, 1.442695
          %v4199 = vpow.pop %v4198
          %v4200 = vmul.f32 %v4177, 1.442695
          %v4201 = vpow.pop %v4200
          %v4202 = vmul.f32 %v4178, 1.442695
          %v4203 = vpow.pop %v4202
          %v4204 = vmul.f32 %v4179, 1.442695
          %v4205 = vpow.pop %v4204
          %v4206 = vmul.f32 %v4180, 1.442695
          %v4207 = vpow.pop %v4206
          %v4208 = vmul.f32 %v4181, 1.442695
          %v4209 = vpow.pop %v4208
          %v4210 = vmul.f32 %v4182, 1.442695
          %v4211 = vpow.pop %v4210
          %v4212 = vmul.f32 %v4183, 1.442695
          %v4213 = vpow.pop %v4212
          %v4214 = vmul.f32 %v4184, 1.442695
          %v4215 = vpow.pop %v4214
          %v4216 = vmul.f32 %v4185, 1.442695
          %v4217 = vpow.pop %v4216
          %4218 = vadd.xlane.f32.xlu0 %v4187
          %v4219 = vpop.xlane.xlu0 %4218
          %4220 = vadd.xlane.f32.xlu0 %v4189
          %v4221 = vpop.xlane.xlu0 %4220
          %4222 = vadd.xlane.f32.xlu0 %v4191
          %v4223 = vpop.xlane.xlu0 %4222
          %4224 = vadd.xlane.f32.xlu0 %v4193
          %v4225 = vpop.xlane.xlu0 %4224
          %4226 = vadd.xlane.f32.xlu0 %v4195
          %v4227 = vpop.xlane.xlu0 %4226
          %4228 = vadd.xlane.f32.xlu0 %v4197
          %v4229 = vpop.xlane.xlu0 %4228
          %4230 = vadd.xlane.f32.xlu0 %v4199
          %v4231 = vpop.xlane.xlu0 %4230
          %4232 = vadd.xlane.f32.xlu0 %v4201
          %v4233 = vpop.xlane.xlu0 %4232
          %4234 = vadd.xlane.f32.xlu0 %v4203
          %v4235 = vpop.xlane.xlu0 %4234
          %4236 = vadd.xlane.f32.xlu0 %v4205
          %v4237 = vpop.xlane.xlu0 %4236
          %4238 = vadd.xlane.f32.xlu0 %v4207
          %v4239 = vpop.xlane.xlu0 %4238
          %4240 = vadd.xlane.f32.xlu0 %v4209
          %v4241 = vpop.xlane.xlu0 %4240
          %4242 = vadd.xlane.f32.xlu0 %v4211
          %v4243 = vpop.xlane.xlu0 %4242
          %4244 = vadd.xlane.f32.xlu0 %v4213
          %v4245 = vpop.xlane.xlu0 %4244
          %4246 = vadd.xlane.f32.xlu0 %v4215
          %v4247 = vpop.xlane.xlu0 %4246
          %4248 = vadd.xlane.f32.xlu0 %v4217
          %v4249 = vpop.xlane.xlu0 %4248
          %v4250 = vlog2.pop %v4219
          %v4251 = vmul.f32 %v4250, 0.6931472
          %v4252 = vlog2.pop %v4221
          %v4253 = vmul.f32 %v4252, 0.6931472
          %v4254 = vlog2.pop %v4223
          %v4255 = vmul.f32 %v4254, 0.6931472
          %v4256 = vlog2.pop %v4225
          %v4257 = vmul.f32 %v4256, 0.6931472
          %v4258 = vlog2.pop %v4227
          %v4259 = vmul.f32 %v4258, 0.6931472
          %v4260 = vlog2.pop %v4229
          %v4261 = vmul.f32 %v4260, 0.6931472
          %v4262 = vlog2.pop %v4231
          %v4263 = vmul.f32 %v4262, 0.6931472
          %v4264 = vlog2.pop %v4233
          %v4265 = vmul.f32 %v4264, 0.6931472
          %v4266 = vlog2.pop %v4235
          %v4267 = vmul.f32 %v4266, 0.6931472
          %v4268 = vlog2.pop %v4237
          %v4269 = vmul.f32 %v4268, 0.6931472
          %v4270 = vlog2.pop %v4239
          %v4271 = vmul.f32 %v4270, 0.6931472
          %v4272 = vlog2.pop %v4241
          %v4273 = vmul.f32 %v4272, 0.6931472
          %v4274 = vlog2.pop %v4243
          %v4275 = vmul.f32 %v4274, 0.6931472
          %v4276 = vlog2.pop %v4245
          %v4277 = vmul.f32 %v4276, 0.6931472
          %v4278 = vlog2.pop %v4247
          %v4279 = vmul.f32 %v4278, 0.6931472
          %v4280 = vlog2.pop %v4249
          %v4281 = vmul.f32 %v4280, 0.6931472
          %v4282 = vsub.f32 %v4170, %v4251
          %v4283 = vsub.f32 %v4171, %v4253
          %v4284 = vsub.f32 %v4172, %v4255
          %v4285 = vsub.f32 %v4173, %v4257
          %v4286 = vsub.f32 %v4174, %v4259
          %v4287 = vsub.f32 %v4175, %v4261
          %v4288 = vsub.f32 %v4176, %v4263
          %v4289 = vsub.f32 %v4177, %v4265
          %v4290 = vsub.f32 %v4178, %v4267
          %v4291 = vsub.f32 %v4179, %v4269
          %v4292 = vsub.f32 %v4180, %v4271
          %v4293 = vsub.f32 %v4181, %v4273
          %v4294 = vsub.f32 %v4182, %v4275
          %v4295 = vsub.f32 %v4183, %v4277
          %v4296 = vsub.f32 %v4184, %v4279
          %v4297 = vsub.f32 %v4185, %v4281
          %4298 = vst [vmem:[%s282] sm:$0xff] %v4282
          %4299 = vst [vmem:[%s282 + $0x8] sm:$0xff] %v4283
          %4300 = vst [vmem:[%s282 + $0x10] sm:$0xff] %v4284
          %4301 = vst [vmem:[%s282 + $0x18] sm:$0xff] %v4285
          %4302 = vst [vmem:[%s282 + $0x20] sm:$0xff] %v4286
          %4303 = vst [vmem:[%s282 + $0x28] sm:$0xff] %v4287
          %4304 = vst [vmem:[%s282 + $0x30] sm:$0xff] %v4288
          %4305 = vst [vmem:[%s282 + $0x38] sm:$0xff] %v4289
          %4306 = vst [vmem:[%s282 + $0x40] sm:$0xff] %v4290
          %4307 = vst [vmem:[%s282 + $0x48] sm:$0xff] %v4291
          %4308 = vst [vmem:[%s282 + $0x50] sm:$0xff] %v4292
          %4309 = vst [vmem:[%s282 + $0x58] sm:$0xff] %v4293
          %4310 = vst [vmem:[%s282 + $0x60] sm:$0xff] %v4294
          %4311 = vst [vmem:[%s282 + $0x68] sm:$0xff] %v4295
          %4312 = vst [vmem:[%s282 + $0x70] sm:$0xff] %v4296
          %4313 = vst [vmem:[%s282 + $0x78] sm:$0xff] %v4297
        $region68: #{tpu_custom_call.1} parent=43 // pred_fallthru
          _
        %s4314 = sand.u32 %s174, 1
        %s4315 = scalar_lea.sflag [#allocation8], %s4314
        %s4316 = sand.u32 %s174, 1
        %s4317 = smul.addr %s4316, 128
        %s4318 = scalar_lea.vmem [#allocation9], %s4317
        // Predicated region
        $region69: #{tpu_custom_call.1} parent=43 // pred_check
          %p4319 = pneg %p184
        $region70: #{tpu_custom_call.1} parent=43 // pred_check_branch
          %4321 = sbr.rel (%p4319) target = $region72
        $region71: #{tpu_custom_call.1} parent=43 // pred_region
          %s4322 = smul.u32 16, %s28
          %s4324 = ssub.s32 2048, 2048
          %4325 = vsyncadd %s4315, %s4324
          %s4326 = smul.addr %s4322, 128
          %s4327 = scalar_lea.hbm %s6, %s4326
          %s4328 = sshll.u32 %s4318, 4
          %s4329 = int_to_ptr.vmem [resolvable:$true] %s4328
          %4334 = dma.vmem_to_hbm [thread:$0]  %s4329, 2048, %s4327, %s4315, 128, 128, 8
        $region72: #{tpu_custom_call.1} parent=43 // pred_fallthru
          _
      $region44: #{tpu_custom_call.1} parent=5 // pred_fallthru
        _
      %p4335 = scmp.le.s32.totalorder 2, %s18
      // Predicated region
      $region73: #{tpu_custom_call.1} parent=5 // pred_check
        %p4336 = pneg %p4335
      $region74: #{tpu_custom_call.1} parent=5 // pred_check_branch
        %4338 = sbr.rel (%p4336) target = $region76
      $region75: #{tpu_custom_call.1} parent=5 // pred_region
        %s4339 = ssub.s32 %s18, 2
        // Predicated region
        $region77: #{tpu_custom_call.1} parent=75 // pred_check
          %p4340 = pneg %p190
        $region78: #{tpu_custom_call.1} parent=75 // pred_check_branch
          %4342 = sbr.rel (%p4340) target = $region80
        $region79: #{tpu_custom_call.1} parent=75 // pred_region
          %s4343 = sand.u32 %s175, 1
          %s4344 = scalar_lea.sflag [#allocation8], %s4343
          %s4345 = sand.u32 %s175, 1
          %s4346 = smul.addr %s4345, 128
          %s4347 = scalar_lea.vmem [#allocation9], %s4346
          %4348 = dma.done %s4344, 2048
        $region80: #{tpu_custom_call.1} parent=75 // pred_fallthru
          _
      $region76: #{tpu_custom_call.1} parent=5 // pred_fallthru
        _
    $region6: #{tpu_custom_call.1} parent=1 // loop_footer
      %s22 = sadd.s32 1, %s18
    $region7: #{tpu_custom_call.1} parent=1 // loop_footer_branch
      %17 = sbr.rel target = $region3
    $region8: #{tpu_custom_call.1} parent=1 // loop_exit
      _
    %4349 = vsyncpa [#allocation7], 1
    %s4350 = scalar_lea.sflag [#allocation7], 1
    %4351 = vsyncpa %s4350, 1
    %4352 = vsyncpa [#allocation8], 1
    %s4353 = scalar_lea.sflag [#allocation8], 1
    %4354 = vsyncpa %s4353, 1

</llo_original>
